<compile_context>
chip_gen: v5e
topology: v5e:2x2
jax: 0.10.0
libtpu: 0.0.40
codegen_flags: <defaults>
</compile_context>

<pallas_src>
import functools

import jax
import jax.numpy as jnp
from jax.experimental import pallas as pl
from jax.experimental.pallas import tpu as pltpu

STEM_C = 32        # efficientnet-lite0 stem channels
FEAT_C = 1280      # efficientnet-lite0 classifier.in_features
NUM_CLASSES = 101  # age classes
GEN_CLASSES = 2    # gender classes
AGE_HID = 256      # age_model hidden
GEN_HID = 128      # gen_model hidden
HEAD_PAD = 128     # lane-dense padding for each head's output block
HEADS_OUT = 2 * HEAD_PAD   # merged, lane-padded (age | gender) output width
KPAD = 32          # im2col K (9*3=27) zero-padded to 32


# --------------------------------------------------------------------------
# Fused kernel: stem GEMM -> 1x1 head GEMM -> GAP accumulate -> (last tile)
# merged age/gender heads + sigmoid.
# grid = (batch, spatial_tiles); spatial axis is an on-chip reduction.
# --------------------------------------------------------------------------
def fused_forward_kernel(x_ref, ws_ref, bs_ref, wh_ref, bh_ref,
                         w1_ref, b1_ref, w2_ref, b2_ref,
                         o_ref, acc_ref, *, inv_hw, tile):
    t = pl.program_id(1)

    @pl.when(t == 0)
    def _init():
        acc_ref[...] = jnp.zeros_like(acc_ref)

    # Stem conv as matmul; BN scale is pre-folded into ws, so epilogue is
    # just bias + ReLU6.  (TILE, KPAD) bf16 @ (KPAD, 32) bf16 -> f32.
    stem = jnp.dot(x_ref[...], ws_ref[...], preferred_element_type=jnp.float32)
    stem = jnp.clip(stem + bs_ref[...], 0.0, 6.0).astype(jnp.bfloat16)

    # 1x1 head conv; BN scale pre-folded.  (TILE, 32) @ (32, 1280) -> f32.
    head = jnp.dot(stem, wh_ref[...], preferred_element_type=jnp.float32)
    head = jnp.clip(head + bh_ref[...], 0.0, 6.0)

    # Partial global-average-pool: aligned (8, FEAT_C) vreg-slab adds on the
    # VPU; the single 8->1 cross-sublane reduce happens only in finalize.
    if tile % 8 == 0:
        acc_ref[...] += head.reshape(tile // 8, 8, FEAT_C).sum(axis=0)
    else:
        # Rare fallback for awkward spatial tilings (not hit in the demo).
        acc_ref[...] = acc_ref[...].at[0:1, :].add(
            jnp.sum(head, axis=0, keepdims=True))

    @pl.when(t == pl.num_programs(1) - 1)
    def _finalize():
        # Global average pool (x.view(x.size(0), -1) -> (1, 1280)).
        pooled = jnp.sum(acc_ref[...], axis=0, keepdims=True) * inv_hw
        # Merged age/gender heads:
        #   h = relu(pooled @ [wa1|wg1] + [ba1|bg1])          (1, 384)
        #   z = h @ blockdiag_padded(wa2, wg2) + padded bias  (1, 256)
        h = jnp.dot(pooled.astype(jnp.bfloat16), w1_ref[...],
                    preferred_element_type=jnp.float32) + b1_ref[...]
        h = jnp.maximum(h, 0.0).astype(jnp.bfloat16)
        z = jnp.dot(h, w2_ref[...],
                    preferred_element_type=jnp.float32) + b2_ref[...]
        o_ref[...] = jax.nn.sigmoid(z)


# --------------------------------------------------------------------------
# Chip-aware tiling / VMEM budgeting
# --------------------------------------------------------------------------
def _vmem_capacity_bytes():
    try:
        info = pltpu.get_tpu_info()
        for name in ("vmem_capacity_bytes", "vmem_size_bytes", "vmem_bytes"):
            cap = getattr(info, name, None)
            if cap:
                return int(cap)
    except Exception:
        pass
    return 64 * 1024 * 1024   # conservative default (v7x per-TC VMEM)


def _pick_spatial_tile(hw, cap):
    """Largest divisor of hw <= cap, preferring multiples of 128, then 8."""
    cap = max(1, min(hw, cap))
    best, best_key = 1, (-1, -1)
    for t in range(1, cap + 1):
        if hw % t:
            continue
        tier = 2 if t % 128 == 0 else (1 if t % 8 == 0 else 0)
        if (tier, t) > best_key:
            best_key, best = (tier, t), t
    return best


def fused_forward(patches, params, hw):
    """patches: (B, HW, KPAD) bf16 -> (age (B,101), gender (B,2)) f32."""
    b = patches.shape[0]
    kpad = patches.shape[2]

    vmem_cap = _vmem_capacity_bytes()
    # 128 MiB parts (v5e/v6e) can afford TILE up to 2048; 64 MiB (v7x) -> 1024.
    tile_cap = 2048 if vmem_cap >= 96 * 1024 * 1024 else 1024
    vmem_limit = int(min(vmem_cap // 2, 48 * 1024 * 1024))

    tile = _pick_spatial_tile(hw, tile_cap)
    grid = (b, hw // tile)

    kernel = functools.partial(fused_forward_kernel,
                               inv_hw=1.0 / float(hw), tile=tile)

    flops = (2 * b * hw * kpad * STEM_C
             + 2 * b * hw * STEM_C * FEAT_C
             + 2 * b * FEAT_C * (AGE_HID + GEN_HID)
             + 2 * b * (AGE_HID + GEN_HID) * HEADS_OUT)
    bytes_accessed = (
        b * hw * kpad * 2                                    # bf16 patches in
        + (kpad * STEM_C + STEM_C * FEAT_C
           + FEAT_C * (AGE_HID + GEN_HID)
           + (AGE_HID + GEN_HID) * HEADS_OUT) * 2            # bf16 weights
        + (STEM_C + FEAT_C + AGE_HID + GEN_HID + HEADS_OUT) * 4  # f32 biases
        + b * HEADS_OUT * 4)                                 # f32 output

    out = pl.pallas_call(
        kernel,
        out_shape=jax.ShapeDtypeStruct((b, 1, HEADS_OUT), jnp.float32),
        grid_spec=pltpu.PrefetchScalarGridSpec(
            num_scalar_prefetch=0,
            grid=grid,
            in_specs=[
                pl.BlockSpec((None, tile, kpad), lambda bi, ti: (bi, ti, 0)),
                pl.BlockSpec((kpad, STEM_C), lambda bi, ti: (0, 0)),
                pl.BlockSpec((1, STEM_C), lambda bi, ti: (0, 0)),
                pl.BlockSpec((STEM_C, FEAT_C), lambda bi, ti: (0, 0)),
                pl.BlockSpec((1, FEAT_C), lambda bi, ti: (0, 0)),
                pl.BlockSpec((FEAT_C, AGE_HID + GEN_HID), lambda bi, ti: (0, 0)),
                pl.BlockSpec((1, AGE_HID + GEN_HID), lambda bi, ti: (0, 0)),
                pl.BlockSpec((AGE_HID + GEN_HID, HEADS_OUT), lambda bi, ti: (0, 0)),
                pl.BlockSpec((1, HEADS_OUT), lambda bi, ti: (0, 0)),
            ],
            out_specs=pl.BlockSpec((None, 1, HEADS_OUT), lambda bi, ti: (bi, 0, 0)),
            scratch_shapes=[pltpu.VMEM((8, FEAT_C), jnp.float32)],
        ),
        compiler_params=pltpu.CompilerParams(
            dimension_semantics=("parallel", "arbitrary"),
            vmem_limit_bytes=vmem_limit,
        ),
        cost_estimate=pl.CostEstimate(
            flops=flops, transcendentals=b * HEADS_OUT,
            bytes_accessed=bytes_accessed),
    )(patches, params["w_stem"], params["b_stem"],
      params["w_head"], params["b_head"],
      params["w1_heads"], params["b1_heads"],
      params["w2_heads"], params["b2_heads"])

    out = out.reshape(b, HEADS_OUT)
    age = out[:, :NUM_CLASSES]
    gen = out[:, HEAD_PAD:HEAD_PAD + GEN_CLASSES]
    return age, gen


# --------------------------------------------------------------------------
# Glue: im2col for the 3x3 stride-2 stem conv (pad=1), plain JAX reshapes.
# K is zero-padded 27 -> KPAD; output cast to bf16 for the MXU.
# --------------------------------------------------------------------------
def im2col_3x3_s2(x_nhwc):
    b, h, w, c = x_nhwc.shape
    assert 9 * c <= KPAD, "KPAD too small for input channels"
    ho = (h - 1) // 2 + 1   # floor((H + 2*1 - 3)/2) + 1
    wo = (w - 1) // 2 + 1
    xp = jnp.pad(x_nhwc, ((0, 0), (1, 1), (1, 1), (0, 0)))
    patches = []
    for di in range(3):
        for dj in range(3):
            patches.append(xp[:, di:di + 2 * ho - 1:2, dj:dj + 2 * wo - 1:2, :])
    p = jnp.concatenate(patches, axis=-1)                        # (B,Ho,Wo,9C)
    p = jnp.pad(p, ((0, 0), (0, 0), (0, 0), (0, KPAD - 9 * c)))  # lane-pad K
    return p.reshape(b, ho * wo, KPAD).astype(jnp.bfloat16), (ho, wo)


# --------------------------------------------------------------------------
# Parameter init (deterministic, synthetic) + BN folding + head merging
# --------------------------------------------------------------------------
def init_params(key, in_c=3):
    ks = jax.random.split(key, 16)

    def lin(k, fan_in, fan_out):
        return (jax.random.normal(k, (fan_in, fan_out), jnp.float32)
                * (1.0 / jnp.sqrt(jnp.float32(fan_in))))

    def vec(k, n, scale=0.1):
        return jax.random.normal(k, (1, n), jnp.float32) * scale

    # ---- synthetic backbone stand-in (see header note) ----
    k_stem = 9 * in_c
    s_stem = 1.0 + vec(ks[1], STEM_C)      # BN scale, folded into weights
    s_head = 1.0 + vec(ks[4], FEAT_C)
    w_stem = jnp.pad(lin(ks[0], k_stem, STEM_C), ((0, KPAD - k_stem), (0, 0)))
    w_stem = (w_stem * s_stem).astype(jnp.bfloat16)
    w_head = (lin(ks[3], STEM_C, FEAT_C) * s_head).astype(jnp.bfloat16)

    # ---- heads (same semantics as PyTorch age_model / gen_model) ----
    wa1 = lin(ks[6], FEAT_C, AGE_HID);          ba1 = vec(ks[7], AGE_HID)
    wa2 = lin(ks[8], AGE_HID, NUM_CLASSES);     ba2 = vec(ks[9], NUM_CLASSES)
    wg1 = lin(ks[10], FEAT_C, GEN_HID);         bg1 = vec(ks[11], GEN_HID)
    wg2 = lin(ks[12], GEN_HID, GEN_CLASSES);    bg2 = vec(ks[13], GEN_CLASSES)

    # merged first-layer GEMM weights: (1280, 256+128)
    w1_heads = jnp.concatenate([wa1, wg1], axis=1).astype(jnp.bfloat16)
    b1_heads = jnp.concatenate([ba1, bg1], axis=1)

    # block-diagonal, lane-padded second-layer GEMM: (384, 256)
    w2_heads = jnp.zeros((AGE_HID + GEN_HID, HEADS_OUT), jnp.float32)
    w2_heads = w2_heads.at[:AGE_HID, :NUM_CLASSES].set(wa2)
    w2_heads = w2_heads.at[AGE_HID:, HEAD_PAD:HEAD_PAD + GEN_CLASSES].set(wg2)
    b2_heads = jnp.zeros((1, HEADS_OUT), jnp.float32)
    b2_heads = b2_heads.at[:, :NUM_CLASSES].set(ba2)
    b2_heads = b2_heads.at[:, HEAD_PAD:HEAD_PAD + GEN_CLASSES].set(bg2)

    return dict(
        w_stem=w_stem,
        b_stem=vec(ks[2], STEM_C),
        w_head=w_head,
        b_head=vec(ks[5], FEAT_C),
        w1_heads=w1_heads, b1_heads=b1_heads,
        w2_heads=w2_heads.astype(jnp.bfloat16), b2_heads=b2_heads,
    )


# --------------------------------------------------------------------------
# Forward pass
# --------------------------------------------------------------------------
def forward(params, x_nchw):
    # NCHW (PyTorch convention) -> NHWC channels-last.
    x = jnp.transpose(x_nchw, (0, 2, 3, 1)).astype(jnp.float32)

    # Backbone stand-in: im2col (glue) -> single fused stem/head/GAP/heads
    # kernel (age/gender logits computed on-chip; no pooled-feature HBM trip).
    patches, (ho, wo) = im2col_3x3_s2(x)                # (B, Ho*Wo, KPAD) bf16
    age_pred, gen_pred = fused_forward(patches, params, ho * wo)
    return age_pred, gen_pred


if __name__ == "__main__":
    key = jax.random.PRNGKey(0)
    kx, kp = jax.random.split(key)

    # Small, forward-consistent shapes: batch=2, RGB, 16x16 spatial (NCHW).
    x = jax.random.normal(kx, (2, 3, 16, 16), jnp.float32)
    params = init_params(kp)

    age, gen = jax.jit(forward)(params, x)
    jax.block_until_ready((age, gen))

    assert age.shape == (2, NUM_CLASSES), age.shape
    assert gen.shape == (2, GEN_CLASSES), gen.shape
    assert bool(jnp.all((age >= 0.0) & (age <= 1.0)))
    assert bool(jnp.all((gen >= 0.0) & (gen <= 1.0)))
    assert bool(jnp.all(jnp.isfinite(age))) and bool(jnp.all(jnp.isfinite(gen)))
    print("KERNEL_OK")
</pallas_src>

<mosaic_0001>
module attributes {stable_mosaic.version = 11 : i64} {
  func.func @fused_forward_kernel(%arg0: i32, %arg1: i32, %arg2: memref<1x64x32xbf16, #tpu.memory_space<vmem>>, %arg3: memref<32x32xbf16, #tpu.memory_space<vmem>>, %arg4: memref<1x32xf32, #tpu.memory_space<vmem>>, %arg5: memref<32x1280xbf16, #tpu.memory_space<vmem>>, %arg6: memref<1x1280xf32, #tpu.memory_space<vmem>>, %arg7: memref<1280x384xbf16, #tpu.memory_space<vmem>>, %arg8: memref<1x384xf32, #tpu.memory_space<vmem>>, %arg9: memref<384x256xbf16, #tpu.memory_space<vmem>>, %arg10: memref<1x256xf32, #tpu.memory_space<vmem>>, %arg11: memref<1x1x256xf32, #tpu.memory_space<vmem>>, %arg12: memref<8x1280xf32, #tpu.memory_space<vmem>>) attributes {dimension_semantics = [#tpu.dimension_semantics<parallel>, #tpu.dimension_semantics<arbitrary>], iteration_bounds = array<i64: 2, 1>, scalar_prefetch = 0 : i64, scratch_operands = 1 : i64, tpu.core_type = #tpu.core_type<tc>, window_params = [{transform_indices = @transform_0, window_bounds = array<i64: 1, 64, 32>}, {pipeline_mode = #tpu.pipeline_mode<synchronous>, transform_indices = @transform_1, window_bounds = array<i64: 32, 32>}, {pipeline_mode = #tpu.pipeline_mode<synchronous>, transform_indices = @transform_2, window_bounds = array<i64: 1, 32>}, {pipeline_mode = #tpu.pipeline_mode<synchronous>, transform_indices = @transform_3, window_bounds = array<i64: 32, 1280>}, {pipeline_mode = #tpu.pipeline_mode<synchronous>, transform_indices = @transform_4, window_bounds = array<i64: 1, 1280>}, {pipeline_mode = #tpu.pipeline_mode<synchronous>, transform_indices = @transform_5, window_bounds = array<i64: 1280, 384>}, {pipeline_mode = #tpu.pipeline_mode<synchronous>, transform_indices = @transform_6, window_bounds = array<i64: 1, 384>}, {pipeline_mode = #tpu.pipeline_mode<synchronous>, transform_indices = @transform_7, window_bounds = array<i64: 384, 256>}, {pipeline_mode = #tpu.pipeline_mode<synchronous>, transform_indices = @transform_8, window_bounds = array<i64: 1, 256>}, {transform_indices = @transform_9, window_bounds = array<i64: 1, 1, 256>}]} {
    %c0_i32 = arith.constant 0 : i32
    %0 = arith.cmpi eq, %arg1, %c0_i32 : i32
    %1 = arith.extui %0 : i1 to i32
    %c0_i32_0 = arith.constant 0 : i32
    %2 = arith.cmpi ne, %1, %c0_i32_0 : i32
    scf.if %2 {
      %cst_23 = arith.constant 0.000000e+00 : f32
      %32 = vector.broadcast %cst_23 : f32 to vector<8x1280xf32>
      %c0_24 = arith.constant 0 : index
      %c0_25 = arith.constant 0 : index
      %33 = vector.load %arg12[%c0_24, %c0_25] : memref<8x1280xf32, #tpu.memory_space<vmem>>, vector<8x1280xf32>
      tpu.vector_store %arg12[%c0_24, %c0_25], %32 {strides = array<i32>} : memref<8x1280xf32, #tpu.memory_space<vmem>>, vector<8x1280xf32>,
    } else {
    }
    %c0 = arith.constant 0 : index
    %c0_1 = arith.constant 0 : index
    %c0_2 = arith.constant 0 : index
    %3 = vector.load %arg2[%c0, %c0_1, %c0_2] : memref<1x64x32xbf16, #tpu.memory_space<vmem>>, vector<1x64x32xbf16>
    %4 = vector.shape_cast %3 : vector<1x64x32xbf16> to vector<64x32xbf16>
    %c0_3 = arith.constant 0 : index
    %c0_4 = arith.constant 0 : index
    %5 = vector.load %arg3[%c0_3, %c0_4] : memref<32x32xbf16, #tpu.memory_space<vmem>>, vector<32x32xbf16>
    %cst = arith.constant dense<0.000000e+00> : vector<64x32xf32>
    %6 = tpu.matmul %4, %5, %cst {dimension_numbers = #tpu.dot_dimension_numbers<[1], [0], [0], [1], [0, 0, 1, 1], [], []>} : vector<64x32xbf16>, vector<32x32xbf16>, vector<64x32xf32> -> vector<64x32xf32>
    %c0_5 = arith.constant 0 : index
    %c0_6 = arith.constant 0 : index
    %7 = vector.load %arg4[%c0_5, %c0_6] : memref<1x32xf32, #tpu.memory_space<vmem>>, vector<1x32xf32>
    %8 = vector.broadcast %7 : vector<1x32xf32> to vector<64x32xf32>
    %9 = arith.addf %6, %8 : vector<64x32xf32>
    %cst_7 = arith.constant 0.000000e+00 : f32
    %cst_8 = arith.constant 6.000000e+00 : f32
    %10 = vector.broadcast %cst_7 : f32 to vector<64x32xf32>
    %11 = arith.maximumf %10, %9 : vector<64x32xf32>
    %12 = vector.broadcast %cst_8 : f32 to vector<64x32xf32>
    %13 = arith.minimumf %12, %11 : vector<64x32xf32>
    %14 = arith.truncf %13 : vector<64x32xf32> to vector<64x32xbf16>
    %c0_9 = arith.constant 0 : index
    %c0_10 = arith.constant 0 : index
    %15 = vector.load %arg5[%c0_9, %c0_10] : memref<32x1280xbf16, #tpu.memory_space<vmem>>, vector<32x1280xbf16>
    %cst_11 = arith.constant dense<0.000000e+00> : vector<64x1280xf32>
    %16 = tpu.matmul %14, %15, %cst_11 {dimension_numbers = #tpu.dot_dimension_numbers<[1], [0], [0], [1], [0, 0, 1, 1], [], []>} : vector<64x32xbf16>, vector<32x1280xbf16>, vector<64x1280xf32> -> vector<64x1280xf32>
    %c0_12 = arith.constant 0 : index
    %c0_13 = arith.constant 0 : index
    %17 = vector.load %arg6[%c0_12, %c0_13] : memref<1x1280xf32, #tpu.memory_space<vmem>>, vector<1x1280xf32>
    %18 = vector.broadcast %17 : vector<1x1280xf32> to vector<64x1280xf32>
    %19 = arith.addf %16, %18 : vector<64x1280xf32>
    %cst_14 = arith.constant 0.000000e+00 : f32
    %cst_15 = arith.constant 6.000000e+00 : f32
    %20 = vector.broadcast %cst_14 : f32 to vector<64x1280xf32>
    %21 = arith.maximumf %20, %19 : vector<64x1280xf32>
    %22 = vector.broadcast %cst_15 : f32 to vector<64x1280xf32>
    %23 = arith.minimumf %22, %21 : vector<64x1280xf32>
    %c0_16 = arith.constant 0 : index
    %c0_17 = arith.constant 0 : index
    %24 = vector.load %arg12[%c0_16, %c0_17] : memref<8x1280xf32, #tpu.memory_space<vmem>>, vector<8x1280xf32>
    %25 = vector.shape_cast %23 : vector<64x1280xf32> to vector<8x8x1280xf32>
    %cst_18 = arith.constant dense<0.000000e+00> : vector<8x1280xf32>
    %26 = vector.multi_reduction <add>, %25, %cst_18 [0] : vector<8x8x1280xf32> to vector<8x1280xf32>
    %27 = arith.addf %24, %26 : vector<8x1280xf32>
    %c0_19 = arith.constant 0 : index
    %c0_20 = arith.constant 0 : index
    %28 = vector.load %arg12[%c0_19, %c0_20] : memref<8x1280xf32, #tpu.memory_space<vmem>>, vector<8x1280xf32>
    tpu.vector_store %arg12[%c0_19, %c0_20], %27 {strides = array<i32>} : memref<8x1280xf32, #tpu.memory_space<vmem>>, vector<8x1280xf32>,
    %c0_i32_21 = arith.constant 0 : i32
    %29 = arith.cmpi eq, %arg1, %c0_i32_21 : i32
    %30 = arith.extui %29 : i1 to i32
    %c0_i32_22 = arith.constant 0 : i32
    %31 = arith.cmpi ne, %30, %c0_i32_22 : i32
    scf.if %31 {
      %c0_23 = arith.constant 0 : index
      %c0_24 = arith.constant 0 : index
      %32 = vector.load %arg12[%c0_23, %c0_24] : memref<8x1280xf32, #tpu.memory_space<vmem>>, vector<8x1280xf32>
      %cst_25 = arith.constant dense<0.000000e+00> : vector<1280xf32>
      %33 = vector.multi_reduction <add>, %32, %cst_25 [0] : vector<8x1280xf32> to vector<1280xf32>
      %34 = vector.shape_cast %33 : vector<1280xf32> to vector<1x1280xf32>
      %cst_26 = arith.constant 1.562500e-02 : f32
      %35 = vector.broadcast %cst_26 : f32 to vector<1x1280xf32>
      %36 = arith.mulf %34, %35 : vector<1x1280xf32>
      %37 = arith.truncf %36 : vector<1x1280xf32> to vector<1x1280xbf16>
      %c0_27 = arith.constant 0 : index
      %c0_28 = arith.constant 0 : index
      %38 = vector.load %arg7[%c0_27, %c0_28] : memref<1280x384xbf16, #tpu.memory_space<vmem>>, vector<1280x384xbf16>
      %cst_29 = arith.constant dense<0.000000e+00> : vector<1x384xf32>
      %39 = tpu.matmul %37, %38, %cst_29 {dimension_numbers = #tpu.dot_dimension_numbers<[1], [0], [0], [1], [0, 0, 1, 1], [], []>} : vector<1x1280xbf16>, vector<1280x384xbf16>, vector<1x384xf32> -> vector<1x384xf32>
      %c0_30 = arith.constant 0 : index
      %c0_31 = arith.constant 0 : index
      %40 = vector.load %arg8[%c0_30, %c0_31] : memref<1x384xf32, #tpu.memory_space<vmem>>, vector<1x384xf32>
      %41 = arith.addf %39, %40 : vector<1x384xf32>
      %cst_32 = arith.constant 0.000000e+00 : f32
      %42 = vector.broadcast %cst_32 : f32 to vector<1x384xf32>
      %43 = arith.maximumf %41, %42 : vector<1x384xf32>
      %44 = arith.truncf %43 : vector<1x384xf32> to vector<1x384xbf16>
      %c0_33 = arith.constant 0 : index
      %c0_34 = arith.constant 0 : index
      %45 = vector.load %arg9[%c0_33, %c0_34] : memref<384x256xbf16, #tpu.memory_space<vmem>>, vector<384x256xbf16>
      %cst_35 = arith.constant dense<0.000000e+00> : vector<1x256xf32>
      %46 = tpu.matmul %44, %45, %cst_35 {dimension_numbers = #tpu.dot_dimension_numbers<[1], [0], [0], [1], [0, 0, 1, 1], [], []>} : vector<1x384xbf16>, vector<384x256xbf16>, vector<1x256xf32> -> vector<1x256xf32>
      %c0_36 = arith.constant 0 : index
      %c0_37 = arith.constant 0 : index
      %47 = vector.load %arg10[%c0_36, %c0_37] : memref<1x256xf32, #tpu.memory_space<vmem>>, vector<1x256xf32>
      %48 = arith.addf %46, %47 : vector<1x256xf32>
      %49 = arith.negf %48 : vector<1x256xf32>
      %50 = math.exp %49 : vector<1x256xf32>
      %cst_38 = arith.constant 1.000000e+00 : f32
      %51 = vector.broadcast %cst_38 : f32 to vector<1x256xf32>
      %52 = arith.addf %51, %50 : vector<1x256xf32>
      %53 = arith.divf %51, %52 : vector<1x256xf32>
      %c0_39 = arith.constant 0 : index
      %c0_40 = arith.constant 0 : index
      %c0_41 = arith.constant 0 : index
      %54 = vector.load %arg11[%c0_39, %c0_40, %c0_41] : memref<1x1x256xf32, #tpu.memory_space<vmem>>, vector<1x1x256xf32>
      %55 = vector.shape_cast %54 : vector<1x1x256xf32> to vector<1x256xf32>
      %56 = vector.shape_cast %53 : vector<1x256xf32> to vector<1x1x256xf32>
      tpu.vector_store %arg11[%c0_39, %c0_40, %c0_41], %56 {strides = array<i32>} : memref<1x1x256xf32, #tpu.memory_space<vmem>>, vector<1x1x256xf32>,
    } else {
    }
    return
  }
  func.func @transform_0(%arg0: i32, %arg1: i32) -> (i32, i32, i32) {
    %c0_i32 = arith.constant 0 : i32
    %c0_i32_0 = arith.constant 0 : i32
    return %arg0, %arg1, %c0_i32 : i32, i32, i32
  }
  func.func @transform_1(%arg0: i32, %arg1: i32) -> (i32, i32) {
    %c0_i32 = arith.constant 0 : i32
    %c0_i32_0 = arith.constant 0 : i32
    %c0_i32_1 = arith.constant 0 : i32
    return %c0_i32, %c0_i32_0 : i32, i32
  }
  func.func @transform_2(%arg0: i32, %arg1: i32) -> (i32, i32) {
    %c0_i32 = arith.constant 0 : i32
    %c0_i32_0 = arith.constant 0 : i32
    %c0_i32_1 = arith.constant 0 : i32
    return %c0_i32, %c0_i32_0 : i32, i32
  }
  func.func @transform_3(%arg0: i32, %arg1: i32) -> (i32, i32) {
    %c0_i32 = arith.constant 0 : i32
    %c0_i32_0 = arith.constant 0 : i32
    %c0_i32_1 = arith.constant 0 : i32
    return %c0_i32, %c0_i32_0 : i32, i32
  }
  func.func @transform_4(%arg0: i32, %arg1: i32) -> (i32, i32) {
    %c0_i32 = arith.constant 0 : i32
    %c0_i32_0 = arith.constant 0 : i32
    %c0_i32_1 = arith.constant 0 : i32
    return %c0_i32, %c0_i32_0 : i32, i32
  }
  func.func @transform_5(%arg0: i32, %arg1: i32) -> (i32, i32) {
    %c0_i32 = arith.constant 0 : i32
    %c0_i32_0 = arith.constant 0 : i32
    %c0_i32_1 = arith.constant 0 : i32
    return %c0_i32, %c0_i32_0 : i32, i32
  }
  func.func @transform_6(%arg0: i32, %arg1: i32) -> (i32, i32) {
    %c0_i32 = arith.constant 0 : i32
    %c0_i32_0 = arith.constant 0 : i32
    %c0_i32_1 = arith.constant 0 : i32
    return %c0_i32, %c0_i32_0 : i32, i32
  }
  func.func @transform_7(%arg0: i32, %arg1: i32) -> (i32, i32) {
    %c0_i32 = arith.constant 0 : i32
    %c0_i32_0 = arith.constant 0 : i32
    %c0_i32_1 = arith.constant 0 : i32
    return %c0_i32, %c0_i32_0 : i32, i32
  }
  func.func @transform_8(%arg0: i32, %arg1: i32) -> (i32, i32) {
    %c0_i32 = arith.constant 0 : i32
    %c0_i32_0 = arith.constant 0 : i32
    %c0_i32_1 = arith.constant 0 : i32
    return %c0_i32, %c0_i32_0 : i32, i32
  }
  func.func @transform_9(%arg0: i32, %arg1: i32) -> (i32, i32, i32) {
    %c0_i32 = arith.constant 0 : i32
    %c0_i32_0 = arith.constant 0 : i32
    %c0_i32_1 = arith.constant 0 : i32
    return %arg0, %c0_i32, %c0_i32_0 : i32, i32, i32
  }
}

</mosaic_0001>

<llo_original>
// kernel: forward.1
$region0: #{forward.1}
  #allocation0 [shape = 'u32[]', space=smem, size = 0x4, offset = 0x4, fixed_abs, tag = 'smem constant byte address 0x4 - core index']
  #allocation1 [shape = 'u32[72,128]{1,0:T(1,128)}', space=vmem, size = 0x9000, scoped, tag = 'internal scratch']
  #allocation2 [shape = 'f32[8,1280]{1,0:T(8,128)}', space=vmem, size = 0xa000, scoped, tag = 'scratch operand']
  %s0 = inlined_call_operand.vmem [shape: bf16[2,64,32], index: 0, kind: input, shape index: {}]
  %s1 = inlined_call_operand.vmem [shape: bf16[32,32], index: 1, kind: input, shape index: {}]
  %s2 = inlined_call_operand.vmem [shape: f32[1,32], index: 2, kind: input, shape index: {}]
  %s3 = inlined_call_operand.vmem [shape: bf16[32,1280], index: 3, kind: input, shape index: {}]
  %s4 = inlined_call_operand.vmem [shape: f32[1,1280], index: 4, kind: input, shape index: {}]
  %s5 = inlined_call_operand.vmem [shape: bf16[1280,384], index: 5, kind: input, shape index: {}]
  %s6 = inlined_call_operand.vmem [shape: f32[1,384], index: 6, kind: input, shape index: {}]
  %s7 = inlined_call_operand.vmem [shape: bf16[384,256], index: 7, kind: input, shape index: {}]
  %s8 = inlined_call_operand.vmem [shape: f32[1,256], index: 8, kind: input, shape index: {}]
  %s9 = inlined_call_operand.vmem [shape: f32[2,1,256], index: 9, kind: output, shape index: {}]
  %s10 = sld [smem:[#allocation0]]
  $region77: #{forward.1} parent=0
    _
  %s12 = ssub.s32 1, %s10
  %s13 = scalar_select 0, %s12, %s10
  loop: start=0, step=1, limit=4
  $region2: #{forward.1} parent=0 // loop_pre_header
    _
  $region3: #{forward.1} parent=0 // loop_header
    %s15 = sphi 0, %s19
    %p16 = scmp.ge.s32.totalorder %s15, 4
    %s22 = sphi 0, %s34
    %s23 = sphi 0, %s30
    %s24 = sphi 0, %s22
    %s25 = sphi 0, %s23
    %s26 = sphi 0, %s24
    %s27 = sphi 0, %s25
    %s39 = sphi 0, %s41
    %s42 = sphi 0, %s39
    %s43 = sphi 0, %s42
    %s59 = sphi 0, %s43
    %s63 = sphi 0, %s63
    %s65 = sphi 0, %s63
    %s66 = sphi 0, %s65
    %s80 = sphi 0, %s66
    %s84 = sphi 0, %s84
    %s86 = sphi 0, %s84
    %s87 = sphi 0, %s86
    %s101 = sphi 0, %s87
    %s105 = sphi 0, %s105
    %s107 = sphi 0, %s105
    %s108 = sphi 0, %s107
    %s122 = sphi 0, %s108
    %s126 = sphi 0, %s126
    %s128 = sphi 0, %s126
    %s129 = sphi 0, %s128
    %s143 = sphi 0, %s129
    %s147 = sphi 0, %s147
    %s149 = sphi 0, %s147
    %s150 = sphi 0, %s149
    %s164 = sphi 0, %s150
    %s168 = sphi 0, %s168
    %s170 = sphi 0, %s168
    %s171 = sphi 0, %s170
    %s185 = sphi 0, %s171
    %s189 = sphi 0, %s189
    %s191 = sphi 0, %s189
    %s192 = sphi 0, %s191
    %s206 = sphi 0, %s192
    %s210 = sphi 0, %s210
    %s212 = sphi 0, %s210
    %s213 = sphi 0, %s212
    %s227 = sphi 0, %s213
    %s233 = sphi 0, %s235
    %s236 = sphi 0, %s233
    %s237 = sphi 0, %s236
    %s253 = sphi 0, %s237
  $region4: #{forward.1} parent=0 // loop_header_branch
    %18 = sbr.rel (%p16) target = $region8
  $region5: #{forward.1} parent=0 // loop_body
    %s20 = ssub.s32 %s15, 1
    %s21 = ssub.s32 %s15, 2
    %s28 = sadd.s32 1, %s23
    %p29 = scmp.ge.s32.totalorder %s28, 1
    %s30 = scalar_select %p29, 0, %s28
    %s31 = sadd.s32 1, %s22
    %s32 = scalar_select %p29, %s31, %s22
    %p33 = scmp.ge.s32.totalorder %s32, 2
    %s34 = scalar_select %p33, 0, %s32
    %s35 = ssub.s32 %s22, %s34
    %s36 = ssub.s32 %s23, %s30
    %s37 = sor.u32 %s35, %s36
    %p38 = scmp.eq.s32.totalorder %s37, 0
    %s40 = sadd.s32 %s39, 1
    %s41 = scalar_select %p38, %s39, %s40
    %p44 = pneg %p38
    %p45 = scmp.eq.s32.totalorder %s15, 1
    %p46 = por %p44, %p45
    %p47 = scmp.ne.s32.totalorder %s39, %s42
    %p48 = scmp.eq.s32.totalorder %s15, 0
    %p49 = por %p47, %p48
    %p50 = scmp.ne.s32.totalorder %s39, %s42
    %p51 = scmp.eq.s32.totalorder %s20, 1
    %p52 = por %p50, %p51
    %p53 = scmp.ne.s32.totalorder %s42, %s43
    %p54 = scmp.eq.s32.totalorder %s20, 0
    %p55 = por %p53, %p54
    %p56 = scmp.ne.s32.totalorder %s42, %s43
    %p57 = scmp.eq.s32.totalorder %s21, 1
    %p58 = por %p56, %p57
    %p60 = scmp.ne.s32.totalorder %s43, %s59
    %p61 = scmp.eq.s32.totalorder %s21, 0
    %p62 = por %p60, %p61
    %s64 = sadd.s32 %s63, 1
    %p67 = scmp.eq.s32.totalorder %s15, 1
    %p68 = scmp.ne.s32.totalorder %s63, %s65
    %p69 = scmp.eq.s32.totalorder %s15, 0
    %p70 = por %p68, %p69
    %p71 = scmp.ne.s32.totalorder %s63, %s65
    %p72 = scmp.eq.s32.totalorder %s20, 1
    %p73 = por %p71, %p72
    %p74 = scmp.ne.s32.totalorder %s65, %s66
    %p75 = scmp.eq.s32.totalorder %s20, 0
    %p76 = por %p74, %p75
    %p77 = scmp.ne.s32.totalorder %s65, %s66
    %p78 = scmp.eq.s32.totalorder %s21, 1
    %p79 = por %p77, %p78
    %p81 = scmp.ne.s32.totalorder %s66, %s80
    %p82 = scmp.eq.s32.totalorder %s21, 0
    %p83 = por %p81, %p82
    %s85 = sadd.s32 %s84, 1
    %p88 = scmp.eq.s32.totalorder %s15, 1
    %p89 = scmp.ne.s32.totalorder %s84, %s86
    %p90 = scmp.eq.s32.totalorder %s15, 0
    %p91 = por %p89, %p90
    %p92 = scmp.ne.s32.totalorder %s84, %s86
    %p93 = scmp.eq.s32.totalorder %s20, 1
    %p94 = por %p92, %p93
    %p95 = scmp.ne.s32.totalorder %s86, %s87
    %p96 = scmp.eq.s32.totalorder %s20, 0
    %p97 = por %p95, %p96
    %p98 = scmp.ne.s32.totalorder %s86, %s87
    %p99 = scmp.eq.s32.totalorder %s21, 1
    %p100 = por %p98, %p99
    %p102 = scmp.ne.s32.totalorder %s87, %s101
    %p103 = scmp.eq.s32.totalorder %s21, 0
    %p104 = por %p102, %p103
    %s106 = sadd.s32 %s105, 1
    %p109 = scmp.eq.s32.totalorder %s15, 1
    %p110 = scmp.ne.s32.totalorder %s105, %s107
    %p111 = scmp.eq.s32.totalorder %s15, 0
    %p112 = por %p110, %p111
    %p113 = scmp.ne.s32.totalorder %s105, %s107
    %p114 = scmp.eq.s32.totalorder %s20, 1
    %p115 = por %p113, %p114
    %p116 = scmp.ne.s32.totalorder %s107, %s108
    %p117 = scmp.eq.s32.totalorder %s20, 0
    %p118 = por %p116, %p117
    %p119 = scmp.ne.s32.totalorder %s107, %s108
    %p120 = scmp.eq.s32.totalorder %s21, 1
    %p121 = por %p119, %p120
    %p123 = scmp.ne.s32.totalorder %s108, %s122
    %p124 = scmp.eq.s32.totalorder %s21, 0
    %p125 = por %p123, %p124
    %s127 = sadd.s32 %s126, 1
    %p130 = scmp.eq.s32.totalorder %s15, 1
    %p131 = scmp.ne.s32.totalorder %s126, %s128
    %p132 = scmp.eq.s32.totalorder %s15, 0
    %p133 = por %p131, %p132
    %p134 = scmp.ne.s32.totalorder %s126, %s128
    %p135 = scmp.eq.s32.totalorder %s20, 1
    %p136 = por %p134, %p135
    %p137 = scmp.ne.s32.totalorder %s128, %s129
    %p138 = scmp.eq.s32.totalorder %s20, 0
    %p139 = por %p137, %p138
    %p140 = scmp.ne.s32.totalorder %s128, %s129
    %p141 = scmp.eq.s32.totalorder %s21, 1
    %p142 = por %p140, %p141
    %p144 = scmp.ne.s32.totalorder %s129, %s143
    %p145 = scmp.eq.s32.totalorder %s21, 0
    %p146 = por %p144, %p145
    %s148 = sadd.s32 %s147, 1
    %p151 = scmp.eq.s32.totalorder %s15, 1
    %p152 = scmp.ne.s32.totalorder %s147, %s149
    %p153 = scmp.eq.s32.totalorder %s15, 0
    %p154 = por %p152, %p153
    %p155 = scmp.ne.s32.totalorder %s147, %s149
    %p156 = scmp.eq.s32.totalorder %s20, 1
    %p157 = por %p155, %p156
    %p158 = scmp.ne.s32.totalorder %s149, %s150
    %p159 = scmp.eq.s32.totalorder %s20, 0
    %p160 = por %p158, %p159
    %p161 = scmp.ne.s32.totalorder %s149, %s150
    %p162 = scmp.eq.s32.totalorder %s21, 1
    %p163 = por %p161, %p162
    %p165 = scmp.ne.s32.totalorder %s150, %s164
    %p166 = scmp.eq.s32.totalorder %s21, 0
    %p167 = por %p165, %p166
    %s169 = sadd.s32 %s168, 1
    %p172 = scmp.eq.s32.totalorder %s15, 1
    %p173 = scmp.ne.s32.totalorder %s168, %s170
    %p174 = scmp.eq.s32.totalorder %s15, 0
    %p175 = por %p173, %p174
    %p176 = scmp.ne.s32.totalorder %s168, %s170
    %p177 = scmp.eq.s32.totalorder %s20, 1
    %p178 = por %p176, %p177
    %p179 = scmp.ne.s32.totalorder %s170, %s171
    %p180 = scmp.eq.s32.totalorder %s20, 0
    %p181 = por %p179, %p180
    %p182 = scmp.ne.s32.totalorder %s170, %s171
    %p183 = scmp.eq.s32.totalorder %s21, 1
    %p184 = por %p182, %p183
    %p186 = scmp.ne.s32.totalorder %s171, %s185
    %p187 = scmp.eq.s32.totalorder %s21, 0
    %p188 = por %p186, %p187
    %s190 = sadd.s32 %s189, 1
    %p193 = scmp.eq.s32.totalorder %s15, 1
    %p194 = scmp.ne.s32.totalorder %s189, %s191
    %p195 = scmp.eq.s32.totalorder %s15, 0
    %p196 = por %p194, %p195
    %p197 = scmp.ne.s32.totalorder %s189, %s191
    %p198 = scmp.eq.s32.totalorder %s20, 1
    %p199 = por %p197, %p198
    %p200 = scmp.ne.s32.totalorder %s191, %s192
    %p201 = scmp.eq.s32.totalorder %s20, 0
    %p202 = por %p200, %p201
    %p203 = scmp.ne.s32.totalorder %s191, %s192
    %p204 = scmp.eq.s32.totalorder %s21, 1
    %p205 = por %p203, %p204
    %p207 = scmp.ne.s32.totalorder %s192, %s206
    %p208 = scmp.eq.s32.totalorder %s21, 0
    %p209 = por %p207, %p208
    %s211 = sadd.s32 %s210, 1
    %p214 = scmp.eq.s32.totalorder %s15, 1
    %p215 = scmp.ne.s32.totalorder %s210, %s212
    %p216 = scmp.eq.s32.totalorder %s15, 0
    %p217 = por %p215, %p216
    %p218 = scmp.ne.s32.totalorder %s210, %s212
    %p219 = scmp.eq.s32.totalorder %s20, 1
    %p220 = por %p218, %p219
    %p221 = scmp.ne.s32.totalorder %s212, %s213
    %p222 = scmp.eq.s32.totalorder %s20, 0
    %p223 = por %p221, %p222
    %p224 = scmp.ne.s32.totalorder %s212, %s213
    %p225 = scmp.eq.s32.totalorder %s21, 1
    %p226 = por %p224, %p225
    %p228 = scmp.ne.s32.totalorder %s213, %s227
    %p229 = scmp.eq.s32.totalorder %s21, 0
    %p230 = por %p228, %p229
    %s231 = ssub.s32 %s22, %s34
    %p232 = scmp.eq.s32.totalorder %s231, 0
    %s234 = sadd.s32 %s233, 1
    %s235 = scalar_select %p232, %s233, %s234
    %p238 = pneg %p232
    %p239 = scmp.eq.s32.totalorder %s15, 1
    %p240 = por %p238, %p239
    %p241 = scmp.ne.s32.totalorder %s233, %s236
    %p242 = scmp.eq.s32.totalorder %s15, 0
    %p243 = por %p241, %p242
    %p244 = scmp.ne.s32.totalorder %s233, %s236
    %p245 = scmp.eq.s32.totalorder %s20, 1
    %p246 = por %p244, %p245
    %p247 = scmp.ne.s32.totalorder %s236, %s237
    %p248 = scmp.eq.s32.totalorder %s20, 0
    %p249 = por %p247, %p248
    %p250 = scmp.ne.s32.totalorder %s236, %s237
    %p251 = scmp.eq.s32.totalorder %s21, 1
    %p252 = por %p250, %p251
    %p254 = scmp.ne.s32.totalorder %s237, %s253
    %p255 = scmp.eq.s32.totalorder %s21, 0
    %p256 = por %p254, %p255
    %p257 = scmp.le.s32.totalorder 1, %s15
    %p258 = scmp.lt.s32.totalorder %s15, 3
    %p259 = pnand %p257, %p258
    %p260 = pneg %p259
    // Predicated region
    $region9: #{forward.1} parent=5 // pred_check
      _
    $region10: #{forward.1} parent=5 // pred_check_branch
      %262 = sbr.rel (%p259) target = $region12
    $region11: #{forward.1} parent=5 // pred_region
      %s263 = ssub.s32 %s15, 1
      // Predicated region
      $region13: #{forward.1} parent=11 // pred_check
        %p264 = pneg %p76
      $region14: #{forward.1} parent=11 // pred_check_branch
        %266 = sbr.rel (%p264) target = $region16
      $region15: #{forward.1} parent=11 // pred_region
        _
      $region16: #{forward.1} parent=11 // pred_fallthru
        _
      // Predicated region
      $region17: #{forward.1} parent=11 // pred_check
        %p267 = pneg %p97
      $region18: #{forward.1} parent=11 // pred_check_branch
        %269 = sbr.rel (%p267) target = $region20
      $region19: #{forward.1} parent=11 // pred_region
        _
      $region20: #{forward.1} parent=11 // pred_fallthru
        _
      // Predicated region
      $region21: #{forward.1} parent=11 // pred_check
        %p270 = pneg %p118
      $region22: #{forward.1} parent=11 // pred_check_branch
        %272 = sbr.rel (%p270) target = $region24
      $region23: #{forward.1} parent=11 // pred_region
        _
      $region24: #{forward.1} parent=11 // pred_fallthru
        _
      // Predicated region
      $region25: #{forward.1} parent=11 // pred_check
        %p273 = pneg %p139
      $region26: #{forward.1} parent=11 // pred_check_branch
        %275 = sbr.rel (%p273) target = $region28
      $region27: #{forward.1} parent=11 // pred_region
        _
      $region28: #{forward.1} parent=11 // pred_fallthru
        _
      // Predicated region
      $region29: #{forward.1} parent=11 // pred_check
        %p276 = pneg %p160
      $region30: #{forward.1} parent=11 // pred_check_branch
        %278 = sbr.rel (%p276) target = $region32
      $region31: #{forward.1} parent=11 // pred_region
        _
      $region32: #{forward.1} parent=11 // pred_fallthru
        _
      // Predicated region
      $region33: #{forward.1} parent=11 // pred_check
        %p279 = pneg %p181
      $region34: #{forward.1} parent=11 // pred_check_branch
        %281 = sbr.rel (%p279) target = $region36
      $region35: #{forward.1} parent=11 // pred_region
        _
      $region36: #{forward.1} parent=11 // pred_fallthru
        _
      // Predicated region
      $region37: #{forward.1} parent=11 // pred_check
        %p282 = pneg %p202
      $region38: #{forward.1} parent=11 // pred_check_branch
        %284 = sbr.rel (%p282) target = $region40
      $region39: #{forward.1} parent=11 // pred_region
        _
      $region40: #{forward.1} parent=11 // pred_fallthru
        _
      // Predicated region
      $region41: #{forward.1} parent=11 // pred_check
        %p285 = pneg %p223
      $region42: #{forward.1} parent=11 // pred_check_branch
        %287 = sbr.rel (%p285) target = $region44
      $region43: #{forward.1} parent=11 // pred_region
        _
      $region44: #{forward.1} parent=11 // pred_fallthru
        _
    $region12: #{forward.1} parent=5 // pred_fallthru
      _
    %p288 = scmp.lt.s32.totalorder %s15, 2
    // Predicated region
    $region45: #{forward.1} parent=5 // pred_check
      %p289 = pneg %p288
    $region46: #{forward.1} parent=5 // pred_check_branch
      %291 = sbr.rel (%p289) target = $region48
    $region47: #{forward.1} parent=5 // pred_region
      // Predicated region
      $region49: #{forward.1} parent=47 // pred_check
        %p292 = pneg %p49
      $region50: #{forward.1} parent=47 // pred_check_branch
        %294 = sbr.rel (%p292) target = $region52
      $region51: #{forward.1} parent=47 // pred_region
        %s295 = smul.u32 8, %s23
        %p296 = scmp.lt.s32.totalorder %s22, 1
        %s297 = scalar_select %p296, %s22, 1
        %p298 = scmp.lt.s32.totalorder %s295, 7
        %s299 = scalar_select %p298, %s295, 7
        %s300 = smul.addr %s297, 8
        %s301 = sadd.s32 %s299, %s300
        %s302 = smul.addr %s301, 4
        %s303 = scalar_lea.vmem %s0, %s302
        %s304 = smul.u32 8, %s23
      $region52: #{forward.1} parent=47 // pred_fallthru
        _
    $region48: #{forward.1} parent=5 // pred_fallthru
      _
    %p305 = scmp.le.s32.totalorder 1, %s15
    %p306 = scmp.lt.s32.totalorder %s15, 3
    %p307 = pnand %p305, %p306
    %p308 = pneg %p307
    // Predicated region
    $region53: #{forward.1} parent=5 // pred_check
      _
    $region54: #{forward.1} parent=5 // pred_check_branch
      %310 = sbr.rel (%p307) target = $region56
    $region55: #{forward.1} parent=5 // pred_region
      %s311 = ssub.s32 %s15, 1
      %s312 = smul.u32 8, %s25
      %p313 = scmp.lt.s32.totalorder %s24, 1
      %s314 = scalar_select %p313, %s24, 1
      %p315 = scmp.lt.s32.totalorder %s312, 7
      %s316 = scalar_select %p315, %s312, 7
      %s317 = smul.addr %s314, 8
      %s318 = sadd.s32 %s316, %s317
      %s319 = smul.addr %s318, 4
      %s320 = scalar_lea.vmem %s0, %s319
      %p321 = pneg %p55
      %p322 = pneg %p52
      %p323 = pneg %p76
      %p324 = pneg %p73
      %p325 = pneg %p97
      %p326 = pneg %p94
      %p327 = pneg %p118
      %p328 = pneg %p115
      %p329 = pneg %p139
      %p330 = pneg %p136
      %p331 = pneg %p160
      %p332 = pneg %p157
      %p333 = pneg %p181
      %p334 = pneg %p178
      %p335 = pneg %p202
      %p336 = pneg %p199
      %p337 = pneg %p223
      %p338 = pneg %p220
      %p339 = pneg %p249
      %p340 = pneg %p246
      %p341 = scmp.lt.s32.totalorder %s24, 1
      %s342 = scalar_select %p341, %s24, 1
      %s343 = smul.addr %s342, 2
      %s344 = scalar_lea.vmem %s9, %s343
      %s345 = smul.u32 8, %s25
      %p346 = scmp.lt.s32.totalorder %s24, 1
      %s347 = scalar_select %p346, %s24, 1
      %p348 = scmp.lt.s32.totalorder %s345, 7
      %s349 = scalar_select %p348, %s345, 7
      %s350 = smul.addr %s347, 8
      %s351 = sadd.s32 %s349, %s350
      %s352 = smul.addr %s351, 4
      %s353 = scalar_lea.vmem %s0, %s352
      %s354 = smul.u32 8, %s25
      %p355 = scmp.lt.s32.totalorder %s24, 1
      %s356 = scalar_select %p355, %s24, 1
      %s357 = smul.addr %s356, 2
      %s358 = scalar_lea.vmem %s9, %s357
      %p360 = scmp.eq.s32.totalorder %s25, 0
      // Predicated region
      $region57: #{forward.1} parent=55 // pred_check
        %p361 = pneg %p360
      $region58: #{forward.1} parent=55 // pred_check_branch
        %363 = sbr.rel (%p361) target = $region60
      $region59: #{forward.1} parent=55 // pred_region
        %364 = vst [vmem:[#allocation2] sm:$0xff] 0.0
        %365 = vst [vmem:[#allocation2 + $0x8] sm:$0xff] 0.0
        %366 = vst [vmem:[#allocation2 + $0x10] sm:$0xff] 0.0
        %367 = vst [vmem:[#allocation2 + $0x18] sm:$0xff] 0.0
        %368 = vst [vmem:[#allocation2 + $0x20] sm:$0xff] 0.0
        %369 = vst [vmem:[#allocation2 + $0x28] sm:$0xff] 0.0
        %370 = vst [vmem:[#allocation2 + $0x30] sm:$0xff] 0.0
        %371 = vst [vmem:[#allocation2 + $0x38] sm:$0xff] 0.0
        %372 = vst [vmem:[#allocation2 + $0x40] sm:$0xff] 0.0
        %373 = vst [vmem:[#allocation2 + $0x48] sm:$0xff] 0.0
      $region60: #{forward.1} parent=55 // pred_fallthru
        _
      %v374 = vld [vmem:[%s353] sm:$0xf]
      %v375 = vld [vmem:[%s353 + $0x4] sm:$0xf]
      %v376 = vld [vmem:[%s353 + $0x8] sm:$0xf]
      %v377 = vld [vmem:[%s353 + $0xc] sm:$0xf]
      %v378 = vld [vmem:[%s353 + $0x10] sm:$0xf]
      %v379 = vld [vmem:[%s353 + $0x14] sm:$0xf]
      %v380 = vld [vmem:[%s353 + $0x18] sm:$0xf]
      %v381 = vld [vmem:[%s353 + $0x1c] sm:$0xf]
      %v382 = vld [vmem:[%s1] sm:$0xf]
      %v383 = vld [vmem:[%s1 + $0x4] sm:$0xf]
      %v384 = vld [vmem:[%s1 + $0x8] sm:$0xf]
      %v385 = vld [vmem:[%s1 + $0xc] sm:$0xf]
      %v386 = vld [vmem:[%s2] sm:$0x1]
      %v388 = vperm.slane %v386, 0
      %v398 = vunpack.c.l.b16 %v374
      %v399 = vunpack.c.l.b16 %v375
      %v400 = vunpack.c.l.b16 %v376
      %v401 = vunpack.c.l.b16 %v377
      %v402 = vunpack.c.l.b16 %v378
      %v403 = vunpack.c.l.b16 %v379
      %v404 = vunpack.c.l.b16 %v380
      %v405 = vunpack.c.l.b16 %v381
      %v406 = vpack.c.b16 %v399, %v398
      %v407 = vpack.c.b16 %v401, %v400
      %v408 = vpack.c.b16 %v403, %v402
      %v409 = vpack.c.b16 %v405, %v404
      %v414 = vunpack.c.l.b16 %v382
      %v415 = vunpack.c.l.b16 %v383
      %v416 = vunpack.c.l.b16 %v384
      %v417 = vunpack.c.l.b16 %v385
      %v418 = vpack.c.b16 %v415, %v414
      %v419 = vpack.c.b16 %v417, %v416
      %vm422 = vcmask 261120
      %v424 = vsel %vm422, %v406, 0
      %v427 = vsel %vm422, %v407, 0
      %v430 = vsel %vm422, %v408, 0
      %v433 = vsel %vm422, %v409, 0
      %435 = vmatpush.bf16.msra.mxu0 0
      %436 = vmatpush.bf16.msra.mxu0 0
      %437 = vmatpush.bf16.msra.mxu0 0
      %438 = vmatpush.bf16.msra.mxu0 0
      %439 = vmatpush.bf16.msra.mxu0 0
      %440 = vmatpush.bf16.msra.mxu0 0
      %441 = vmatpush.bf16.msra.mxu0 %v419
      %442 = vmatpush.bf16.msra.mxu0 %v418
      %443 = vmatmul.bf16.gmra.mxu0 %v424
      %v444 = vpop.f32.mrf.mxu0
      %v445 = vadd.f32 %v388, %v444
      %v446 = vpop.f32.mrf.mxu0
      %v447 = vadd.f32 %v388, %v446
      %448 = vmatmul.bf16.gmra.mxu0 %v427
      %v449 = vpop.f32.mrf.mxu0
      %v450 = vadd.f32 %v388, %v449
      %v451 = vpop.f32.mrf.mxu0
      %v452 = vadd.f32 %v388, %v451
      %453 = vmatmul.bf16.gmra.mxu0 %v430
      %v454 = vpop.f32.mrf.mxu0
      %v455 = vadd.f32 %v388, %v454
      %v456 = vpop.f32.mrf.mxu0
      %v457 = vadd.f32 %v388, %v456
      %458 = vmatmul.bf16.gmra.mxu0 %v433
      %v459 = vpop.f32.mrf.mxu0
      %v460 = vadd.f32 %v388, %v459
      %v461 = vpop.f32.mrf.mxu0
      %v462 = vadd.f32 %v388, %v461
      %463 = vdwg.mxu0
      %v464 = vmax.f32 %v445, 0.0
      %v465 = vmax.f32 %v447, 0.0
      %v466 = vmax.f32 %v450, 0.0
      %v467 = vmax.f32 %v452, 0.0
      %v468 = vmax.f32 %v455, 0.0
      %v469 = vmax.f32 %v457, 0.0
      %v470 = vmax.f32 %v460, 0.0
      %v471 = vmax.f32 %v462, 0.0
      %v472 = vmin.f32 %v464, 6.0
      %v473 = vmin.f32 %v465, 6.0
      %v474 = vmin.f32 %v466, 6.0
      %v475 = vmin.f32 %v467, 6.0
      %v476 = vmin.f32 %v468, 6.0
      %v477 = vmin.f32 %v469, 6.0
      %v478 = vmin.f32 %v470, 6.0
      %v479 = vmin.f32 %v471, 6.0
      %v480 = vpack.c.bf16 %v473, %v472
      %v481 = vpack.c.bf16 %v475, %v474
      %v482 = vpack.c.bf16 %v477, %v476
      %v483 = vpack.c.bf16 %v479, %v478
      %v484 = vld [vmem:[%s3] sm:$0xff]
      %v485 = vld [vmem:[%s3 + $0x8] sm:$0xff]
      %v486 = vld [vmem:[%s3 + $0x10] sm:$0xff]
      %v487 = vld [vmem:[%s3 + $0x18] sm:$0xff]
      %v488 = vld [vmem:[%s3 + $0x20] sm:$0xff]
      %v489 = vld [vmem:[%s3 + $0x28] sm:$0xff]
      %v490 = vld [vmem:[%s3 + $0x30] sm:$0xff]
      %v491 = vld [vmem:[%s3 + $0x38] sm:$0xff]
      %v492 = vld [vmem:[%s3 + $0x40] sm:$0xff]
      %v493 = vld [vmem:[%s3 + $0x48] sm:$0xff]
      %v494 = vld [vmem:[%s3 + $0x50] sm:$0xff]
      %v495 = vld [vmem:[%s3 + $0x58] sm:$0xff]
      %v496 = vld [vmem:[%s3 + $0x60] sm:$0xff]
      %v497 = vld [vmem:[%s3 + $0x68] sm:$0xff]
      %v498 = vld [vmem:[%s3 + $0x70] sm:$0xff]
      %v499 = vld [vmem:[%s3 + $0x78] sm:$0xff]
      %v500 = vld [vmem:[%s3 + $0x80] sm:$0xff]
      %v501 = vld [vmem:[%s3 + $0x88] sm:$0xff]
      %v502 = vld [vmem:[%s3 + $0x90] sm:$0xff]
      %v503 = vld [vmem:[%s3 + $0x98] sm:$0xff]
      %v504 = vld [vmem:[%s4] sm:$0xff]
      %v505 = vld [vmem:[%s4 + $0x8] sm:$0x3]
      %v508 = vperm.slane %v504, 0
      %v509 = vperm.slane %v504, 1
      %v510 = vperm.slane %v504, 2
      %v511 = vperm.slane %v504, 3
      %v512 = vperm.slane %v504, 4
      %v513 = vperm.slane %v504, 5
      %v514 = vperm.slane %v504, 6
      %v515 = vperm.slane %v504, 7
      %v516 = vperm.slane %v505, 0
      %v517 = vperm.slane %v505, 1
      %v548 = vunpack.c.l.b16 %v484
      %v549 = vunpack.c.h.b16 %v484
      %v550 = vunpack.c.l.b16 %v485
      %v551 = vunpack.c.h.b16 %v485
      %v552 = vunpack.c.l.b16 %v486
      %v553 = vunpack.c.h.b16 %v486
      %v554 = vunpack.c.l.b16 %v487
      %v555 = vunpack.c.h.b16 %v487
      %v556 = vunpack.c.l.b16 %v488
      %v557 = vunpack.c.h.b16 %v488
      %v558 = vunpack.c.l.b16 %v489
      %v559 = vunpack.c.h.b16 %v489
      %v560 = vunpack.c.l.b16 %v490
      %v561 = vunpack.c.h.b16 %v490
      %v562 = vunpack.c.l.b16 %v491
      %v563 = vunpack.c.h.b16 %v491
      %v564 = vunpack.c.l.b16 %v492
      %v565 = vunpack.c.h.b16 %v492
      %v566 = vunpack.c.l.b16 %v493
      %v567 = vunpack.c.h.b16 %v493
      %v568 = vunpack.c.l.b16 %v494
      %v569 = vunpack.c.h.b16 %v494
      %v570 = vunpack.c.l.b16 %v495
      %v571 = vunpack.c.h.b16 %v495
      %v572 = vunpack.c.l.b16 %v496
      %v573 = vunpack.c.h.b16 %v496
      %v574 = vunpack.c.l.b16 %v497
      %v575 = vunpack.c.h.b16 %v497
      %v576 = vunpack.c.l.b16 %v498
      %v577 = vunpack.c.h.b16 %v498
      %v578 = vunpack.c.l.b16 %v499
      %v579 = vunpack.c.h.b16 %v499
      %v580 = vunpack.c.l.b16 %v500
      %v581 = vunpack.c.h.b16 %v500
      %v582 = vunpack.c.l.b16 %v501
      %v583 = vunpack.c.h.b16 %v501
      %v584 = vunpack.c.l.b16 %v502
      %v585 = vunpack.c.h.b16 %v502
      %v586 = vunpack.c.l.b16 %v503
      %v587 = vunpack.c.h.b16 %v503
      %v588 = vpack.c.b16 %v558, %v548
      %v589 = vpack.c.b16 %v559, %v549
      %v590 = vpack.c.b16 %v560, %v550
      %v591 = vpack.c.b16 %v561, %v551
      %v592 = vpack.c.b16 %v562, %v552
      %v593 = vpack.c.b16 %v563, %v553
      %v594 = vpack.c.b16 %v564, %v554
      %v595 = vpack.c.b16 %v565, %v555
      %v596 = vpack.c.b16 %v566, %v556
      %v597 = vpack.c.b16 %v567, %v557
      %v598 = vpack.c.b16 %v578, %v568
      %v599 = vpack.c.b16 %v579, %v569
      %v600 = vpack.c.b16 %v580, %v570
      %v601 = vpack.c.b16 %v581, %v571
      %v602 = vpack.c.b16 %v582, %v572
      %v603 = vpack.c.b16 %v583, %v573
      %v604 = vpack.c.b16 %v584, %v574
      %v605 = vpack.c.b16 %v585, %v575
      %v606 = vpack.c.b16 %v586, %v576
      %v607 = vpack.c.b16 %v587, %v577
      %v629 = vsel %vm422, %v480, 0
      %v632 = vsel %vm422, %v481, 0
      %v635 = vsel %vm422, %v482, 0
      %v638 = vsel %vm422, %v483, 0
      %640 = vmatpush.bf16.msra.mxu0 0
      %641 = vmatpush.bf16.msra.mxu0 0
      %642 = vmatpush.bf16.msra.mxu0 0
      %643 = vmatpush.bf16.msra.mxu0 0
      %644 = vmatpush.bf16.msra.mxu0 0
      %645 = vmatpush.bf16.msra.mxu0 0
      %646 = vmatpush.bf16.msra.mxu0 %v598
      %647 = vmatpush.bf16.msra.mxu0 %v588
      %648 = vmatmul.bf16.gmra.mxu0 %v629
      %v649 = vpop.f32.mrf.mxu0
      %v650 = vadd.f32 %v508, %v649
      %v651 = vpop.f32.mrf.mxu0
      %v652 = vadd.f32 %v508, %v651
      %653 = vmatmul.bf16.gmra.mxu0 %v632
      %v654 = vpop.f32.mrf.mxu0
      %v655 = vadd.f32 %v508, %v654
      %v656 = vpop.f32.mrf.mxu0
      %v657 = vadd.f32 %v508, %v656
      %658 = vmatmul.bf16.gmra.mxu0 %v635
      %v659 = vpop.f32.mrf.mxu0
      %v660 = vadd.f32 %v508, %v659
      %v661 = vpop.f32.mrf.mxu0
      %v662 = vadd.f32 %v508, %v661
      %663 = vmatmul.bf16.gmra.mxu0 %v638
      %v664 = vpop.f32.mrf.mxu0
      %v665 = vadd.f32 %v508, %v664
      %v666 = vpop.f32.mrf.mxu0
      %v667 = vadd.f32 %v508, %v666
      %668 = vdwg.mxu0
      %669 = vmatpush.bf16.msra.mxu0 0
      %670 = vmatpush.bf16.msra.mxu0 0
      %671 = vmatpush.bf16.msra.mxu0 0
      %672 = vmatpush.bf16.msra.mxu0 0
      %673 = vmatpush.bf16.msra.mxu0 0
      %674 = vmatpush.bf16.msra.mxu0 0
      %675 = vmatpush.bf16.msra.mxu0 %v599
      %676 = vmatpush.bf16.msra.mxu0 %v589
      %677 = vmatmul.bf16.gmra.mxu0 %v629
      %v678 = vpop.f32.mrf.mxu0
      %v679 = vadd.f32 %v509, %v678
      %v680 = vpop.f32.mrf.mxu0
      %v681 = vadd.f32 %v509, %v680
      %682 = vmatmul.bf16.gmra.mxu0 %v632
      %v683 = vpop.f32.mrf.mxu0
      %v684 = vadd.f32 %v509, %v683
      %v685 = vpop.f32.mrf.mxu0
      %v686 = vadd.f32 %v509, %v685
      %687 = vmatmul.bf16.gmra.mxu0 %v635
      %v688 = vpop.f32.mrf.mxu0
      %v689 = vadd.f32 %v509, %v688
      %v690 = vpop.f32.mrf.mxu0
      %v691 = vadd.f32 %v509, %v690
      %692 = vmatmul.bf16.gmra.mxu0 %v638
      %v693 = vpop.f32.mrf.mxu0
      %v694 = vadd.f32 %v509, %v693
      %v695 = vpop.f32.mrf.mxu0
      %v696 = vadd.f32 %v509, %v695
      %697 = vdwg.mxu0
      %698 = vmatpush.bf16.msra.mxu0 0
      %699 = vmatpush.bf16.msra.mxu0 0
      %700 = vmatpush.bf16.msra.mxu0 0
      %701 = vmatpush.bf16.msra.mxu0 0
      %702 = vmatpush.bf16.msra.mxu0 0
      %703 = vmatpush.bf16.msra.mxu0 0
      %704 = vmatpush.bf16.msra.mxu0 %v600
      %705 = vmatpush.bf16.msra.mxu0 %v590
      %706 = vmatmul.bf16.gmra.mxu0 %v629
      %v707 = vpop.f32.mrf.mxu0
      %v708 = vadd.f32 %v510, %v707
      %v709 = vpop.f32.mrf.mxu0
      %v710 = vadd.f32 %v510, %v709
      %711 = vmatmul.bf16.gmra.mxu0 %v632
      %v712 = vpop.f32.mrf.mxu0
      %v713 = vadd.f32 %v510, %v712
      %v714 = vpop.f32.mrf.mxu0
      %v715 = vadd.f32 %v510, %v714
      %716 = vmatmul.bf16.gmra.mxu0 %v635
      %v717 = vpop.f32.mrf.mxu0
      %v718 = vadd.f32 %v510, %v717
      %v719 = vpop.f32.mrf.mxu0
      %v720 = vadd.f32 %v510, %v719
      %721 = vmatmul.bf16.gmra.mxu0 %v638
      %v722 = vpop.f32.mrf.mxu0
      %v723 = vadd.f32 %v510, %v722
      %v724 = vpop.f32.mrf.mxu0
      %v725 = vadd.f32 %v510, %v724
      %726 = vdwg.mxu0
      %727 = vmatpush.bf16.msra.mxu0 0
      %728 = vmatpush.bf16.msra.mxu0 0
      %729 = vmatpush.bf16.msra.mxu0 0
      %730 = vmatpush.bf16.msra.mxu0 0
      %731 = vmatpush.bf16.msra.mxu0 0
      %732 = vmatpush.bf16.msra.mxu0 0
      %733 = vmatpush.bf16.msra.mxu0 %v601
      %734 = vmatpush.bf16.msra.mxu0 %v591
      %735 = vmatmul.bf16.gmra.mxu0 %v629
      %v736 = vpop.f32.mrf.mxu0
      %v737 = vadd.f32 %v511, %v736
      %v738 = vpop.f32.mrf.mxu0
      %v739 = vadd.f32 %v511, %v738
      %740 = vmatmul.bf16.gmra.mxu0 %v632
      %v741 = vpop.f32.mrf.mxu0
      %v742 = vadd.f32 %v511, %v741
      %v743 = vpop.f32.mrf.mxu0
      %v744 = vadd.f32 %v511, %v743
      %745 = vmatmul.bf16.gmra.mxu0 %v635
      %v746 = vpop.f32.mrf.mxu0
      %v747 = vadd.f32 %v511, %v746
      %v748 = vpop.f32.mrf.mxu0
      %v749 = vadd.f32 %v511, %v748
      %750 = vmatmul.bf16.gmra.mxu0 %v638
      %v751 = vpop.f32.mrf.mxu0
      %v752 = vadd.f32 %v511, %v751
      %v753 = vpop.f32.mrf.mxu0
      %v754 = vadd.f32 %v511, %v753
      %755 = vdwg.mxu0
      %756 = vmatpush.bf16.msra.mxu0 0
      %757 = vmatpush.bf16.msra.mxu0 0
      %758 = vmatpush.bf16.msra.mxu0 0
      %759 = vmatpush.bf16.msra.mxu0 0
      %760 = vmatpush.bf16.msra.mxu0 0
      %761 = vmatpush.bf16.msra.mxu0 0
      %762 = vmatpush.bf16.msra.mxu0 %v602
      %763 = vmatpush.bf16.msra.mxu0 %v592
      %764 = vmatmul.bf16.gmra.mxu0 %v629
      %v765 = vpop.f32.mrf.mxu0
      %v766 = vadd.f32 %v512, %v765
      %v767 = vpop.f32.mrf.mxu0
      %v768 = vadd.f32 %v512, %v767
      %769 = vmatmul.bf16.gmra.mxu0 %v632
      %v770 = vpop.f32.mrf.mxu0
      %v771 = vadd.f32 %v512, %v770
      %v772 = vpop.f32.mrf.mxu0
      %v773 = vadd.f32 %v512, %v772
      %774 = vmatmul.bf16.gmra.mxu0 %v635
      %v775 = vpop.f32.mrf.mxu0
      %v776 = vadd.f32 %v512, %v775
      %v777 = vpop.f32.mrf.mxu0
      %v778 = vadd.f32 %v512, %v777
      %779 = vmatmul.bf16.gmra.mxu0 %v638
      %v780 = vpop.f32.mrf.mxu0
      %v781 = vadd.f32 %v512, %v780
      %v782 = vpop.f32.mrf.mxu0
      %v783 = vadd.f32 %v512, %v782
      %784 = vdwg.mxu0
      %785 = vmatpush.bf16.msra.mxu0 0
      %786 = vmatpush.bf16.msra.mxu0 0
      %787 = vmatpush.bf16.msra.mxu0 0
      %788 = vmatpush.bf16.msra.mxu0 0
      %789 = vmatpush.bf16.msra.mxu0 0
      %790 = vmatpush.bf16.msra.mxu0 0
      %791 = vmatpush.bf16.msra.mxu0 %v603
      %792 = vmatpush.bf16.msra.mxu0 %v593
      %793 = vmatmul.bf16.gmra.mxu0 %v629
      %v794 = vpop.f32.mrf.mxu0
      %v795 = vadd.f32 %v513, %v794
      %v796 = vpop.f32.mrf.mxu0
      %v797 = vadd.f32 %v513, %v796
      %798 = vmatmul.bf16.gmra.mxu0 %v632
      %v799 = vpop.f32.mrf.mxu0
      %v800 = vadd.f32 %v513, %v799
      %v801 = vpop.f32.mrf.mxu0
      %v802 = vadd.f32 %v513, %v801
      %803 = vmatmul.bf16.gmra.mxu0 %v635
      %v804 = vpop.f32.mrf.mxu0
      %v805 = vadd.f32 %v513, %v804
      %v806 = vpop.f32.mrf.mxu0
      %v807 = vadd.f32 %v513, %v806
      %808 = vmatmul.bf16.gmra.mxu0 %v638
      %v809 = vpop.f32.mrf.mxu0
      %v810 = vadd.f32 %v513, %v809
      %v811 = vpop.f32.mrf.mxu0
      %v812 = vadd.f32 %v513, %v811
      %813 = vdwg.mxu0
      %814 = vmatpush.bf16.msra.mxu0 0
      %815 = vmatpush.bf16.msra.mxu0 0
      %816 = vmatpush.bf16.msra.mxu0 0
      %817 = vmatpush.bf16.msra.mxu0 0
      %818 = vmatpush.bf16.msra.mxu0 0
      %819 = vmatpush.bf16.msra.mxu0 0
      %820 = vmatpush.bf16.msra.mxu0 %v604
      %821 = vmatpush.bf16.msra.mxu0 %v594
      %822 = vmatmul.bf16.gmra.mxu0 %v629
      %v823 = vpop.f32.mrf.mxu0
      %v824 = vadd.f32 %v514, %v823
      %v825 = vpop.f32.mrf.mxu0
      %v826 = vadd.f32 %v514, %v825
      %827 = vmatmul.bf16.gmra.mxu0 %v632
      %v828 = vpop.f32.mrf.mxu0
      %v829 = vadd.f32 %v514, %v828
      %v830 = vpop.f32.mrf.mxu0
      %v831 = vadd.f32 %v514, %v830
      %832 = vmatmul.bf16.gmra.mxu0 %v635
      %v833 = vpop.f32.mrf.mxu0
      %v834 = vadd.f32 %v514, %v833
      %v835 = vpop.f32.mrf.mxu0
      %v836 = vadd.f32 %v514, %v835
      %837 = vmatmul.bf16.gmra.mxu0 %v638
      %v838 = vpop.f32.mrf.mxu0
      %v839 = vadd.f32 %v514, %v838
      %v840 = vpop.f32.mrf.mxu0
      %v841 = vadd.f32 %v514, %v840
      %842 = vdwg.mxu0
      %843 = vmatpush.bf16.msra.mxu0 0
      %844 = vmatpush.bf16.msra.mxu0 0
      %845 = vmatpush.bf16.msra.mxu0 0
      %846 = vmatpush.bf16.msra.mxu0 0
      %847 = vmatpush.bf16.msra.mxu0 0
      %848 = vmatpush.bf16.msra.mxu0 0
      %849 = vmatpush.bf16.msra.mxu0 %v605
      %850 = vmatpush.bf16.msra.mxu0 %v595
      %851 = vmatmul.bf16.gmra.mxu0 %v629
      %v852 = vpop.f32.mrf.mxu0
      %v853 = vadd.f32 %v515, %v852
      %v854 = vpop.f32.mrf.mxu0
      %v855 = vadd.f32 %v515, %v854
      %856 = vmatmul.bf16.gmra.mxu0 %v632
      %v857 = vpop.f32.mrf.mxu0
      %v858 = vadd.f32 %v515, %v857
      %v859 = vpop.f32.mrf.mxu0
      %v860 = vadd.f32 %v515, %v859
      %861 = vmatmul.bf16.gmra.mxu0 %v635
      %v862 = vpop.f32.mrf.mxu0
      %v863 = vadd.f32 %v515, %v862
      %v864 = vpop.f32.mrf.mxu0
      %v865 = vadd.f32 %v515, %v864
      %866 = vmatmul.bf16.gmra.mxu0 %v638
      %v867 = vpop.f32.mrf.mxu0
      %v868 = vadd.f32 %v515, %v867
      %v869 = vpop.f32.mrf.mxu0
      %v870 = vadd.f32 %v515, %v869
      %871 = vdwg.mxu0
      %872 = vmatpush.bf16.msra.mxu0 0
      %873 = vmatpush.bf16.msra.mxu0 0
      %874 = vmatpush.bf16.msra.mxu0 0
      %875 = vmatpush.bf16.msra.mxu0 0
      %876 = vmatpush.bf16.msra.mxu0 0
      %877 = vmatpush.bf16.msra.mxu0 0
      %878 = vmatpush.bf16.msra.mxu0 %v606
      %879 = vmatpush.bf16.msra.mxu0 %v596
      %880 = vmatmul.bf16.gmra.mxu0 %v629
      %v881 = vpop.f32.mrf.mxu0
      %v882 = vadd.f32 %v516, %v881
      %v883 = vpop.f32.mrf.mxu0
      %v884 = vadd.f32 %v516, %v883
      %885 = vmatmul.bf16.gmra.mxu0 %v632
      %v886 = vpop.f32.mrf.mxu0
      %v887 = vadd.f32 %v516, %v886
      %v888 = vpop.f32.mrf.mxu0
      %v889 = vadd.f32 %v516, %v888
      %890 = vmatmul.bf16.gmra.mxu0 %v635
      %v891 = vpop.f32.mrf.mxu0
      %v892 = vadd.f32 %v516, %v891
      %v893 = vpop.f32.mrf.mxu0
      %v894 = vadd.f32 %v516, %v893
      %895 = vmatmul.bf16.gmra.mxu0 %v638
      %v896 = vpop.f32.mrf.mxu0
      %v897 = vadd.f32 %v516, %v896
      %v898 = vpop.f32.mrf.mxu0
      %v899 = vadd.f32 %v516, %v898
      %900 = vdwg.mxu0
      %901 = vmatpush.bf16.msra.mxu0 0
      %902 = vmatpush.bf16.msra.mxu0 0
      %903 = vmatpush.bf16.msra.mxu0 0
      %904 = vmatpush.bf16.msra.mxu0 0
      %905 = vmatpush.bf16.msra.mxu0 0
      %906 = vmatpush.bf16.msra.mxu0 0
      %907 = vmatpush.bf16.msra.mxu0 %v607
      %908 = vmatpush.bf16.msra.mxu0 %v597
      %909 = vmatmul.bf16.gmra.mxu0 %v629
      %v910 = vpop.f32.mrf.mxu0
      %v911 = vadd.f32 %v517, %v910
      %v912 = vpop.f32.mrf.mxu0
      %v913 = vadd.f32 %v517, %v912
      %914 = vmatmul.bf16.gmra.mxu0 %v632
      %v915 = vpop.f32.mrf.mxu0
      %v916 = vadd.f32 %v517, %v915
      %v917 = vpop.f32.mrf.mxu0
      %v918 = vadd.f32 %v517, %v917
      %919 = vmatmul.bf16.gmra.mxu0 %v635
      %v920 = vpop.f32.mrf.mxu0
      %v921 = vadd.f32 %v517, %v920
      %v922 = vpop.f32.mrf.mxu0
      %v923 = vadd.f32 %v517, %v922
      %924 = vmatmul.bf16.gmra.mxu0 %v638
      %v925 = vpop.f32.mrf.mxu0
      %v926 = vadd.f32 %v517, %v925
      %v927 = vpop.f32.mrf.mxu0
      %v928 = vadd.f32 %v517, %v927
      %929 = vdwg.mxu0
      %v930 = vmax.f32 %v650, 0.0
      %v931 = vmax.f32 %v679, 0.0
      %v932 = vmax.f32 %v708, 0.0
      %v933 = vmax.f32 %v737, 0.0
      %v934 = vmax.f32 %v766, 0.0
      %v935 = vmax.f32 %v795, 0.0
      %v936 = vmax.f32 %v824, 0.0
      %v937 = vmax.f32 %v853, 0.0
      %v938 = vmax.f32 %v882, 0.0
      %v939 = vmax.f32 %v911, 0.0
      %v940 = vmax.f32 %v652, 0.0
      %v941 = vmax.f32 %v681, 0.0
      %v942 = vmax.f32 %v710, 0.0
      %v943 = vmax.f32 %v739, 0.0
      %v944 = vmax.f32 %v768, 0.0
      %v945 = vmax.f32 %v797, 0.0
      %v946 = vmax.f32 %v826, 0.0
      %v947 = vmax.f32 %v855, 0.0
      %v948 = vmax.f32 %v884, 0.0
      %v949 = vmax.f32 %v913, 0.0
      %v950 = vmax.f32 %v655, 0.0
      %v951 = vmax.f32 %v684, 0.0
      %v952 = vmax.f32 %v713, 0.0
      %v953 = vmax.f32 %v742, 0.0
      %v954 = vmax.f32 %v771, 0.0
      %v955 = vmax.f32 %v800, 0.0
      %v956 = vmax.f32 %v829, 0.0
      %v957 = vmax.f32 %v858, 0.0
      %v958 = vmax.f32 %v887, 0.0
      %v959 = vmax.f32 %v916, 0.0
      %v960 = vmax.f32 %v657, 0.0
      %v961 = vmax.f32 %v686, 0.0
      %v962 = vmax.f32 %v715, 0.0
      %v963 = vmax.f32 %v744, 0.0
      %v964 = vmax.f32 %v773, 0.0
      %v965 = vmax.f32 %v802, 0.0
      %v966 = vmax.f32 %v831, 0.0
      %v967 = vmax.f32 %v860, 0.0
      %v968 = vmax.f32 %v889, 0.0
      %v969 = vmax.f32 %v918, 0.0
      %v970 = vmax.f32 %v660, 0.0
      %v971 = vmax.f32 %v689, 0.0
      %v972 = vmax.f32 %v718, 0.0
      %v973 = vmax.f32 %v747, 0.0
      %v974 = vmax.f32 %v776, 0.0
      %v975 = vmax.f32 %v805, 0.0
      %v976 = vmax.f32 %v834, 0.0
      %v977 = vmax.f32 %v863, 0.0
      %v978 = vmax.f32 %v892, 0.0
      %v979 = vmax.f32 %v921, 0.0
      %v980 = vmax.f32 %v662, 0.0
      %v981 = vmax.f32 %v691, 0.0
      %v982 = vmax.f32 %v720, 0.0
      %v983 = vmax.f32 %v749, 0.0
      %v984 = vmax.f32 %v778, 0.0
      %v985 = vmax.f32 %v807, 0.0
      %v986 = vmax.f32 %v836, 0.0
      %v987 = vmax.f32 %v865, 0.0
      %v988 = vmax.f32 %v894, 0.0
      %v989 = vmax.f32 %v923, 0.0
      %v990 = vmax.f32 %v665, 0.0
      %v991 = vmax.f32 %v694, 0.0
      %v992 = vmax.f32 %v723, 0.0
      %v993 = vmax.f32 %v752, 0.0
      %v994 = vmax.f32 %v781, 0.0
      %v995 = vmax.f32 %v810, 0.0
      %v996 = vmax.f32 %v839, 0.0
      %v997 = vmax.f32 %v868, 0.0
      %v998 = vmax.f32 %v897, 0.0
      %v999 = vmax.f32 %v926, 0.0
      %v1000 = vmax.f32 %v667, 0.0
      %v1001 = vmax.f32 %v696, 0.0
      %v1002 = vmax.f32 %v725, 0.0
      %v1003 = vmax.f32 %v754, 0.0
      %v1004 = vmax.f32 %v783, 0.0
      %v1005 = vmax.f32 %v812, 0.0
      %v1006 = vmax.f32 %v841, 0.0
      %v1007 = vmax.f32 %v870, 0.0
      %v1008 = vmax.f32 %v899, 0.0
      %v1009 = vmax.f32 %v928, 0.0
      %v1010 = vmin.f32 %v930, 6.0
      %v1011 = vmin.f32 %v931, 6.0
      %v1012 = vmin.f32 %v932, 6.0
      %v1013 = vmin.f32 %v933, 6.0
      %v1014 = vmin.f32 %v934, 6.0
      %v1015 = vmin.f32 %v935, 6.0
      %v1016 = vmin.f32 %v936, 6.0
      %v1017 = vmin.f32 %v937, 6.0
      %v1018 = vmin.f32 %v938, 6.0
      %v1019 = vmin.f32 %v939, 6.0
      %v1020 = vmin.f32 %v940, 6.0
      %v1021 = vmin.f32 %v941, 6.0
      %v1022 = vmin.f32 %v942, 6.0
      %v1023 = vmin.f32 %v943, 6.0
      %v1024 = vmin.f32 %v944, 6.0
      %v1025 = vmin.f32 %v945, 6.0
      %v1026 = vmin.f32 %v946, 6.0
      %v1027 = vmin.f32 %v947, 6.0
      %v1028 = vmin.f32 %v948, 6.0
      %v1029 = vmin.f32 %v949, 6.0
      %v1030 = vmin.f32 %v950, 6.0
      %v1031 = vmin.f32 %v951, 6.0
      %v1032 = vmin.f32 %v952, 6.0
      %v1033 = vmin.f32 %v953, 6.0
      %v1034 = vmin.f32 %v954, 6.0
      %v1035 = vmin.f32 %v955, 6.0
      %v1036 = vmin.f32 %v956, 6.0
      %v1037 = vmin.f32 %v957, 6.0
      %v1038 = vmin.f32 %v958, 6.0
      %v1039 = vmin.f32 %v959, 6.0
      %v1040 = vmin.f32 %v960, 6.0
      %v1041 = vmin.f32 %v961, 6.0
      %v1042 = vmin.f32 %v962, 6.0
      %v1043 = vmin.f32 %v963, 6.0
      %v1044 = vmin.f32 %v964, 6.0
      %v1045 = vmin.f32 %v965, 6.0
      %v1046 = vmin.f32 %v966, 6.0
      %v1047 = vmin.f32 %v967, 6.0
      %v1048 = vmin.f32 %v968, 6.0
      %v1049 = vmin.f32 %v969, 6.0
      %v1050 = vmin.f32 %v970, 6.0
      %v1051 = vmin.f32 %v971, 6.0
      %v1052 = vmin.f32 %v972, 6.0
      %v1053 = vmin.f32 %v973, 6.0
      %v1054 = vmin.f32 %v974, 6.0
      %v1055 = vmin.f32 %v975, 6.0
      %v1056 = vmin.f32 %v976, 6.0
      %v1057 = vmin.f32 %v977, 6.0
      %v1058 = vmin.f32 %v978, 6.0
      %v1059 = vmin.f32 %v979, 6.0
      %v1060 = vmin.f32 %v980, 6.0
      %v1061 = vmin.f32 %v981, 6.0
      %v1062 = vmin.f32 %v982, 6.0
      %v1063 = vmin.f32 %v983, 6.0
      %v1064 = vmin.f32 %v984, 6.0
      %v1065 = vmin.f32 %v985, 6.0
      %v1066 = vmin.f32 %v986, 6.0
      %v1067 = vmin.f32 %v987, 6.0
      %v1068 = vmin.f32 %v988, 6.0
      %v1069 = vmin.f32 %v989, 6.0
      %v1070 = vmin.f32 %v990, 6.0
      %v1071 = vmin.f32 %v991, 6.0
      %v1072 = vmin.f32 %v992, 6.0
      %v1073 = vmin.f32 %v993, 6.0
      %v1074 = vmin.f32 %v994, 6.0
      %v1075 = vmin.f32 %v995, 6.0
      %v1076 = vmin.f32 %v996, 6.0
      %v1077 = vmin.f32 %v997, 6.0
      %v1078 = vmin.f32 %v998, 6.0
      %v1079 = vmin.f32 %v999, 6.0
      %v1080 = vmin.f32 %v1000, 6.0
      %v1081 = vmin.f32 %v1001, 6.0
      %v1082 = vmin.f32 %v1002, 6.0
      %v1083 = vmin.f32 %v1003, 6.0
      %v1084 = vmin.f32 %v1004, 6.0
      %v1085 = vmin.f32 %v1005, 6.0
      %v1086 = vmin.f32 %v1006, 6.0
      %v1087 = vmin.f32 %v1007, 6.0
      %v1088 = vmin.f32 %v1008, 6.0
      %v1089 = vmin.f32 %v1009, 6.0
      %v1090 = vld [vmem:[#allocation2] sm:$0xff]
      %v1091 = vld [vmem:[#allocation2 + $0x8] sm:$0xff]
      %v1092 = vld [vmem:[#allocation2 + $0x10] sm:$0xff]
      %v1093 = vld [vmem:[#allocation2 + $0x18] sm:$0xff]
      %v1094 = vld [vmem:[#allocation2 + $0x20] sm:$0xff]
      %v1095 = vld [vmem:[#allocation2 + $0x28] sm:$0xff]
      %v1096 = vld [vmem:[#allocation2 + $0x30] sm:$0xff]
      %v1097 = vld [vmem:[#allocation2 + $0x38] sm:$0xff]
      %v1098 = vld [vmem:[#allocation2 + $0x40] sm:$0xff]
      %v1099 = vld [vmem:[#allocation2 + $0x48] sm:$0xff]
      %v1100 = vadd.f32 %v1010, %v1020
      %v1101 = vadd.f32 %v1100, %v1030
      %v1102 = vadd.f32 %v1101, %v1040
      %v1103 = vadd.f32 %v1102, %v1050
      %v1104 = vadd.f32 %v1103, %v1060
      %v1105 = vadd.f32 %v1104, %v1070
      %v1106 = vadd.f32 %v1105, %v1080
      %v1107 = vadd.f32 %v1011, %v1021
      %v1108 = vadd.f32 %v1107, %v1031
      %v1109 = vadd.f32 %v1108, %v1041
      %v1110 = vadd.f32 %v1109, %v1051
      %v1111 = vadd.f32 %v1110, %v1061
      %v1112 = vadd.f32 %v1111, %v1071
      %v1113 = vadd.f32 %v1112, %v1081
      %v1114 = vadd.f32 %v1012, %v1022
      %v1115 = vadd.f32 %v1114, %v1032
      %v1116 = vadd.f32 %v1115, %v1042
      %v1117 = vadd.f32 %v1116, %v1052
      %v1118 = vadd.f32 %v1117, %v1062
      %v1119 = vadd.f32 %v1118, %v1072
      %v1120 = vadd.f32 %v1119, %v1082
      %v1121 = vadd.f32 %v1013, %v1023
      %v1122 = vadd.f32 %v1121, %v1033
      %v1123 = vadd.f32 %v1122, %v1043
      %v1124 = vadd.f32 %v1123, %v1053
      %v1125 = vadd.f32 %v1124, %v1063
      %v1126 = vadd.f32 %v1125, %v1073
      %v1127 = vadd.f32 %v1126, %v1083
      %v1128 = vadd.f32 %v1014, %v1024
      %v1129 = vadd.f32 %v1128, %v1034
      %v1130 = vadd.f32 %v1129, %v1044
      %v1131 = vadd.f32 %v1130, %v1054
      %v1132 = vadd.f32 %v1131, %v1064
      %v1133 = vadd.f32 %v1132, %v1074
      %v1134 = vadd.f32 %v1133, %v1084
      %v1135 = vadd.f32 %v1015, %v1025
      %v1136 = vadd.f32 %v1135, %v1035
      %v1137 = vadd.f32 %v1136, %v1045
      %v1138 = vadd.f32 %v1137, %v1055
      %v1139 = vadd.f32 %v1138, %v1065
      %v1140 = vadd.f32 %v1139, %v1075
      %v1141 = vadd.f32 %v1140, %v1085
      %v1142 = vadd.f32 %v1016, %v1026
      %v1143 = vadd.f32 %v1142, %v1036
      %v1144 = vadd.f32 %v1143, %v1046
      %v1145 = vadd.f32 %v1144, %v1056
      %v1146 = vadd.f32 %v1145, %v1066
      %v1147 = vadd.f32 %v1146, %v1076
      %v1148 = vadd.f32 %v1147, %v1086
      %v1149 = vadd.f32 %v1017, %v1027
      %v1150 = vadd.f32 %v1149, %v1037
      %v1151 = vadd.f32 %v1150, %v1047
      %v1152 = vadd.f32 %v1151, %v1057
      %v1153 = vadd.f32 %v1152, %v1067
      %v1154 = vadd.f32 %v1153, %v1077
      %v1155 = vadd.f32 %v1154, %v1087
      %v1156 = vadd.f32 %v1018, %v1028
      %v1157 = vadd.f32 %v1156, %v1038
      %v1158 = vadd.f32 %v1157, %v1048
      %v1159 = vadd.f32 %v1158, %v1058
      %v1160 = vadd.f32 %v1159, %v1068
      %v1161 = vadd.f32 %v1160, %v1078
      %v1162 = vadd.f32 %v1161, %v1088
      %v1163 = vadd.f32 %v1019, %v1029
      %v1164 = vadd.f32 %v1163, %v1039
      %v1165 = vadd.f32 %v1164, %v1049
      %v1166 = vadd.f32 %v1165, %v1059
      %v1167 = vadd.f32 %v1166, %v1069
      %v1168 = vadd.f32 %v1167, %v1079
      %v1169 = vadd.f32 %v1168, %v1089
      %v1170 = vadd.f32 %v1090, %v1106
      %v1171 = vadd.f32 %v1091, %v1113
      %v1172 = vadd.f32 %v1092, %v1120
      %v1173 = vadd.f32 %v1093, %v1127
      %v1174 = vadd.f32 %v1094, %v1134
      %v1175 = vadd.f32 %v1095, %v1141
      %v1176 = vadd.f32 %v1096, %v1148
      %v1177 = vadd.f32 %v1097, %v1155
      %v1178 = vadd.f32 %v1098, %v1162
      %v1179 = vadd.f32 %v1099, %v1169
      %1180 = vst [vmem:[#allocation2] sm:$0xff] %v1170
      %1181 = vst [vmem:[#allocation2 + $0x8] sm:$0xff] %v1171
      %1182 = vst [vmem:[#allocation2 + $0x10] sm:$0xff] %v1172
      %1183 = vst [vmem:[#allocation2 + $0x18] sm:$0xff] %v1173
      %1184 = vst [vmem:[#allocation2 + $0x20] sm:$0xff] %v1174
      %1185 = vst [vmem:[#allocation2 + $0x28] sm:$0xff] %v1175
      %1186 = vst [vmem:[#allocation2 + $0x30] sm:$0xff] %v1176
      %1187 = vst [vmem:[#allocation2 + $0x38] sm:$0xff] %v1177
      %1188 = vst [vmem:[#allocation2 + $0x40] sm:$0xff] %v1178
      %1189 = vst [vmem:[#allocation2 + $0x48] sm:$0xff] %v1179
      // Predicated region
      $region61: #{forward.1} parent=55 // pred_check
        %p1190 = pneg %p360
      $region62: #{forward.1} parent=55 // pred_check_branch
        %1192 = sbr.rel (%p1190) target = $region64
      $region63: #{forward.1} parent=55 // pred_region
        %v1193 = vld [vmem:[#allocation2] sm:$0xff]
        %v1194 = vld [vmem:[#allocation2 + $0x8] sm:$0xff]
        %v1195 = vld [vmem:[#allocation2 + $0x10] sm:$0xff]
        %v1196 = vld [vmem:[#allocation2 + $0x18] sm:$0xff]
        %v1197 = vld [vmem:[#allocation2 + $0x20] sm:$0xff]
        %v1198 = vld [vmem:[#allocation2 + $0x28] sm:$0xff]
        %v1199 = vld [vmem:[#allocation2 + $0x30] sm:$0xff]
        %v1200 = vld [vmem:[#allocation2 + $0x38] sm:$0xff]
        %v1201 = vld [vmem:[#allocation2 + $0x40] sm:$0xff]
        %v1202 = vld [vmem:[#allocation2 + $0x48] sm:$0xff]
        %v1203 = vrot.slane %v1193, 4
        %v1204 = vadd.f32 %v1193, %v1203
        %v1205 = vrot.slane %v1204, 2
        %v1206 = vadd.f32 %v1204, %v1205
        %v1207 = vrot.slane %v1206, 1
        %v1208 = vadd.f32 %v1206, %v1207
        %v1209 = vrot.slane %v1194, 4
        %v1210 = vadd.f32 %v1194, %v1209
        %v1211 = vrot.slane %v1210, 2
        %v1212 = vadd.f32 %v1210, %v1211
        %v1213 = vrot.slane %v1212, 1
        %v1214 = vadd.f32 %v1212, %v1213
        %v1215 = vrot.slane %v1195, 4
        %v1216 = vadd.f32 %v1195, %v1215
        %v1217 = vrot.slane %v1216, 2
        %v1218 = vadd.f32 %v1216, %v1217
        %v1219 = vrot.slane %v1218, 1
        %v1220 = vadd.f32 %v1218, %v1219
        %v1221 = vrot.slane %v1196, 4
        %v1222 = vadd.f32 %v1196, %v1221
        %v1223 = vrot.slane %v1222, 2
        %v1224 = vadd.f32 %v1222, %v1223
        %v1225 = vrot.slane %v1224, 1
        %v1226 = vadd.f32 %v1224, %v1225
        %v1227 = vrot.slane %v1197, 4
        %v1228 = vadd.f32 %v1197, %v1227
        %v1229 = vrot.slane %v1228, 2
        %v1230 = vadd.f32 %v1228, %v1229
        %v1231 = vrot.slane %v1230, 1
        %v1232 = vadd.f32 %v1230, %v1231
        %v1233 = vrot.slane %v1198, 4
        %v1234 = vadd.f32 %v1198, %v1233
        %v1235 = vrot.slane %v1234, 2
        %v1236 = vadd.f32 %v1234, %v1235
        %v1237 = vrot.slane %v1236, 1
        %v1238 = vadd.f32 %v1236, %v1237
        %v1239 = vrot.slane %v1199, 4
        %v1240 = vadd.f32 %v1199, %v1239
        %v1241 = vrot.slane %v1240, 2
        %v1242 = vadd.f32 %v1240, %v1241
        %v1243 = vrot.slane %v1242, 1
        %v1244 = vadd.f32 %v1242, %v1243
        %v1245 = vrot.slane %v1200, 4
        %v1246 = vadd.f32 %v1200, %v1245
        %v1247 = vrot.slane %v1246, 2
        %v1248 = vadd.f32 %v1246, %v1247
        %v1249 = vrot.slane %v1248, 1
        %v1250 = vadd.f32 %v1248, %v1249
        %v1251 = vrot.slane %v1201, 4
        %v1252 = vadd.f32 %v1201, %v1251
        %v1253 = vrot.slane %v1252, 2
        %v1254 = vadd.f32 %v1252, %v1253
        %v1255 = vrot.slane %v1254, 1
        %v1256 = vadd.f32 %v1254, %v1255
        %v1257 = vrot.slane %v1202, 4
        %v1258 = vadd.f32 %v1202, %v1257
        %v1259 = vrot.slane %v1258, 2
        %v1260 = vadd.f32 %v1258, %v1259
        %v1261 = vrot.slane %v1260, 1
        %v1262 = vadd.f32 %v1260, %v1261
        %v1263 = vmul.f32 %v1208, 0.015625
        %v1264 = vmul.f32 %v1214, 0.015625
        %v1265 = vmul.f32 %v1220, 0.015625
        %v1266 = vmul.f32 %v1226, 0.015625
        %v1267 = vmul.f32 %v1232, 0.015625
        %v1268 = vmul.f32 %v1238, 0.015625
        %v1269 = vmul.f32 %v1244, 0.015625
        %v1270 = vmul.f32 %v1250, 0.015625
        %v1271 = vmul.f32 %v1256, 0.015625
        %v1272 = vmul.f32 %v1262, 0.015625
        %v1273 = vpack.c.bf16 %v1263, %v1263
        %v1274 = vpack.c.bf16 %v1264, %v1264
        %v1275 = vpack.c.bf16 %v1265, %v1265
        %v1276 = vpack.c.bf16 %v1266, %v1266
        %v1277 = vpack.c.bf16 %v1267, %v1267
        %v1278 = vpack.c.bf16 %v1268, %v1268
        %v1279 = vpack.c.bf16 %v1269, %v1269
        %v1280 = vpack.c.bf16 %v1270, %v1270
        %v1281 = vpack.c.bf16 %v1271, %v1271
        %v1282 = vpack.c.bf16 %v1272, %v1272
        %v1283 = vld [vmem:[%s5] sm:$0xff]
        %v1284 = vld [vmem:[%s5 + $0x8] sm:$0xf]
        %v1285 = vld [vmem:[%s5 + $0xc] sm:$0xff]
        %v1286 = vld [vmem:[%s5 + $0x14] sm:$0xf]
        %v1287 = vld [vmem:[%s5 + $0x18] sm:$0xff]
        %v1288 = vld [vmem:[%s5 + $0x20] sm:$0xf]
        %v1289 = vld [vmem:[%s5 + $0x24] sm:$0xff]
        %v1290 = vld [vmem:[%s5 + $0x2c] sm:$0xf]
        %v1291 = vld [vmem:[%s5 + $0x30] sm:$0xff]
        %v1292 = vld [vmem:[%s5 + $0x38] sm:$0xf]
        %v1293 = vld [vmem:[%s5 + $0x3c] sm:$0xff]
        %v1294 = vld [vmem:[%s5 + $0x44] sm:$0xf]
        %v1295 = vld [vmem:[%s5 + $0x48] sm:$0xff]
        %v1296 = vld [vmem:[%s5 + $0x50] sm:$0xf]
        %v1297 = vld [vmem:[%s5 + $0x54] sm:$0xff]
        %v1298 = vld [vmem:[%s5 + $0x5c] sm:$0xf]
        %v1299 = vld [vmem:[%s5 + $0x60] sm:$0xff]
        %v1300 = vld [vmem:[%s5 + $0x68] sm:$0xf]
        %v1301 = vld [vmem:[%s5 + $0x6c] sm:$0xff]
        %v1302 = vld [vmem:[%s5 + $0x74] sm:$0xf]
        %v1303 = vld [vmem:[%s5 + $0x78] sm:$0xff]
        %v1304 = vld [vmem:[%s5 + $0x80] sm:$0xf]
        %v1305 = vld [vmem:[%s5 + $0x84] sm:$0xff]
        %v1306 = vld [vmem:[%s5 + $0x8c] sm:$0xf]
        %v1307 = vld [vmem:[%s5 + $0x90] sm:$0xff]
        %v1308 = vld [vmem:[%s5 + $0x98] sm:$0xf]
        %v1309 = vld [vmem:[%s5 + $0x9c] sm:$0xff]
        %v1310 = vld [vmem:[%s5 + $0xa4] sm:$0xf]
        %v1311 = vld [vmem:[%s5 + $0xa8] sm:$0xff]
        %v1312 = vld [vmem:[%s5 + $0xb0] sm:$0xf]
        %v1313 = vld [vmem:[%s5 + $0xb4] sm:$0xff]
        %v1314 = vld [vmem:[%s5 + $0xbc] sm:$0xf]
        %v1315 = vld [vmem:[%s5 + $0xc0] sm:$0xff]
        %v1316 = vld [vmem:[%s5 + $0xc8] sm:$0xf]
        %v1317 = vld [vmem:[%s5 + $0xcc] sm:$0xff]
        %v1318 = vld [vmem:[%s5 + $0xd4] sm:$0xf]
        %v1319 = vld [vmem:[%s5 + $0xd8] sm:$0xff]
        %v1320 = vld [vmem:[%s5 + $0xe0] sm:$0xf]
        %v1321 = vld [vmem:[%s5 + $0xe4] sm:$0xff]
        %v1322 = vld [vmem:[%s5 + $0xec] sm:$0xf]
        %v1323 = vld [vmem:[%s5 + $0xf0] sm:$0xff]
        %v1324 = vld [vmem:[%s5 + $0xf8] sm:$0xf]
        %v1325 = vld [vmem:[%s5 + $0xfc] sm:$0xff]
        %v1326 = vld [vmem:[%s5 + $0x104] sm:$0xf]
        %v1327 = vld [vmem:[%s5 + $0x108] sm:$0xff]
        %v1328 = vld [vmem:[%s5 + $0x110] sm:$0xf]
        %v1329 = vld [vmem:[%s5 + $0x114] sm:$0xff]
        %v1330 = vld [vmem:[%s5 + $0x11c] sm:$0xf]
        %v1331 = vld [vmem:[%s5 + $0x120] sm:$0xff]
        %v1332 = vld [vmem:[%s5 + $0x128] sm:$0xf]
        %v1333 = vld [vmem:[%s5 + $0x12c] sm:$0xff]
        %v1334 = vld [vmem:[%s5 + $0x134] sm:$0xf]
        %v1335 = vld [vmem:[%s5 + $0x138] sm:$0xff]
        %v1336 = vld [vmem:[%s5 + $0x140] sm:$0xf]
        %v1337 = vld [vmem:[%s5 + $0x144] sm:$0xff]
        %v1338 = vld [vmem:[%s5 + $0x14c] sm:$0xf]
        %v1339 = vld [vmem:[%s5 + $0x150] sm:$0xff]
        %v1340 = vld [vmem:[%s5 + $0x158] sm:$0xf]
        %v1341 = vld [vmem:[%s5 + $0x15c] sm:$0xff]
        %v1342 = vld [vmem:[%s5 + $0x164] sm:$0xf]
        %v1343 = vld [vmem:[%s5 + $0x168] sm:$0xff]
        %v1344 = vld [vmem:[%s5 + $0x170] sm:$0xf]
        %v1345 = vld [vmem:[%s5 + $0x174] sm:$0xff]
        %v1346 = vld [vmem:[%s5 + $0x17c] sm:$0xf]
        %v1347 = vld [vmem:[%s5 + $0x180] sm:$0xff]
        %v1348 = vld [vmem:[%s5 + $0x188] sm:$0xf]
        %v1349 = vld [vmem:[%s5 + $0x18c] sm:$0xff]
        %v1350 = vld [vmem:[%s5 + $0x194] sm:$0xf]
        %v1351 = vld [vmem:[%s5 + $0x198] sm:$0xff]
        %v1352 = vld [vmem:[%s5 + $0x1a0] sm:$0xf]
        %v1353 = vld [vmem:[%s5 + $0x1a4] sm:$0xff]
        %v1354 = vld [vmem:[%s5 + $0x1ac] sm:$0xf]
        %v1355 = vld [vmem:[%s5 + $0x1b0] sm:$0xff]
        %v1356 = vld [vmem:[%s5 + $0x1b8] sm:$0xf]
        %v1357 = vld [vmem:[%s5 + $0x1bc] sm:$0xff]
        %v1358 = vld [vmem:[%s5 + $0x1c4] sm:$0xf]
        %v1359 = vld [vmem:[%s5 + $0x1c8] sm:$0xff]
        %v1360 = vld [vmem:[%s5 + $0x1d0] sm:$0xf]
        %v1361 = vld [vmem:[%s5 + $0x1d4] sm:$0xff]
        %v1362 = vld [vmem:[%s5 + $0x1dc] sm:$0xf]
        %v1363 = vld [vmem:[%s5 + $0x1e0] sm:$0xff]
        %v1364 = vld [vmem:[%s5 + $0x1e8] sm:$0xf]
        %v1365 = vld [vmem:[%s5 + $0x1ec] sm:$0xff]
        %v1366 = vld [vmem:[%s5 + $0x1f4] sm:$0xf]
        %v1367 = vld [vmem:[%s5 + $0x1f8] sm:$0xff]
        %v1368 = vld [vmem:[%s5 + $0x200] sm:$0xf]
        %v1369 = vld [vmem:[%s5 + $0x204] sm:$0xff]
        %v1370 = vld [vmem:[%s5 + $0x20c] sm:$0xf]
        %v1371 = vld [vmem:[%s5 + $0x210] sm:$0xff]
        %v1372 = vld [vmem:[%s5 + $0x218] sm:$0xf]
        %v1373 = vld [vmem:[%s5 + $0x21c] sm:$0xff]
        %v1374 = vld [vmem:[%s5 + $0x224] sm:$0xf]
        %v1375 = vld [vmem:[%s5 + $0x228] sm:$0xff]
        %v1376 = vld [vmem:[%s5 + $0x230] sm:$0xf]
        %v1377 = vld [vmem:[%s5 + $0x234] sm:$0xff]
        %v1378 = vld [vmem:[%s5 + $0x23c] sm:$0xf]
        %v1379 = vld [vmem:[%s5 + $0x240] sm:$0xff]
        %v1380 = vld [vmem:[%s5 + $0x248] sm:$0xf]
        %v1381 = vld [vmem:[%s5 + $0x24c] sm:$0xff]
        %v1382 = vld [vmem:[%s5 + $0x254] sm:$0xf]
        %v1383 = vld [vmem:[%s5 + $0x258] sm:$0xff]
        %v1384 = vld [vmem:[%s5 + $0x260] sm:$0xf]
        %v1385 = vld [vmem:[%s5 + $0x264] sm:$0xff]
        %v1386 = vld [vmem:[%s5 + $0x26c] sm:$0xf]
        %v1387 = vld [vmem:[%s5 + $0x270] sm:$0xff]
        %v1388 = vld [vmem:[%s5 + $0x278] sm:$0xf]
        %v1389 = vld [vmem:[%s5 + $0x27c] sm:$0xff]
        %v1390 = vld [vmem:[%s5 + $0x284] sm:$0xf]
        %v1391 = vld [vmem:[%s5 + $0x288] sm:$0xff]
        %v1392 = vld [vmem:[%s5 + $0x290] sm:$0xf]
        %v1393 = vld [vmem:[%s5 + $0x294] sm:$0xff]
        %v1394 = vld [vmem:[%s5 + $0x29c] sm:$0xf]
        %v1395 = vld [vmem:[%s5 + $0x2a0] sm:$0xff]
        %v1396 = vld [vmem:[%s5 + $0x2a8] sm:$0xf]
        %v1397 = vld [vmem:[%s5 + $0x2ac] sm:$0xff]
        %v1398 = vld [vmem:[%s5 + $0x2b4] sm:$0xf]
        %v1399 = vld [vmem:[%s5 + $0x2b8] sm:$0xff]
        %v1400 = vld [vmem:[%s5 + $0x2c0] sm:$0xf]
        %v1401 = vld [vmem:[%s5 + $0x2c4] sm:$0xff]
        %v1402 = vld [vmem:[%s5 + $0x2cc] sm:$0xf]
        %v1403 = vld [vmem:[%s5 + $0x2d0] sm:$0xff]
        %v1404 = vld [vmem:[%s5 + $0x2d8] sm:$0xf]
        %v1405 = vld [vmem:[%s5 + $0x2dc] sm:$0xff]
        %v1406 = vld [vmem:[%s5 + $0x2e4] sm:$0xf]
        %v1407 = vld [vmem:[%s5 + $0x2e8] sm:$0xff]
        %v1408 = vld [vmem:[%s5 + $0x2f0] sm:$0xf]
        %v1409 = vld [vmem:[%s5 + $0x2f4] sm:$0xff]
        %v1410 = vld [vmem:[%s5 + $0x2fc] sm:$0xf]
        %v1411 = vld [vmem:[%s5 + $0x300] sm:$0xff]
        %v1412 = vld [vmem:[%s5 + $0x308] sm:$0xf]
        %v1413 = vld [vmem:[%s5 + $0x30c] sm:$0xff]
        %v1414 = vld [vmem:[%s5 + $0x314] sm:$0xf]
        %v1415 = vld [vmem:[%s5 + $0x318] sm:$0xff]
        %v1416 = vld [vmem:[%s5 + $0x320] sm:$0xf]
        %v1417 = vld [vmem:[%s5 + $0x324] sm:$0xff]
        %v1418 = vld [vmem:[%s5 + $0x32c] sm:$0xf]
        %v1419 = vld [vmem:[%s5 + $0x330] sm:$0xff]
        %v1420 = vld [vmem:[%s5 + $0x338] sm:$0xf]
        %v1421 = vld [vmem:[%s5 + $0x33c] sm:$0xff]
        %v1422 = vld [vmem:[%s5 + $0x344] sm:$0xf]
        %v1423 = vld [vmem:[%s5 + $0x348] sm:$0xff]
        %v1424 = vld [vmem:[%s5 + $0x350] sm:$0xf]
        %v1425 = vld [vmem:[%s5 + $0x354] sm:$0xff]
        %v1426 = vld [vmem:[%s5 + $0x35c] sm:$0xf]
        %v1427 = vld [vmem:[%s5 + $0x360] sm:$0xff]
        %v1428 = vld [vmem:[%s5 + $0x368] sm:$0xf]
        %v1429 = vld [vmem:[%s5 + $0x36c] sm:$0xff]
        %v1430 = vld [vmem:[%s5 + $0x374] sm:$0xf]
        %v1431 = vld [vmem:[%s5 + $0x378] sm:$0xff]
        %v1432 = vld [vmem:[%s5 + $0x380] sm:$0xf]
        %v1433 = vld [vmem:[%s5 + $0x384] sm:$0xff]
        %v1434 = vld [vmem:[%s5 + $0x38c] sm:$0xf]
        %v1435 = vld [vmem:[%s5 + $0x390] sm:$0xff]
        %v1436 = vld [vmem:[%s5 + $0x398] sm:$0xf]
        %v1437 = vld [vmem:[%s5 + $0x39c] sm:$0xff]
        %v1438 = vld [vmem:[%s5 + $0x3a4] sm:$0xf]
        %v1439 = vld [vmem:[%s5 + $0x3a8] sm:$0xff]
        %v1440 = vld [vmem:[%s5 + $0x3b0] sm:$0xf]
        %v1441 = vld [vmem:[%s5 + $0x3b4] sm:$0xff]
        %v1442 = vld [vmem:[%s5 + $0x3bc] sm:$0xf]
        %v1443 = vld [vmem:[%s5 + $0x3c0] sm:$0xff]
        %v1444 = vld [vmem:[%s5 + $0x3c8] sm:$0xf]
        %v1445 = vld [vmem:[%s5 + $0x3cc] sm:$0xff]
        %v1446 = vld [vmem:[%s5 + $0x3d4] sm:$0xf]
        %v1447 = vld [vmem:[%s5 + $0x3d8] sm:$0xff]
        %v1448 = vld [vmem:[%s5 + $0x3e0] sm:$0xf]
        %v1449 = vld [vmem:[%s5 + $0x3e4] sm:$0xff]
        %v1450 = vld [vmem:[%s5 + $0x3ec] sm:$0xf]
        %v1451 = vld [vmem:[%s5 + $0x3f0] sm:$0xff]
        %v1452 = vld [vmem:[%s5 + $0x3f8] sm:$0xf]
        %v1453 = vld [vmem:[%s5 + $0x3fc] sm:$0xff]
        %v1454 = vld [vmem:[%s5 + $0x404] sm:$0xf]
        %v1455 = vld [vmem:[%s5 + $0x408] sm:$0xff]
        %v1456 = vld [vmem:[%s5 + $0x410] sm:$0xf]
        %v1457 = vld [vmem:[%s5 + $0x414] sm:$0xff]
        %v1458 = vld [vmem:[%s5 + $0x41c] sm:$0xf]
        %v1459 = vld [vmem:[%s5 + $0x420] sm:$0xff]
        %v1460 = vld [vmem:[%s5 + $0x428] sm:$0xf]
        %v1461 = vld [vmem:[%s5 + $0x42c] sm:$0xff]
        %v1462 = vld [vmem:[%s5 + $0x434] sm:$0xf]
        %v1463 = vld [vmem:[%s5 + $0x438] sm:$0xff]
        %v1464 = vld [vmem:[%s5 + $0x440] sm:$0xf]
        %v1465 = vld [vmem:[%s5 + $0x444] sm:$0xff]
        %v1466 = vld [vmem:[%s5 + $0x44c] sm:$0xf]
        %v1467 = vld [vmem:[%s5 + $0x450] sm:$0xff]
        %v1468 = vld [vmem:[%s5 + $0x458] sm:$0xf]
        %v1469 = vld [vmem:[%s5 + $0x45c] sm:$0xff]
        %v1470 = vld [vmem:[%s5 + $0x464] sm:$0xf]
        %v1471 = vld [vmem:[%s5 + $0x468] sm:$0xff]
        %v1472 = vld [vmem:[%s5 + $0x470] sm:$0xf]
        %v1473 = vld [vmem:[%s5 + $0x474] sm:$0xff]
        %v1474 = vld [vmem:[%s5 + $0x47c] sm:$0xf]
        %v1475 = vld [vmem:[%s5 + $0x480] sm:$0xff]
        %v1476 = vld [vmem:[%s5 + $0x488] sm:$0xf]
        %v1477 = vld [vmem:[%s5 + $0x48c] sm:$0xff]
        %v1478 = vld [vmem:[%s5 + $0x494] sm:$0xf]
        %v1479 = vld [vmem:[%s5 + $0x498] sm:$0xff]
        %v1480 = vld [vmem:[%s5 + $0x4a0] sm:$0xf]
        %v1481 = vld [vmem:[%s5 + $0x4a4] sm:$0xff]
        %v1482 = vld [vmem:[%s5 + $0x4ac] sm:$0xf]
        %v1483 = vld [vmem:[%s5 + $0x4b0] sm:$0xff]
        %v1484 = vld [vmem:[%s5 + $0x4b8] sm:$0xf]
        %v1485 = vld [vmem:[%s5 + $0x4bc] sm:$0xff]
        %v1486 = vld [vmem:[%s5 + $0x4c4] sm:$0xf]
        %v1487 = vld [vmem:[%s5 + $0x4c8] sm:$0xff]
        %v1488 = vld [vmem:[%s5 + $0x4d0] sm:$0xf]
        %v1489 = vld [vmem:[%s5 + $0x4d4] sm:$0xff]
        %v1490 = vld [vmem:[%s5 + $0x4dc] sm:$0xf]
        %v1491 = vld [vmem:[%s5 + $0x4e0] sm:$0xff]
        %v1492 = vld [vmem:[%s5 + $0x4e8] sm:$0xf]
        %v1493 = vld [vmem:[%s5 + $0x4ec] sm:$0xff]
        %v1494 = vld [vmem:[%s5 + $0x4f4] sm:$0xf]
        %v1495 = vld [vmem:[%s5 + $0x4f8] sm:$0xff]
        %v1496 = vld [vmem:[%s5 + $0x500] sm:$0xf]
        %v1497 = vld [vmem:[%s5 + $0x504] sm:$0xff]
        %v1498 = vld [vmem:[%s5 + $0x50c] sm:$0xf]
        %v1499 = vld [vmem:[%s5 + $0x510] sm:$0xff]
        %v1500 = vld [vmem:[%s5 + $0x518] sm:$0xf]
        %v1501 = vld [vmem:[%s5 + $0x51c] sm:$0xff]
        %v1502 = vld [vmem:[%s5 + $0x524] sm:$0xf]
        %v1503 = vld [vmem:[%s5 + $0x528] sm:$0xff]
        %v1504 = vld [vmem:[%s5 + $0x530] sm:$0xf]
        %v1505 = vld [vmem:[%s5 + $0x534] sm:$0xff]
        %v1506 = vld [vmem:[%s5 + $0x53c] sm:$0xf]
        %v1507 = vld [vmem:[%s5 + $0x540] sm:$0xff]
        %v1508 = vld [vmem:[%s5 + $0x548] sm:$0xf]
        %v1509 = vld [vmem:[%s5 + $0x54c] sm:$0xff]
        %v1510 = vld [vmem:[%s5 + $0x554] sm:$0xf]
        %v1511 = vld [vmem:[%s5 + $0x558] sm:$0xff]
        %v1512 = vld [vmem:[%s5 + $0x560] sm:$0xf]
        %v1513 = vld [vmem:[%s5 + $0x564] sm:$0xff]
        %v1514 = vld [vmem:[%s5 + $0x56c] sm:$0xf]
        %v1515 = vld [vmem:[%s5 + $0x570] sm:$0xff]
        %v1516 = vld [vmem:[%s5 + $0x578] sm:$0xf]
        %v1517 = vld [vmem:[%s5 + $0x57c] sm:$0xff]
        %v1518 = vld [vmem:[%s5 + $0x584] sm:$0xf]
        %v1519 = vld [vmem:[%s5 + $0x588] sm:$0xff]
        %v1520 = vld [vmem:[%s5 + $0x590] sm:$0xf]
        %v1521 = vld [vmem:[%s5 + $0x594] sm:$0xff]
        %v1522 = vld [vmem:[%s5 + $0x59c] sm:$0xf]
        %v1523 = vld [vmem:[%s5 + $0x5a0] sm:$0xff]
        %v1524 = vld [vmem:[%s5 + $0x5a8] sm:$0xf]
        %v1525 = vld [vmem:[%s5 + $0x5ac] sm:$0xff]
        %v1526 = vld [vmem:[%s5 + $0x5b4] sm:$0xf]
        %v1527 = vld [vmem:[%s5 + $0x5b8] sm:$0xff]
        %v1528 = vld [vmem:[%s5 + $0x5c0] sm:$0xf]
        %v1529 = vld [vmem:[%s5 + $0x5c4] sm:$0xff]
        %v1530 = vld [vmem:[%s5 + $0x5cc] sm:$0xf]
        %v1531 = vld [vmem:[%s5 + $0x5d0] sm:$0xff]
        %v1532 = vld [vmem:[%s5 + $0x5d8] sm:$0xf]
        %v1533 = vld [vmem:[%s5 + $0x5dc] sm:$0xff]
        %v1534 = vld [vmem:[%s5 + $0x5e4] sm:$0xf]
        %v1535 = vld [vmem:[%s5 + $0x5e8] sm:$0xff]
        %v1536 = vld [vmem:[%s5 + $0x5f0] sm:$0xf]
        %v1537 = vld [vmem:[%s5 + $0x5f4] sm:$0xff]
        %v1538 = vld [vmem:[%s5 + $0x5fc] sm:$0xf]
        %v1539 = vld [vmem:[%s5 + $0x600] sm:$0xff]
        %v1540 = vld [vmem:[%s5 + $0x608] sm:$0xf]
        %v1541 = vld [vmem:[%s5 + $0x60c] sm:$0xff]
        %v1542 = vld [vmem:[%s5 + $0x614] sm:$0xf]
        %v1543 = vld [vmem:[%s5 + $0x618] sm:$0xff]
        %v1544 = vld [vmem:[%s5 + $0x620] sm:$0xf]
        %v1545 = vld [vmem:[%s5 + $0x624] sm:$0xff]
        %v1546 = vld [vmem:[%s5 + $0x62c] sm:$0xf]
        %v1547 = vld [vmem:[%s5 + $0x630] sm:$0xff]
        %v1548 = vld [vmem:[%s5 + $0x638] sm:$0xf]
        %v1549 = vld [vmem:[%s5 + $0x63c] sm:$0xff]
        %v1550 = vld [vmem:[%s5 + $0x644] sm:$0xf]
        %v1551 = vld [vmem:[%s5 + $0x648] sm:$0xff]
        %v1552 = vld [vmem:[%s5 + $0x650] sm:$0xf]
        %v1553 = vld [vmem:[%s5 + $0x654] sm:$0xff]
        %v1554 = vld [vmem:[%s5 + $0x65c] sm:$0xf]
        %v1555 = vld [vmem:[%s5 + $0x660] sm:$0xff]
        %v1556 = vld [vmem:[%s5 + $0x668] sm:$0xf]
        %v1557 = vld [vmem:[%s5 + $0x66c] sm:$0xff]
        %v1558 = vld [vmem:[%s5 + $0x674] sm:$0xf]
        %v1559 = vld [vmem:[%s5 + $0x678] sm:$0xff]
        %v1560 = vld [vmem:[%s5 + $0x680] sm:$0xf]
        %v1561 = vld [vmem:[%s5 + $0x684] sm:$0xff]
        %v1562 = vld [vmem:[%s5 + $0x68c] sm:$0xf]
        %v1563 = vld [vmem:[%s5 + $0x690] sm:$0xff]
        %v1564 = vld [vmem:[%s5 + $0x698] sm:$0xf]
        %v1565 = vld [vmem:[%s5 + $0x69c] sm:$0xff]
        %v1566 = vld [vmem:[%s5 + $0x6a4] sm:$0xf]
        %v1567 = vld [vmem:[%s5 + $0x6a8] sm:$0xff]
        %v1568 = vld [vmem:[%s5 + $0x6b0] sm:$0xf]
        %v1569 = vld [vmem:[%s5 + $0x6b4] sm:$0xff]
        %v1570 = vld [vmem:[%s5 + $0x6bc] sm:$0xf]
        %v1571 = vld [vmem:[%s5 + $0x6c0] sm:$0xff]
        %v1572 = vld [vmem:[%s5 + $0x6c8] sm:$0xf]
        %v1573 = vld [vmem:[%s5 + $0x6cc] sm:$0xff]
        %v1574 = vld [vmem:[%s5 + $0x6d4] sm:$0xf]
        %v1575 = vld [vmem:[%s5 + $0x6d8] sm:$0xff]
        %v1576 = vld [vmem:[%s5 + $0x6e0] sm:$0xf]
        %v1577 = vld [vmem:[%s5 + $0x6e4] sm:$0xff]
        %v1578 = vld [vmem:[%s5 + $0x6ec] sm:$0xf]
        %v1579 = vld [vmem:[%s5 + $0x6f0] sm:$0xff]
        %v1580 = vld [vmem:[%s5 + $0x6f8] sm:$0xf]
        %v1581 = vld [vmem:[%s5 + $0x6fc] sm:$0xff]
        %v1582 = vld [vmem:[%s5 + $0x704] sm:$0xf]
        %v1583 = vld [vmem:[%s5 + $0x708] sm:$0xff]
        %v1584 = vld [vmem:[%s5 + $0x710] sm:$0xf]
        %v1585 = vld [vmem:[%s5 + $0x714] sm:$0xff]
        %v1586 = vld [vmem:[%s5 + $0x71c] sm:$0xf]
        %v1587 = vld [vmem:[%s5 + $0x720] sm:$0xff]
        %v1588 = vld [vmem:[%s5 + $0x728] sm:$0xf]
        %v1589 = vld [vmem:[%s5 + $0x72c] sm:$0xff]
        %v1590 = vld [vmem:[%s5 + $0x734] sm:$0xf]
        %v1591 = vld [vmem:[%s5 + $0x738] sm:$0xff]
        %v1592 = vld [vmem:[%s5 + $0x740] sm:$0xf]
        %v1593 = vld [vmem:[%s5 + $0x744] sm:$0xff]
        %v1594 = vld [vmem:[%s5 + $0x74c] sm:$0xf]
        %v1595 = vld [vmem:[%s5 + $0x750] sm:$0xff]
        %v1596 = vld [vmem:[%s5 + $0x758] sm:$0xf]
        %v1597 = vld [vmem:[%s5 + $0x75c] sm:$0xff]
        %v1598 = vld [vmem:[%s5 + $0x764] sm:$0xf]
        %v1599 = vld [vmem:[%s5 + $0x768] sm:$0xff]
        %v1600 = vld [vmem:[%s5 + $0x770] sm:$0xf]
        %v1601 = vld [vmem:[%s5 + $0x774] sm:$0xff]
        %v1602 = vld [vmem:[%s5 + $0x77c] sm:$0xf]
        %v1603 = vld [vmem:[%s6] sm:$0x7]
        %v1924 = vunpack.c.l.b16 %v1283
        %v1925 = vunpack.c.h.b16 %v1283
        %v1926 = vunpack.c.l.b16 %v1284
        %v1927 = vunpack.c.l.b16 %v1285
        %v1928 = vunpack.c.h.b16 %v1285
        %v1929 = vunpack.c.l.b16 %v1286
        %v1930 = vunpack.c.l.b16 %v1287
        %v1931 = vunpack.c.h.b16 %v1287
        %v1932 = vunpack.c.l.b16 %v1288
        %v1933 = vunpack.c.l.b16 %v1289
        %v1934 = vunpack.c.h.b16 %v1289
        %v1935 = vunpack.c.l.b16 %v1290
        %v1936 = vunpack.c.l.b16 %v1291
        %v1937 = vunpack.c.h.b16 %v1291
        %v1938 = vunpack.c.l.b16 %v1292
        %v1939 = vunpack.c.l.b16 %v1293
        %v1940 = vunpack.c.h.b16 %v1293
        %v1941 = vunpack.c.l.b16 %v1294
        %v1942 = vunpack.c.l.b16 %v1295
        %v1943 = vunpack.c.h.b16 %v1295
        %v1944 = vunpack.c.l.b16 %v1296
        %v1945 = vunpack.c.l.b16 %v1297
        %v1946 = vunpack.c.h.b16 %v1297
        %v1947 = vunpack.c.l.b16 %v1298
        %v1948 = vunpack.c.l.b16 %v1299
        %v1949 = vunpack.c.h.b16 %v1299
        %v1950 = vunpack.c.l.b16 %v1300
        %v1951 = vunpack.c.l.b16 %v1301
        %v1952 = vunpack.c.h.b16 %v1301
        %v1953 = vunpack.c.l.b16 %v1302
        %v1954 = vunpack.c.l.b16 %v1303
        %v1955 = vunpack.c.h.b16 %v1303
        %v1956 = vunpack.c.l.b16 %v1304
        %v1957 = vunpack.c.l.b16 %v1305
        %v1958 = vunpack.c.h.b16 %v1305
        %v1959 = vunpack.c.l.b16 %v1306
        %v1960 = vunpack.c.l.b16 %v1307
        %v1961 = vunpack.c.h.b16 %v1307
        %v1962 = vunpack.c.l.b16 %v1308
        %v1963 = vunpack.c.l.b16 %v1309
        %v1964 = vunpack.c.h.b16 %v1309
        %v1965 = vunpack.c.l.b16 %v1310
        %v1966 = vunpack.c.l.b16 %v1311
        %v1967 = vunpack.c.h.b16 %v1311
        %v1968 = vunpack.c.l.b16 %v1312
        %v1969 = vunpack.c.l.b16 %v1313
        %v1970 = vunpack.c.h.b16 %v1313
        %v1971 = vunpack.c.l.b16 %v1314
        %v1972 = vunpack.c.l.b16 %v1315
        %v1973 = vunpack.c.h.b16 %v1315
        %v1974 = vunpack.c.l.b16 %v1316
        %v1975 = vunpack.c.l.b16 %v1317
        %v1976 = vunpack.c.h.b16 %v1317
        %v1977 = vunpack.c.l.b16 %v1318
        %v1978 = vunpack.c.l.b16 %v1319
        %v1979 = vunpack.c.h.b16 %v1319
        %v1980 = vunpack.c.l.b16 %v1320
        %v1981 = vunpack.c.l.b16 %v1321
        %v1982 = vunpack.c.h.b16 %v1321
        %v1983 = vunpack.c.l.b16 %v1322
        %v1984 = vunpack.c.l.b16 %v1323
        %v1985 = vunpack.c.h.b16 %v1323
        %v1986 = vunpack.c.l.b16 %v1324
        %v1987 = vunpack.c.l.b16 %v1325
        %v1988 = vunpack.c.h.b16 %v1325
        %v1989 = vunpack.c.l.b16 %v1326
        %v1990 = vunpack.c.l.b16 %v1327
        %v1991 = vunpack.c.h.b16 %v1327
        %v1992 = vunpack.c.l.b16 %v1328
        %v1993 = vunpack.c.l.b16 %v1329
        %v1994 = vunpack.c.h.b16 %v1329
        %v1995 = vunpack.c.l.b16 %v1330
        %v1996 = vunpack.c.l.b16 %v1331
        %v1997 = vunpack.c.h.b16 %v1331
        %v1998 = vunpack.c.l.b16 %v1332
        %v1999 = vunpack.c.l.b16 %v1333
        %v2000 = vunpack.c.h.b16 %v1333
        %v2001 = vunpack.c.l.b16 %v1334
        %v2002 = vunpack.c.l.b16 %v1335
        %v2003 = vunpack.c.h.b16 %v1335
        %v2004 = vunpack.c.l.b16 %v1336
        %v2005 = vunpack.c.l.b16 %v1337
        %v2006 = vunpack.c.h.b16 %v1337
        %v2007 = vunpack.c.l.b16 %v1338
        %v2008 = vunpack.c.l.b16 %v1339
        %v2009 = vunpack.c.h.b16 %v1339
        %v2010 = vunpack.c.l.b16 %v1340
        %v2011 = vunpack.c.l.b16 %v1341
        %v2012 = vunpack.c.h.b16 %v1341
        %v2013 = vunpack.c.l.b16 %v1342
        %v2014 = vunpack.c.l.b16 %v1343
        %v2015 = vunpack.c.h.b16 %v1343
        %v2016 = vunpack.c.l.b16 %v1344
        %v2017 = vunpack.c.l.b16 %v1345
        %v2018 = vunpack.c.h.b16 %v1345
        %v2019 = vunpack.c.l.b16 %v1346
        %v2020 = vunpack.c.l.b16 %v1347
        %v2021 = vunpack.c.h.b16 %v1347
        %v2022 = vunpack.c.l.b16 %v1348
        %v2023 = vunpack.c.l.b16 %v1349
        %v2024 = vunpack.c.h.b16 %v1349
        %v2025 = vunpack.c.l.b16 %v1350
        %v2026 = vunpack.c.l.b16 %v1351
        %v2027 = vunpack.c.h.b16 %v1351
        %v2028 = vunpack.c.l.b16 %v1352
        %v2029 = vunpack.c.l.b16 %v1353
        %v2030 = vunpack.c.h.b16 %v1353
        %v2031 = vunpack.c.l.b16 %v1354
        %v2032 = vunpack.c.l.b16 %v1355
        %v2033 = vunpack.c.h.b16 %v1355
        %v2034 = vunpack.c.l.b16 %v1356
        %v2035 = vunpack.c.l.b16 %v1357
        %v2036 = vunpack.c.h.b16 %v1357
        %v2037 = vunpack.c.l.b16 %v1358
        %v2038 = vunpack.c.l.b16 %v1359
        %v2039 = vunpack.c.h.b16 %v1359
        %v2040 = vunpack.c.l.b16 %v1360
        %v2041 = vunpack.c.l.b16 %v1361
        %v2042 = vunpack.c.h.b16 %v1361
        %v2043 = vunpack.c.l.b16 %v1362
        %v2044 = vunpack.c.l.b16 %v1363
        %v2045 = vunpack.c.h.b16 %v1363
        %v2046 = vunpack.c.l.b16 %v1364
        %v2047 = vunpack.c.l.b16 %v1365
        %v2048 = vunpack.c.h.b16 %v1365
        %v2049 = vunpack.c.l.b16 %v1366
        %v2050 = vunpack.c.l.b16 %v1367
        %v2051 = vunpack.c.h.b16 %v1367
        %v2052 = vunpack.c.l.b16 %v1368
        %v2053 = vunpack.c.l.b16 %v1369
        %v2054 = vunpack.c.h.b16 %v1369
        %v2055 = vunpack.c.l.b16 %v1370
        %v2056 = vunpack.c.l.b16 %v1371
        %v2057 = vunpack.c.h.b16 %v1371
        %v2058 = vunpack.c.l.b16 %v1372
        %v2059 = vunpack.c.l.b16 %v1373
        %v2060 = vunpack.c.h.b16 %v1373
        %v2061 = vunpack.c.l.b16 %v1374
        %v2062 = vunpack.c.l.b16 %v1375
        %v2063 = vunpack.c.h.b16 %v1375
        %v2064 = vunpack.c.l.b16 %v1376
        %v2065 = vunpack.c.l.b16 %v1377
        %v2066 = vunpack.c.h.b16 %v1377
        %v2067 = vunpack.c.l.b16 %v1378
        %v2068 = vunpack.c.l.b16 %v1379
        %v2069 = vunpack.c.h.b16 %v1379
        %v2070 = vunpack.c.l.b16 %v1380
        %v2071 = vunpack.c.l.b16 %v1381
        %v2072 = vunpack.c.h.b16 %v1381
        %v2073 = vunpack.c.l.b16 %v1382
        %v2074 = vunpack.c.l.b16 %v1383
        %v2075 = vunpack.c.h.b16 %v1383
        %v2076 = vunpack.c.l.b16 %v1384
        %v2077 = vunpack.c.l.b16 %v1385
        %v2078 = vunpack.c.h.b16 %v1385
        %v2079 = vunpack.c.l.b16 %v1386
        %v2080 = vunpack.c.l.b16 %v1387
        %v2081 = vunpack.c.h.b16 %v1387
        %v2082 = vunpack.c.l.b16 %v1388
        %v2083 = vunpack.c.l.b16 %v1389
        %v2084 = vunpack.c.h.b16 %v1389
        %v2085 = vunpack.c.l.b16 %v1390
        %v2086 = vunpack.c.l.b16 %v1391
        %v2087 = vunpack.c.h.b16 %v1391
        %v2088 = vunpack.c.l.b16 %v1392
        %v2089 = vunpack.c.l.b16 %v1393
        %v2090 = vunpack.c.h.b16 %v1393
        %v2091 = vunpack.c.l.b16 %v1394
        %v2092 = vunpack.c.l.b16 %v1395
        %v2093 = vunpack.c.h.b16 %v1395
        %v2094 = vunpack.c.l.b16 %v1396
        %v2095 = vunpack.c.l.b16 %v1397
        %v2096 = vunpack.c.h.b16 %v1397
        %v2097 = vunpack.c.l.b16 %v1398
        %v2098 = vunpack.c.l.b16 %v1399
        %v2099 = vunpack.c.h.b16 %v1399
        %v2100 = vunpack.c.l.b16 %v1400
        %v2101 = vunpack.c.l.b16 %v1401
        %v2102 = vunpack.c.h.b16 %v1401
        %v2103 = vunpack.c.l.b16 %v1402
        %v2104 = vunpack.c.l.b16 %v1403
        %v2105 = vunpack.c.h.b16 %v1403
        %v2106 = vunpack.c.l.b16 %v1404
        %v2107 = vunpack.c.l.b16 %v1405
        %v2108 = vunpack.c.h.b16 %v1405
        %v2109 = vunpack.c.l.b16 %v1406
        %v2110 = vunpack.c.l.b16 %v1407
        %v2111 = vunpack.c.h.b16 %v1407
        %v2112 = vunpack.c.l.b16 %v1408
        %v2113 = vunpack.c.l.b16 %v1409
        %v2114 = vunpack.c.h.b16 %v1409
        %v2115 = vunpack.c.l.b16 %v1410
        %v2116 = vunpack.c.l.b16 %v1411
        %v2117 = vunpack.c.h.b16 %v1411
        %v2118 = vunpack.c.l.b16 %v1412
        %v2119 = vunpack.c.l.b16 %v1413
        %v2120 = vunpack.c.h.b16 %v1413
        %v2121 = vunpack.c.l.b16 %v1414
        %v2122 = vunpack.c.l.b16 %v1415
        %v2123 = vunpack.c.h.b16 %v1415
        %v2124 = vunpack.c.l.b16 %v1416
        %v2125 = vunpack.c.l.b16 %v1417
        %v2126 = vunpack.c.h.b16 %v1417
        %v2127 = vunpack.c.l.b16 %v1418
        %v2128 = vunpack.c.l.b16 %v1419
        %v2129 = vunpack.c.h.b16 %v1419
        %v2130 = vunpack.c.l.b16 %v1420
        %v2131 = vunpack.c.l.b16 %v1421
        %v2132 = vunpack.c.h.b16 %v1421
        %v2133 = vunpack.c.l.b16 %v1422
        %v2134 = vunpack.c.l.b16 %v1423
        %v2135 = vunpack.c.h.b16 %v1423
        %v2136 = vunpack.c.l.b16 %v1424
        %v2137 = vunpack.c.l.b16 %v1425
        %v2138 = vunpack.c.h.b16 %v1425
        %v2139 = vunpack.c.l.b16 %v1426
        %v2140 = vunpack.c.l.b16 %v1427
        %v2141 = vunpack.c.h.b16 %v1427
        %v2142 = vunpack.c.l.b16 %v1428
        %v2143 = vunpack.c.l.b16 %v1429
        %v2144 = vunpack.c.h.b16 %v1429
        %v2145 = vunpack.c.l.b16 %v1430
        %v2146 = vunpack.c.l.b16 %v1431
        %v2147 = vunpack.c.h.b16 %v1431
        %v2148 = vunpack.c.l.b16 %v1432
        %v2149 = vunpack.c.l.b16 %v1433
        %v2150 = vunpack.c.h.b16 %v1433
        %v2151 = vunpack.c.l.b16 %v1434
        %v2152 = vunpack.c.l.b16 %v1435
        %v2153 = vunpack.c.h.b16 %v1435
        %v2154 = vunpack.c.l.b16 %v1436
        %v2155 = vunpack.c.l.b16 %v1437
        %v2156 = vunpack.c.h.b16 %v1437
        %v2157 = vunpack.c.l.b16 %v1438
        %v2158 = vunpack.c.l.b16 %v1439
        %v2159 = vunpack.c.h.b16 %v1439
        %v2160 = vunpack.c.l.b16 %v1440
        %v2161 = vunpack.c.l.b16 %v1441
        %v2162 = vunpack.c.h.b16 %v1441
        %v2163 = vunpack.c.l.b16 %v1442
        %v2164 = vunpack.c.l.b16 %v1443
        %v2165 = vunpack.c.h.b16 %v1443
        %v2166 = vunpack.c.l.b16 %v1444
        %v2167 = vunpack.c.l.b16 %v1445
        %v2168 = vunpack.c.h.b16 %v1445
        %v2169 = vunpack.c.l.b16 %v1446
        %v2170 = vunpack.c.l.b16 %v1447
        %v2171 = vunpack.c.h.b16 %v1447
        %v2172 = vunpack.c.l.b16 %v1448
        %v2173 = vunpack.c.l.b16 %v1449
        %v2174 = vunpack.c.h.b16 %v1449
        %v2175 = vunpack.c.l.b16 %v1450
        %v2176 = vunpack.c.l.b16 %v1451
        %v2177 = vunpack.c.h.b16 %v1451
        %v2178 = vunpack.c.l.b16 %v1452
        %v2179 = vunpack.c.l.b16 %v1453
        %v2180 = vunpack.c.h.b16 %v1453
        %v2181 = vunpack.c.l.b16 %v1454
        %v2182 = vunpack.c.l.b16 %v1455
        %v2183 = vunpack.c.h.b16 %v1455
        %v2184 = vunpack.c.l.b16 %v1456
        %v2185 = vunpack.c.l.b16 %v1457
        %v2186 = vunpack.c.h.b16 %v1457
        %v2187 = vunpack.c.l.b16 %v1458
        %v2188 = vunpack.c.l.b16 %v1459
        %v2189 = vunpack.c.h.b16 %v1459
        %v2190 = vunpack.c.l.b16 %v1460
        %v2191 = vunpack.c.l.b16 %v1461
        %v2192 = vunpack.c.h.b16 %v1461
        %v2193 = vunpack.c.l.b16 %v1462
        %v2194 = vunpack.c.l.b16 %v1463
        %v2195 = vunpack.c.h.b16 %v1463
        %v2196 = vunpack.c.l.b16 %v1464
        %v2197 = vunpack.c.l.b16 %v1465
        %v2198 = vunpack.c.h.b16 %v1465
        %v2199 = vunpack.c.l.b16 %v1466
        %v2200 = vunpack.c.l.b16 %v1467
        %v2201 = vunpack.c.h.b16 %v1467
        %v2202 = vunpack.c.l.b16 %v1468
        %v2203 = vunpack.c.l.b16 %v1469
        %v2204 = vunpack.c.h.b16 %v1469
        %v2205 = vunpack.c.l.b16 %v1470
        %v2206 = vunpack.c.l.b16 %v1471
        %v2207 = vunpack.c.h.b16 %v1471
        %v2208 = vunpack.c.l.b16 %v1472
        %v2209 = vunpack.c.l.b16 %v1473
        %v2210 = vunpack.c.h.b16 %v1473
        %v2211 = vunpack.c.l.b16 %v1474
        %v2212 = vunpack.c.l.b16 %v1475
        %v2213 = vunpack.c.h.b16 %v1475
        %v2214 = vunpack.c.l.b16 %v1476
        %v2215 = vunpack.c.l.b16 %v1477
        %v2216 = vunpack.c.h.b16 %v1477
        %v2217 = vunpack.c.l.b16 %v1478
        %v2218 = vunpack.c.l.b16 %v1479
        %v2219 = vunpack.c.h.b16 %v1479
        %v2220 = vunpack.c.l.b16 %v1480
        %v2221 = vunpack.c.l.b16 %v1481
        %v2222 = vunpack.c.h.b16 %v1481
        %v2223 = vunpack.c.l.b16 %v1482
        %v2224 = vunpack.c.l.b16 %v1483
        %v2225 = vunpack.c.h.b16 %v1483
        %v2226 = vunpack.c.l.b16 %v1484
        %v2227 = vunpack.c.l.b16 %v1485
        %v2228 = vunpack.c.h.b16 %v1485
        %v2229 = vunpack.c.l.b16 %v1486
        %v2230 = vunpack.c.l.b16 %v1487
        %v2231 = vunpack.c.h.b16 %v1487
        %v2232 = vunpack.c.l.b16 %v1488
        %v2233 = vunpack.c.l.b16 %v1489
        %v2234 = vunpack.c.h.b16 %v1489
        %v2235 = vunpack.c.l.b16 %v1490
        %v2236 = vunpack.c.l.b16 %v1491
        %v2237 = vunpack.c.h.b16 %v1491
        %v2238 = vunpack.c.l.b16 %v1492
        %v2239 = vunpack.c.l.b16 %v1493
        %v2240 = vunpack.c.h.b16 %v1493
        %v2241 = vunpack.c.l.b16 %v1494
        %v2242 = vunpack.c.l.b16 %v1495
        %v2243 = vunpack.c.h.b16 %v1495
        %v2244 = vunpack.c.l.b16 %v1496
        %v2245 = vunpack.c.l.b16 %v1497
        %v2246 = vunpack.c.h.b16 %v1497
        %v2247 = vunpack.c.l.b16 %v1498
        %v2248 = vunpack.c.l.b16 %v1499
        %v2249 = vunpack.c.h.b16 %v1499
        %v2250 = vunpack.c.l.b16 %v1500
        %v2251 = vunpack.c.l.b16 %v1501
        %v2252 = vunpack.c.h.b16 %v1501
        %v2253 = vunpack.c.l.b16 %v1502
        %v2254 = vunpack.c.l.b16 %v1503
        %v2255 = vunpack.c.h.b16 %v1503
        %v2256 = vunpack.c.l.b16 %v1504
        %v2257 = vunpack.c.l.b16 %v1505
        %v2258 = vunpack.c.h.b16 %v1505
        %v2259 = vunpack.c.l.b16 %v1506
        %v2260 = vunpack.c.l.b16 %v1507
        %v2261 = vunpack.c.h.b16 %v1507
        %v2262 = vunpack.c.l.b16 %v1508
        %v2263 = vunpack.c.l.b16 %v1509
        %v2264 = vunpack.c.h.b16 %v1509
        %v2265 = vunpack.c.l.b16 %v1510
        %v2266 = vunpack.c.l.b16 %v1511
        %v2267 = vunpack.c.h.b16 %v1511
        %v2268 = vunpack.c.l.b16 %v1512
        %v2269 = vunpack.c.l.b16 %v1513
        %v2270 = vunpack.c.h.b16 %v1513
        %v2271 = vunpack.c.l.b16 %v1514
        %v2272 = vunpack.c.l.b16 %v1515
        %v2273 = vunpack.c.h.b16 %v1515
        %v2274 = vunpack.c.l.b16 %v1516
        %v2275 = vunpack.c.l.b16 %v1517
        %v2276 = vunpack.c.h.b16 %v1517
        %v2277 = vunpack.c.l.b16 %v1518
        %v2278 = vunpack.c.l.b16 %v1519
        %v2279 = vunpack.c.h.b16 %v1519
        %v2280 = vunpack.c.l.b16 %v1520
        %v2281 = vunpack.c.l.b16 %v1521
        %v2282 = vunpack.c.h.b16 %v1521
        %v2283 = vunpack.c.l.b16 %v1522
        %v2284 = vunpack.c.l.b16 %v1523
        %v2285 = vunpack.c.h.b16 %v1523
        %v2286 = vunpack.c.l.b16 %v1524
        %v2287 = vunpack.c.l.b16 %v1525
        %v2288 = vunpack.c.h.b16 %v1525
        %v2289 = vunpack.c.l.b16 %v1526
        %v2290 = vunpack.c.l.b16 %v1527
        %v2291 = vunpack.c.h.b16 %v1527
        %v2292 = vunpack.c.l.b16 %v1528
        %v2293 = vunpack.c.l.b16 %v1529
        %v2294 = vunpack.c.h.b16 %v1529
        %v2295 = vunpack.c.l.b16 %v1530
        %v2296 = vunpack.c.l.b16 %v1531
        %v2297 = vunpack.c.h.b16 %v1531
        %v2298 = vunpack.c.l.b16 %v1532
        %v2299 = vunpack.c.l.b16 %v1533
        %v2300 = vunpack.c.h.b16 %v1533
        %v2301 = vunpack.c.l.b16 %v1534
        %v2302 = vunpack.c.l.b16 %v1535
        %v2303 = vunpack.c.h.b16 %v1535
        %v2304 = vunpack.c.l.b16 %v1536
        %v2305 = vunpack.c.l.b16 %v1537
        %v2306 = vunpack.c.h.b16 %v1537
        %v2307 = vunpack.c.l.b16 %v1538
        %v2308 = vunpack.c.l.b16 %v1539
        %v2309 = vunpack.c.h.b16 %v1539
        %v2310 = vunpack.c.l.b16 %v1540
        %v2311 = vunpack.c.l.b16 %v1541
        %v2312 = vunpack.c.h.b16 %v1541
        %v2313 = vunpack.c.l.b16 %v1542
        %v2314 = vunpack.c.l.b16 %v1543
        %v2315 = vunpack.c.h.b16 %v1543
        %v2316 = vunpack.c.l.b16 %v1544
        %v2317 = vunpack.c.l.b16 %v1545
        %v2318 = vunpack.c.h.b16 %v1545
        %v2319 = vunpack.c.l.b16 %v1546
        %v2320 = vunpack.c.l.b16 %v1547
        %v2321 = vunpack.c.h.b16 %v1547
        %v2322 = vunpack.c.l.b16 %v1548
        %v2323 = vunpack.c.l.b16 %v1549
        %v2324 = vunpack.c.h.b16 %v1549
        %v2325 = vunpack.c.l.b16 %v1550
        %v2326 = vunpack.c.l.b16 %v1551
        %v2327 = vunpack.c.h.b16 %v1551
        %v2328 = vunpack.c.l.b16 %v1552
        %v2329 = vunpack.c.l.b16 %v1553
        %v2330 = vunpack.c.h.b16 %v1553
        %v2331 = vunpack.c.l.b16 %v1554
        %v2332 = vunpack.c.l.b16 %v1555
        %v2333 = vunpack.c.h.b16 %v1555
        %v2334 = vunpack.c.l.b16 %v1556
        %v2335 = vunpack.c.l.b16 %v1557
        %v2336 = vunpack.c.h.b16 %v1557
        %v2337 = vunpack.c.l.b16 %v1558
        %v2338 = vunpack.c.l.b16 %v1559
        %v2339 = vunpack.c.h.b16 %v1559
        %v2340 = vunpack.c.l.b16 %v1560
        %v2341 = vunpack.c.l.b16 %v1561
        %v2342 = vunpack.c.h.b16 %v1561
        %v2343 = vunpack.c.l.b16 %v1562
        %v2344 = vunpack.c.l.b16 %v1563
        %v2345 = vunpack.c.h.b16 %v1563
        %v2346 = vunpack.c.l.b16 %v1564
        %v2347 = vunpack.c.l.b16 %v1565
        %v2348 = vunpack.c.h.b16 %v1565
        %v2349 = vunpack.c.l.b16 %v1566
        %v2350 = vunpack.c.l.b16 %v1567
        %v2351 = vunpack.c.h.b16 %v1567
        %v2352 = vunpack.c.l.b16 %v1568
        %v2353 = vunpack.c.l.b16 %v1569
        %v2354 = vunpack.c.h.b16 %v1569
        %v2355 = vunpack.c.l.b16 %v1570
        %v2356 = vunpack.c.l.b16 %v1571
        %v2357 = vunpack.c.h.b16 %v1571
        %v2358 = vunpack.c.l.b16 %v1572
        %v2359 = vunpack.c.l.b16 %v1573
        %v2360 = vunpack.c.h.b16 %v1573
        %v2361 = vunpack.c.l.b16 %v1574
        %v2362 = vunpack.c.l.b16 %v1575
        %v2363 = vunpack.c.h.b16 %v1575
        %v2364 = vunpack.c.l.b16 %v1576
        %v2365 = vunpack.c.l.b16 %v1577
        %v2366 = vunpack.c.h.b16 %v1577
        %v2367 = vunpack.c.l.b16 %v1578
        %v2368 = vunpack.c.l.b16 %v1579
        %v2369 = vunpack.c.h.b16 %v1579
        %v2370 = vunpack.c.l.b16 %v1580
        %v2371 = vunpack.c.l.b16 %v1581
        %v2372 = vunpack.c.h.b16 %v1581
        %v2373 = vunpack.c.l.b16 %v1582
        %v2374 = vunpack.c.l.b16 %v1583
        %v2375 = vunpack.c.h.b16 %v1583
        %v2376 = vunpack.c.l.b16 %v1584
        %v2377 = vunpack.c.l.b16 %v1585
        %v2378 = vunpack.c.h.b16 %v1585
        %v2379 = vunpack.c.l.b16 %v1586
        %v2380 = vunpack.c.l.b16 %v1587
        %v2381 = vunpack.c.h.b16 %v1587
        %v2382 = vunpack.c.l.b16 %v1588
        %v2383 = vunpack.c.l.b16 %v1589
        %v2384 = vunpack.c.h.b16 %v1589
        %v2385 = vunpack.c.l.b16 %v1590
        %v2386 = vunpack.c.l.b16 %v1591
        %v2387 = vunpack.c.h.b16 %v1591
        %v2388 = vunpack.c.l.b16 %v1592
        %v2389 = vunpack.c.l.b16 %v1593
        %v2390 = vunpack.c.h.b16 %v1593
        %v2391 = vunpack.c.l.b16 %v1594
        %v2392 = vunpack.c.l.b16 %v1595
        %v2393 = vunpack.c.h.b16 %v1595
        %v2394 = vunpack.c.l.b16 %v1596
        %v2395 = vunpack.c.l.b16 %v1597
        %v2396 = vunpack.c.h.b16 %v1597
        %v2397 = vunpack.c.l.b16 %v1598
        %v2398 = vunpack.c.l.b16 %v1599
        %v2399 = vunpack.c.h.b16 %v1599
        %v2400 = vunpack.c.l.b16 %v1600
        %v2401 = vunpack.c.l.b16 %v1601
        %v2402 = vunpack.c.h.b16 %v1601
        %v2403 = vunpack.c.l.b16 %v1602
        %v2404 = vpack.c.b16 %v1927, %v1924
        %v2405 = vpack.c.b16 %v1928, %v1925
        %v2406 = vpack.c.b16 %v1929, %v1926
        %v2407 = vpack.c.b16 %v1933, %v1930
        %v2408 = vpack.c.b16 %v1934, %v1931
        %v2409 = vpack.c.b16 %v1935, %v1932
        %v2410 = vpack.c.b16 %v1939, %v1936
        %v2411 = vpack.c.b16 %v1940, %v1937
        %v2412 = vpack.c.b16 %v1941, %v1938
        %v2413 = vpack.c.b16 %v1945, %v1942
        %v2414 = vpack.c.b16 %v1946, %v1943
        %v2415 = vpack.c.b16 %v1947, %v1944
        %v2416 = vpack.c.b16 %v1951, %v1948
        %v2417 = vpack.c.b16 %v1952, %v1949
        %v2418 = vpack.c.b16 %v1953, %v1950
        %v2419 = vpack.c.b16 %v1957, %v1954
        %v2420 = vpack.c.b16 %v1958, %v1955
        %v2421 = vpack.c.b16 %v1959, %v1956
        %v2422 = vpack.c.b16 %v1963, %v1960
        %v2423 = vpack.c.b16 %v1964, %v1961
        %v2424 = vpack.c.b16 %v1965, %v1962
        %v2425 = vpack.c.b16 %v1969, %v1966
        %v2426 = vpack.c.b16 %v1970, %v1967
        %v2427 = vpack.c.b16 %v1971, %v1968
        %v2428 = vpack.c.b16 %v1975, %v1972
        %v2429 = vpack.c.b16 %v1976, %v1973
        %v2430 = vpack.c.b16 %v1977, %v1974
        %v2431 = vpack.c.b16 %v1981, %v1978
        %v2432 = vpack.c.b16 %v1982, %v1979
        %v2433 = vpack.c.b16 %v1983, %v1980
        %v2434 = vpack.c.b16 %v1987, %v1984
        %v2435 = vpack.c.b16 %v1988, %v1985
        %v2436 = vpack.c.b16 %v1989, %v1986
        %v2437 = vpack.c.b16 %v1993, %v1990
        %v2438 = vpack.c.b16 %v1994, %v1991
        %v2439 = vpack.c.b16 %v1995, %v1992
        %v2440 = vpack.c.b16 %v1999, %v1996
        %v2441 = vpack.c.b16 %v2000, %v1997
        %v2442 = vpack.c.b16 %v2001, %v1998
        %v2443 = vpack.c.b16 %v2005, %v2002
        %v2444 = vpack.c.b16 %v2006, %v2003
        %v2445 = vpack.c.b16 %v2007, %v2004
        %v2446 = vpack.c.b16 %v2011, %v2008
        %v2447 = vpack.c.b16 %v2012, %v2009
        %v2448 = vpack.c.b16 %v2013, %v2010
        %v2449 = vpack.c.b16 %v2017, %v2014
        %v2450 = vpack.c.b16 %v2018, %v2015
        %v2451 = vpack.c.b16 %v2019, %v2016
        %v2452 = vpack.c.b16 %v2023, %v2020
        %v2453 = vpack.c.b16 %v2024, %v2021
        %v2454 = vpack.c.b16 %v2025, %v2022
        %v2455 = vpack.c.b16 %v2029, %v2026
        %v2456 = vpack.c.b16 %v2030, %v2027
        %v2457 = vpack.c.b16 %v2031, %v2028
        %v2458 = vpack.c.b16 %v2035, %v2032
        %v2459 = vpack.c.b16 %v2036, %v2033
        %v2460 = vpack.c.b16 %v2037, %v2034
        %v2461 = vpack.c.b16 %v2041, %v2038
        %v2462 = vpack.c.b16 %v2042, %v2039
        %v2463 = vpack.c.b16 %v2043, %v2040
        %v2464 = vpack.c.b16 %v2047, %v2044
        %v2465 = vpack.c.b16 %v2048, %v2045
        %v2466 = vpack.c.b16 %v2049, %v2046
        %v2467 = vpack.c.b16 %v2053, %v2050
        %v2468 = vpack.c.b16 %v2054, %v2051
        %v2469 = vpack.c.b16 %v2055, %v2052
        %v2470 = vpack.c.b16 %v2059, %v2056
        %v2471 = vpack.c.b16 %v2060, %v2057
        %v2472 = vpack.c.b16 %v2061, %v2058
        %v2473 = vpack.c.b16 %v2065, %v2062
        %v2474 = vpack.c.b16 %v2066, %v2063
        %v2475 = vpack.c.b16 %v2067, %v2064
        %v2476 = vpack.c.b16 %v2071, %v2068
        %v2477 = vpack.c.b16 %v2072, %v2069
        %v2478 = vpack.c.b16 %v2073, %v2070
        %v2479 = vpack.c.b16 %v2077, %v2074
        %v2480 = vpack.c.b16 %v2078, %v2075
        %v2481 = vpack.c.b16 %v2079, %v2076
        %v2482 = vpack.c.b16 %v2083, %v2080
        %v2483 = vpack.c.b16 %v2084, %v2081
        %v2484 = vpack.c.b16 %v2085, %v2082
        %v2485 = vpack.c.b16 %v2089, %v2086
        %v2486 = vpack.c.b16 %v2090, %v2087
        %v2487 = vpack.c.b16 %v2091, %v2088
        %v2488 = vpack.c.b16 %v2095, %v2092
        %v2489 = vpack.c.b16 %v2096, %v2093
        %v2490 = vpack.c.b16 %v2097, %v2094
        %v2491 = vpack.c.b16 %v2101, %v2098
        %v2492 = vpack.c.b16 %v2102, %v2099
        %v2493 = vpack.c.b16 %v2103, %v2100
        %v2494 = vpack.c.b16 %v2107, %v2104
        %v2495 = vpack.c.b16 %v2108, %v2105
        %v2496 = vpack.c.b16 %v2109, %v2106
        %v2497 = vpack.c.b16 %v2113, %v2110
        %v2498 = vpack.c.b16 %v2114, %v2111
        %v2499 = vpack.c.b16 %v2115, %v2112
        %v2500 = vpack.c.b16 %v2119, %v2116
        %v2501 = vpack.c.b16 %v2120, %v2117
        %v2502 = vpack.c.b16 %v2121, %v2118
        %v2503 = vpack.c.b16 %v2125, %v2122
        %v2504 = vpack.c.b16 %v2126, %v2123
        %v2505 = vpack.c.b16 %v2127, %v2124
        %v2506 = vpack.c.b16 %v2131, %v2128
        %v2507 = vpack.c.b16 %v2132, %v2129
        %v2508 = vpack.c.b16 %v2133, %v2130
        %v2509 = vpack.c.b16 %v2137, %v2134
        %v2510 = vpack.c.b16 %v2138, %v2135
        %v2511 = vpack.c.b16 %v2139, %v2136
        %v2512 = vpack.c.b16 %v2143, %v2140
        %v2513 = vpack.c.b16 %v2144, %v2141
        %v2514 = vpack.c.b16 %v2145, %v2142
        %v2515 = vpack.c.b16 %v2149, %v2146
        %v2516 = vpack.c.b16 %v2150, %v2147
        %v2517 = vpack.c.b16 %v2151, %v2148
        %v2518 = vpack.c.b16 %v2155, %v2152
        %v2519 = vpack.c.b16 %v2156, %v2153
        %v2520 = vpack.c.b16 %v2157, %v2154
        %v2521 = vpack.c.b16 %v2161, %v2158
        %v2522 = vpack.c.b16 %v2162, %v2159
        %v2523 = vpack.c.b16 %v2163, %v2160
        %v2524 = vpack.c.b16 %v2167, %v2164
        %v2525 = vpack.c.b16 %v2168, %v2165
        %v2526 = vpack.c.b16 %v2169, %v2166
        %v2527 = vpack.c.b16 %v2173, %v2170
        %v2528 = vpack.c.b16 %v2174, %v2171
        %v2529 = vpack.c.b16 %v2175, %v2172
        %v2530 = vpack.c.b16 %v2179, %v2176
        %v2531 = vpack.c.b16 %v2180, %v2177
        %v2532 = vpack.c.b16 %v2181, %v2178
        %v2533 = vpack.c.b16 %v2185, %v2182
        %v2534 = vpack.c.b16 %v2186, %v2183
        %v2535 = vpack.c.b16 %v2187, %v2184
        %v2536 = vpack.c.b16 %v2191, %v2188
        %v2537 = vpack.c.b16 %v2192, %v2189
        %v2538 = vpack.c.b16 %v2193, %v2190
        %v2539 = vpack.c.b16 %v2197, %v2194
        %v2540 = vpack.c.b16 %v2198, %v2195
        %v2541 = vpack.c.b16 %v2199, %v2196
        %v2542 = vpack.c.b16 %v2203, %v2200
        %v2543 = vpack.c.b16 %v2204, %v2201
        %v2544 = vpack.c.b16 %v2205, %v2202
        %v2545 = vpack.c.b16 %v2209, %v2206
        %v2546 = vpack.c.b16 %v2210, %v2207
        %v2547 = vpack.c.b16 %v2211, %v2208
        %v2548 = vpack.c.b16 %v2215, %v2212
        %v2549 = vpack.c.b16 %v2216, %v2213
        %v2550 = vpack.c.b16 %v2217, %v2214
        %v2551 = vpack.c.b16 %v2221, %v2218
        %v2552 = vpack.c.b16 %v2222, %v2219
        %v2553 = vpack.c.b16 %v2223, %v2220
        %v2554 = vpack.c.b16 %v2227, %v2224
        %v2555 = vpack.c.b16 %v2228, %v2225
        %v2556 = vpack.c.b16 %v2229, %v2226
        %v2557 = vpack.c.b16 %v2233, %v2230
        %v2558 = vpack.c.b16 %v2234, %v2231
        %v2559 = vpack.c.b16 %v2235, %v2232
        %v2560 = vpack.c.b16 %v2239, %v2236
        %v2561 = vpack.c.b16 %v2240, %v2237
        %v2562 = vpack.c.b16 %v2241, %v2238
        %v2563 = vpack.c.b16 %v2245, %v2242
        %v2564 = vpack.c.b16 %v2246, %v2243
        %v2565 = vpack.c.b16 %v2247, %v2244
        %v2566 = vpack.c.b16 %v2251, %v2248
        %v2567 = vpack.c.b16 %v2252, %v2249
        %v2568 = vpack.c.b16 %v2253, %v2250
        %v2569 = vpack.c.b16 %v2257, %v2254
        %v2570 = vpack.c.b16 %v2258, %v2255
        %v2571 = vpack.c.b16 %v2259, %v2256
        %v2572 = vpack.c.b16 %v2263, %v2260
        %v2573 = vpack.c.b16 %v2264, %v2261
        %v2574 = vpack.c.b16 %v2265, %v2262
        %v2575 = vpack.c.b16 %v2269, %v2266
        %v2576 = vpack.c.b16 %v2270, %v2267
        %v2577 = vpack.c.b16 %v2271, %v2268
        %v2578 = vpack.c.b16 %v2275, %v2272
        %v2579 = vpack.c.b16 %v2276, %v2273
        %v2580 = vpack.c.b16 %v2277, %v2274
        %v2581 = vpack.c.b16 %v2281, %v2278
        %v2582 = vpack.c.b16 %v2282, %v2279
        %v2583 = vpack.c.b16 %v2283, %v2280
        %v2584 = vpack.c.b16 %v2287, %v2284
        %v2585 = vpack.c.b16 %v2288, %v2285
        %v2586 = vpack.c.b16 %v2289, %v2286
        %v2587 = vpack.c.b16 %v2293, %v2290
        %v2588 = vpack.c.b16 %v2294, %v2291
        %v2589 = vpack.c.b16 %v2295, %v2292
        %v2590 = vpack.c.b16 %v2299, %v2296
        %v2591 = vpack.c.b16 %v2300, %v2297
        %v2592 = vpack.c.b16 %v2301, %v2298
        %v2593 = vpack.c.b16 %v2305, %v2302
        %v2594 = vpack.c.b16 %v2306, %v2303
        %v2595 = vpack.c.b16 %v2307, %v2304
        %v2596 = vpack.c.b16 %v2311, %v2308
        %v2597 = vpack.c.b16 %v2312, %v2309
        %v2598 = vpack.c.b16 %v2313, %v2310
        %v2599 = vpack.c.b16 %v2317, %v2314
        %v2600 = vpack.c.b16 %v2318, %v2315
        %v2601 = vpack.c.b16 %v2319, %v2316
        %v2602 = vpack.c.b16 %v2323, %v2320
        %v2603 = vpack.c.b16 %v2324, %v2321
        %v2604 = vpack.c.b16 %v2325, %v2322
        %v2605 = vpack.c.b16 %v2329, %v2326
        %v2606 = vpack.c.b16 %v2330, %v2327
        %v2607 = vpack.c.b16 %v2331, %v2328
        %v2608 = vpack.c.b16 %v2335, %v2332
        %v2609 = vpack.c.b16 %v2336, %v2333
        %v2610 = vpack.c.b16 %v2337, %v2334
        %v2611 = vpack.c.b16 %v2341, %v2338
        %v2612 = vpack.c.b16 %v2342, %v2339
        %v2613 = vpack.c.b16 %v2343, %v2340
        %v2614 = vpack.c.b16 %v2347, %v2344
        %v2615 = vpack.c.b16 %v2348, %v2345
        %v2616 = vpack.c.b16 %v2349, %v2346
        %v2617 = vpack.c.b16 %v2353, %v2350
        %v2618 = vpack.c.b16 %v2354, %v2351
        %v2619 = vpack.c.b16 %v2355, %v2352
        %v2620 = vpack.c.b16 %v2359, %v2356
        %v2621 = vpack.c.b16 %v2360, %v2357
        %v2622 = vpack.c.b16 %v2361, %v2358
        %v2623 = vpack.c.b16 %v2365, %v2362
        %v2624 = vpack.c.b16 %v2366, %v2363
        %v2625 = vpack.c.b16 %v2367, %v2364
        %v2626 = vpack.c.b16 %v2371, %v2368
        %v2627 = vpack.c.b16 %v2372, %v2369
        %v2628 = vpack.c.b16 %v2373, %v2370
        %v2629 = vpack.c.b16 %v2377, %v2374
        %v2630 = vpack.c.b16 %v2378, %v2375
        %v2631 = vpack.c.b16 %v2379, %v2376
        %v2632 = vpack.c.b16 %v2383, %v2380
        %v2633 = vpack.c.b16 %v2384, %v2381
        %v2634 = vpack.c.b16 %v2385, %v2382
        %v2635 = vpack.c.b16 %v2389, %v2386
        %v2636 = vpack.c.b16 %v2390, %v2387
        %v2637 = vpack.c.b16 %v2391, %v2388
        %v2638 = vpack.c.b16 %v2395, %v2392
        %v2639 = vpack.c.b16 %v2396, %v2393
        %v2640 = vpack.c.b16 %v2397, %v2394
        %v2641 = vpack.c.b16 %v2401, %v2398
        %v2642 = vpack.c.b16 %v2402, %v2399
        %v2643 = vpack.c.b16 %v2403, %v2400
        %v2885 = vperm.slane %v1603, 0
        %v2886 = vperm.slane %v1603, 1
        %v2887 = vperm.slane %v1603, 2
        %2891 = vmatpush.bf16.msra.mxu0 %v2425
        %2892 = vmatpush.bf16.msra.mxu0 %v2422
        %2893 = vmatpush.bf16.msra.mxu0 %v2419
        %2894 = vmatpush.bf16.msra.mxu0 %v2416
        %2895 = vmatpush.bf16.msra.mxu0 %v2413
        %2896 = vmatpush.bf16.msra.mxu0 %v2410
        %2897 = vmatpush.bf16.msra.mxu0 %v2407
        %2898 = vmatpush.bf16.msra.mxu0 %v2404
        %2899 = vmatmul.bf16.gmra.mxu0 %v1273
        %v2900 = vpop.f32.mrf.mxu0
        %v2901 = vadd.f32 %v2885, %v2900
        %v2902 = vpop.f32.mrf.mxu0
        %2903 = vdwg.mxu0
        %2904 = vmatpush.bf16.msra.mxu0 %v2449
        %2905 = vmatpush.bf16.msra.mxu0 %v2446
        %2906 = vmatpush.bf16.msra.mxu0 %v2443
        %2907 = vmatpush.bf16.msra.mxu0 %v2440
        %2908 = vmatpush.bf16.msra.mxu0 %v2437
        %2909 = vmatpush.bf16.msra.mxu0 %v2434
        %2910 = vmatpush.bf16.msra.mxu0 %v2431
        %2911 = vmatpush.bf16.msra.mxu0 %v2428
        %2912 = vmatmul.bf16.gmra.mxu0 %v1274
        %v2913 = vpop.f32.mrf.mxu0
        %v2914 = vadd.f32 %v2901, %v2913
        %v2915 = vpop.f32.mrf.mxu0
        %2916 = vdwg.mxu0
        %2917 = vmatpush.bf16.msra.mxu0 %v2473
        %2918 = vmatpush.bf16.msra.mxu0 %v2470
        %2919 = vmatpush.bf16.msra.mxu0 %v2467
        %2920 = vmatpush.bf16.msra.mxu0 %v2464
        %2921 = vmatpush.bf16.msra.mxu0 %v2461
        %2922 = vmatpush.bf16.msra.mxu0 %v2458
        %2923 = vmatpush.bf16.msra.mxu0 %v2455
        %2924 = vmatpush.bf16.msra.mxu0 %v2452
        %2925 = vmatmul.bf16.gmra.mxu0 %v1275
        %v2926 = vpop.f32.mrf.mxu0
        %v2927 = vadd.f32 %v2914, %v2926
        %v2928 = vpop.f32.mrf.mxu0
        %2929 = vdwg.mxu0
        %2930 = vmatpush.bf16.msra.mxu0 %v2497
        %2931 = vmatpush.bf16.msra.mxu0 %v2494
        %2932 = vmatpush.bf16.msra.mxu0 %v2491
        %2933 = vmatpush.bf16.msra.mxu0 %v2488
        %2934 = vmatpush.bf16.msra.mxu0 %v2485
        %2935 = vmatpush.bf16.msra.mxu0 %v2482
        %2936 = vmatpush.bf16.msra.mxu0 %v2479
        %2937 = vmatpush.bf16.msra.mxu0 %v2476
        %2938 = vmatmul.bf16.gmra.mxu0 %v1276
        %v2939 = vpop.f32.mrf.mxu0
        %v2940 = vadd.f32 %v2927, %v2939
        %v2941 = vpop.f32.mrf.mxu0
        %2942 = vdwg.mxu0
        %2943 = vmatpush.bf16.msra.mxu0 %v2521
        %2944 = vmatpush.bf16.msra.mxu0 %v2518
        %2945 = vmatpush.bf16.msra.mxu0 %v2515
        %2946 = vmatpush.bf16.msra.mxu0 %v2512
        %2947 = vmatpush.bf16.msra.mxu0 %v2509
        %2948 = vmatpush.bf16.msra.mxu0 %v2506
        %2949 = vmatpush.bf16.msra.mxu0 %v2503
        %2950 = vmatpush.bf16.msra.mxu0 %v2500
        %2951 = vmatmul.bf16.gmra.mxu0 %v1277
        %v2952 = vpop.f32.mrf.mxu0
        %v2953 = vadd.f32 %v2940, %v2952
        %v2954 = vpop.f32.mrf.mxu0
        %2955 = vdwg.mxu0
        %2956 = vmatpush.bf16.msra.mxu0 %v2545
        %2957 = vmatpush.bf16.msra.mxu0 %v2542
        %2958 = vmatpush.bf16.msra.mxu0 %v2539
        %2959 = vmatpush.bf16.msra.mxu0 %v2536
        %2960 = vmatpush.bf16.msra.mxu0 %v2533
        %2961 = vmatpush.bf16.msra.mxu0 %v2530
        %2962 = vmatpush.bf16.msra.mxu0 %v2527
        %2963 = vmatpush.bf16.msra.mxu0 %v2524
        %2964 = vmatmul.bf16.gmra.mxu0 %v1278
        %v2965 = vpop.f32.mrf.mxu0
        %v2966 = vadd.f32 %v2953, %v2965
        %v2967 = vpop.f32.mrf.mxu0
        %2968 = vdwg.mxu0
        %2969 = vmatpush.bf16.msra.mxu0 %v2569
        %2970 = vmatpush.bf16.msra.mxu0 %v2566
        %2971 = vmatpush.bf16.msra.mxu0 %v2563
        %2972 = vmatpush.bf16.msra.mxu0 %v2560
        %2973 = vmatpush.bf16.msra.mxu0 %v2557
        %2974 = vmatpush.bf16.msra.mxu0 %v2554
        %2975 = vmatpush.bf16.msra.mxu0 %v2551
        %2976 = vmatpush.bf16.msra.mxu0 %v2548
        %2977 = vmatmul.bf16.gmra.mxu0 %v1279
        %v2978 = vpop.f32.mrf.mxu0
        %v2979 = vadd.f32 %v2966, %v2978
        %v2980 = vpop.f32.mrf.mxu0
        %2981 = vdwg.mxu0
        %2982 = vmatpush.bf16.msra.mxu0 %v2593
        %2983 = vmatpush.bf16.msra.mxu0 %v2590
        %2984 = vmatpush.bf16.msra.mxu0 %v2587
        %2985 = vmatpush.bf16.msra.mxu0 %v2584
        %2986 = vmatpush.bf16.msra.mxu0 %v2581
        %2987 = vmatpush.bf16.msra.mxu0 %v2578
        %2988 = vmatpush.bf16.msra.mxu0 %v2575
        %2989 = vmatpush.bf16.msra.mxu0 %v2572
        %2990 = vmatmul.bf16.gmra.mxu0 %v1280
        %v2991 = vpop.f32.mrf.mxu0
        %v2992 = vadd.f32 %v2979, %v2991
        %v2993 = vpop.f32.mrf.mxu0
        %2994 = vdwg.mxu0
        %2995 = vmatpush.bf16.msra.mxu0 %v2617
        %2996 = vmatpush.bf16.msra.mxu0 %v2614
        %2997 = vmatpush.bf16.msra.mxu0 %v2611
        %2998 = vmatpush.bf16.msra.mxu0 %v2608
        %2999 = vmatpush.bf16.msra.mxu0 %v2605
        %3000 = vmatpush.bf16.msra.mxu0 %v2602
        %3001 = vmatpush.bf16.msra.mxu0 %v2599
        %3002 = vmatpush.bf16.msra.mxu0 %v2596
        %3003 = vmatmul.bf16.gmra.mxu0 %v1281
        %v3004 = vpop.f32.mrf.mxu0
        %v3005 = vadd.f32 %v2992, %v3004
        %v3006 = vpop.f32.mrf.mxu0
        %3007 = vdwg.mxu0
        %3008 = vmatpush.bf16.msra.mxu0 %v2641
        %3009 = vmatpush.bf16.msra.mxu0 %v2638
        %3010 = vmatpush.bf16.msra.mxu0 %v2635
        %3011 = vmatpush.bf16.msra.mxu0 %v2632
        %3012 = vmatpush.bf16.msra.mxu0 %v2629
        %3013 = vmatpush.bf16.msra.mxu0 %v2626
        %3014 = vmatpush.bf16.msra.mxu0 %v2623
        %3015 = vmatpush.bf16.msra.mxu0 %v2620
        %3016 = vmatmul.bf16.gmra.mxu0 %v1282
        %v3017 = vpop.f32.mrf.mxu0
        %v3018 = vadd.f32 %v3005, %v3017
        %v3019 = vpop.f32.mrf.mxu0
        %3020 = vdwg.mxu0
        %3021 = vmatpush.bf16.msra.mxu0 %v2426
        %3022 = vmatpush.bf16.msra.mxu0 %v2423
        %3023 = vmatpush.bf16.msra.mxu0 %v2420
        %3024 = vmatpush.bf16.msra.mxu0 %v2417
        %3025 = vmatpush.bf16.msra.mxu0 %v2414
        %3026 = vmatpush.bf16.msra.mxu0 %v2411
        %3027 = vmatpush.bf16.msra.mxu0 %v2408
        %3028 = vmatpush.bf16.msra.mxu0 %v2405
        %3029 = vmatmul.bf16.gmra.mxu0 %v1273
        %v3030 = vpop.f32.mrf.mxu0
        %v3031 = vadd.f32 %v2886, %v3030
        %v3032 = vpop.f32.mrf.mxu0
        %3033 = vdwg.mxu0
        %3034 = vmatpush.bf16.msra.mxu0 %v2450
        %3035 = vmatpush.bf16.msra.mxu0 %v2447
        %3036 = vmatpush.bf16.msra.mxu0 %v2444
        %3037 = vmatpush.bf16.msra.mxu0 %v2441
        %3038 = vmatpush.bf16.msra.mxu0 %v2438
        %3039 = vmatpush.bf16.msra.mxu0 %v2435
        %3040 = vmatpush.bf16.msra.mxu0 %v2432
        %3041 = vmatpush.bf16.msra.mxu0 %v2429
        %3042 = vmatmul.bf16.gmra.mxu0 %v1274
        %v3043 = vpop.f32.mrf.mxu0
        %v3044 = vadd.f32 %v3031, %v3043
        %v3045 = vpop.f32.mrf.mxu0
        %3046 = vdwg.mxu0
        %3047 = vmatpush.bf16.msra.mxu0 %v2474
        %3048 = vmatpush.bf16.msra.mxu0 %v2471
        %3049 = vmatpush.bf16.msra.mxu0 %v2468
        %3050 = vmatpush.bf16.msra.mxu0 %v2465
        %3051 = vmatpush.bf16.msra.mxu0 %v2462
        %3052 = vmatpush.bf16.msra.mxu0 %v2459
        %3053 = vmatpush.bf16.msra.mxu0 %v2456
        %3054 = vmatpush.bf16.msra.mxu0 %v2453
        %3055 = vmatmul.bf16.gmra.mxu0 %v1275
        %v3056 = vpop.f32.mrf.mxu0
        %v3057 = vadd.f32 %v3044, %v3056
        %v3058 = vpop.f32.mrf.mxu0
        %3059 = vdwg.mxu0
        %3060 = vmatpush.bf16.msra.mxu0 %v2498
        %3061 = vmatpush.bf16.msra.mxu0 %v2495
        %3062 = vmatpush.bf16.msra.mxu0 %v2492
        %3063 = vmatpush.bf16.msra.mxu0 %v2489
        %3064 = vmatpush.bf16.msra.mxu0 %v2486
        %3065 = vmatpush.bf16.msra.mxu0 %v2483
        %3066 = vmatpush.bf16.msra.mxu0 %v2480
        %3067 = vmatpush.bf16.msra.mxu0 %v2477
        %3068 = vmatmul.bf16.gmra.mxu0 %v1276
        %v3069 = vpop.f32.mrf.mxu0
        %v3070 = vadd.f32 %v3057, %v3069
        %v3071 = vpop.f32.mrf.mxu0
        %3072 = vdwg.mxu0
        %3073 = vmatpush.bf16.msra.mxu0 %v2522
        %3074 = vmatpush.bf16.msra.mxu0 %v2519
        %3075 = vmatpush.bf16.msra.mxu0 %v2516
        %3076 = vmatpush.bf16.msra.mxu0 %v2513
        %3077 = vmatpush.bf16.msra.mxu0 %v2510
        %3078 = vmatpush.bf16.msra.mxu0 %v2507
        %3079 = vmatpush.bf16.msra.mxu0 %v2504
        %3080 = vmatpush.bf16.msra.mxu0 %v2501
        %3081 = vmatmul.bf16.gmra.mxu0 %v1277
        %v3082 = vpop.f32.mrf.mxu0
        %v3083 = vadd.f32 %v3070, %v3082
        %v3084 = vpop.f32.mrf.mxu0
        %3085 = vdwg.mxu0
        %3086 = vmatpush.bf16.msra.mxu0 %v2546
        %3087 = vmatpush.bf16.msra.mxu0 %v2543
        %3088 = vmatpush.bf16.msra.mxu0 %v2540
        %3089 = vmatpush.bf16.msra.mxu0 %v2537
        %3090 = vmatpush.bf16.msra.mxu0 %v2534
        %3091 = vmatpush.bf16.msra.mxu0 %v2531
        %3092 = vmatpush.bf16.msra.mxu0 %v2528
        %3093 = vmatpush.bf16.msra.mxu0 %v2525
        %3094 = vmatmul.bf16.gmra.mxu0 %v1278
        %v3095 = vpop.f32.mrf.mxu0
        %v3096 = vadd.f32 %v3083, %v3095
        %v3097 = vpop.f32.mrf.mxu0
        %3098 = vdwg.mxu0
        %3099 = vmatpush.bf16.msra.mxu0 %v2570
        %3100 = vmatpush.bf16.msra.mxu0 %v2567
        %3101 = vmatpush.bf16.msra.mxu0 %v2564
        %3102 = vmatpush.bf16.msra.mxu0 %v2561
        %3103 = vmatpush.bf16.msra.mxu0 %v2558
        %3104 = vmatpush.bf16.msra.mxu0 %v2555
        %3105 = vmatpush.bf16.msra.mxu0 %v2552
        %3106 = vmatpush.bf16.msra.mxu0 %v2549
        %3107 = vmatmul.bf16.gmra.mxu0 %v1279
        %v3108 = vpop.f32.mrf.mxu0
        %v3109 = vadd.f32 %v3096, %v3108
        %v3110 = vpop.f32.mrf.mxu0
        %3111 = vdwg.mxu0
        %3112 = vmatpush.bf16.msra.mxu0 %v2594
        %3113 = vmatpush.bf16.msra.mxu0 %v2591
        %3114 = vmatpush.bf16.msra.mxu0 %v2588
        %3115 = vmatpush.bf16.msra.mxu0 %v2585
        %3116 = vmatpush.bf16.msra.mxu0 %v2582
        %3117 = vmatpush.bf16.msra.mxu0 %v2579
        %3118 = vmatpush.bf16.msra.mxu0 %v2576
        %3119 = vmatpush.bf16.msra.mxu0 %v2573
        %3120 = vmatmul.bf16.gmra.mxu0 %v1280
        %v3121 = vpop.f32.mrf.mxu0
        %v3122 = vadd.f32 %v3109, %v3121
        %v3123 = vpop.f32.mrf.mxu0
        %3124 = vdwg.mxu0
        %3125 = vmatpush.bf16.msra.mxu0 %v2618
        %3126 = vmatpush.bf16.msra.mxu0 %v2615
        %3127 = vmatpush.bf16.msra.mxu0 %v2612
        %3128 = vmatpush.bf16.msra.mxu0 %v2609
        %3129 = vmatpush.bf16.msra.mxu0 %v2606
        %3130 = vmatpush.bf16.msra.mxu0 %v2603
        %3131 = vmatpush.bf16.msra.mxu0 %v2600
        %3132 = vmatpush.bf16.msra.mxu0 %v2597
        %3133 = vmatmul.bf16.gmra.mxu0 %v1281
        %v3134 = vpop.f32.mrf.mxu0
        %v3135 = vadd.f32 %v3122, %v3134
        %v3136 = vpop.f32.mrf.mxu0
        %3137 = vdwg.mxu0
        %3138 = vmatpush.bf16.msra.mxu0 %v2642
        %3139 = vmatpush.bf16.msra.mxu0 %v2639
        %3140 = vmatpush.bf16.msra.mxu0 %v2636
        %3141 = vmatpush.bf16.msra.mxu0 %v2633
        %3142 = vmatpush.bf16.msra.mxu0 %v2630
        %3143 = vmatpush.bf16.msra.mxu0 %v2627
        %3144 = vmatpush.bf16.msra.mxu0 %v2624
        %3145 = vmatpush.bf16.msra.mxu0 %v2621
        %3146 = vmatmul.bf16.gmra.mxu0 %v1282
        %v3147 = vpop.f32.mrf.mxu0
        %v3148 = vadd.f32 %v3135, %v3147
        %v3149 = vpop.f32.mrf.mxu0
        %3150 = vdwg.mxu0
        %3151 = vmatpush.bf16.msra.mxu0 %v2427
        %3152 = vmatpush.bf16.msra.mxu0 %v2424
        %3153 = vmatpush.bf16.msra.mxu0 %v2421
        %3154 = vmatpush.bf16.msra.mxu0 %v2418
        %3155 = vmatpush.bf16.msra.mxu0 %v2415
        %3156 = vmatpush.bf16.msra.mxu0 %v2412
        %3157 = vmatpush.bf16.msra.mxu0 %v2409
        %3158 = vmatpush.bf16.msra.mxu0 %v2406
        %3159 = vmatmul.bf16.gmra.mxu0 %v1273
        %v3160 = vpop.f32.mrf.mxu0
        %v3161 = vadd.f32 %v2887, %v3160
        %v3162 = vpop.f32.mrf.mxu0
        %3163 = vdwg.mxu0
        %3164 = vmatpush.bf16.msra.mxu0 %v2451
        %3165 = vmatpush.bf16.msra.mxu0 %v2448
        %3166 = vmatpush.bf16.msra.mxu0 %v2445
        %3167 = vmatpush.bf16.msra.mxu0 %v2442
        %3168 = vmatpush.bf16.msra.mxu0 %v2439
        %3169 = vmatpush.bf16.msra.mxu0 %v2436
        %3170 = vmatpush.bf16.msra.mxu0 %v2433
        %3171 = vmatpush.bf16.msra.mxu0 %v2430
        %3172 = vmatmul.bf16.gmra.mxu0 %v1274
        %v3173 = vpop.f32.mrf.mxu0
        %v3174 = vadd.f32 %v3161, %v3173
        %v3175 = vpop.f32.mrf.mxu0
        %3176 = vdwg.mxu0
        %3177 = vmatpush.bf16.msra.mxu0 %v2475
        %3178 = vmatpush.bf16.msra.mxu0 %v2472
        %3179 = vmatpush.bf16.msra.mxu0 %v2469
        %3180 = vmatpush.bf16.msra.mxu0 %v2466
        %3181 = vmatpush.bf16.msra.mxu0 %v2463
        %3182 = vmatpush.bf16.msra.mxu0 %v2460
        %3183 = vmatpush.bf16.msra.mxu0 %v2457
        %3184 = vmatpush.bf16.msra.mxu0 %v2454
        %3185 = vmatmul.bf16.gmra.mxu0 %v1275
        %v3186 = vpop.f32.mrf.mxu0
        %v3187 = vadd.f32 %v3174, %v3186
        %v3188 = vpop.f32.mrf.mxu0
        %3189 = vdwg.mxu0
        %3190 = vmatpush.bf16.msra.mxu0 %v2499
        %3191 = vmatpush.bf16.msra.mxu0 %v2496
        %3192 = vmatpush.bf16.msra.mxu0 %v2493
        %3193 = vmatpush.bf16.msra.mxu0 %v2490
        %3194 = vmatpush.bf16.msra.mxu0 %v2487
        %3195 = vmatpush.bf16.msra.mxu0 %v2484
        %3196 = vmatpush.bf16.msra.mxu0 %v2481
        %3197 = vmatpush.bf16.msra.mxu0 %v2478
        %3198 = vmatmul.bf16.gmra.mxu0 %v1276
        %v3199 = vpop.f32.mrf.mxu0
        %v3200 = vadd.f32 %v3187, %v3199
        %v3201 = vpop.f32.mrf.mxu0
        %3202 = vdwg.mxu0
        %3203 = vmatpush.bf16.msra.mxu0 %v2523
        %3204 = vmatpush.bf16.msra.mxu0 %v2520
        %3205 = vmatpush.bf16.msra.mxu0 %v2517
        %3206 = vmatpush.bf16.msra.mxu0 %v2514
        %3207 = vmatpush.bf16.msra.mxu0 %v2511
        %3208 = vmatpush.bf16.msra.mxu0 %v2508
        %3209 = vmatpush.bf16.msra.mxu0 %v2505
        %3210 = vmatpush.bf16.msra.mxu0 %v2502
        %3211 = vmatmul.bf16.gmra.mxu0 %v1277
        %v3212 = vpop.f32.mrf.mxu0
        %v3213 = vadd.f32 %v3200, %v3212
        %v3214 = vpop.f32.mrf.mxu0
        %3215 = vdwg.mxu0
        %3216 = vmatpush.bf16.msra.mxu0 %v2547
        %3217 = vmatpush.bf16.msra.mxu0 %v2544
        %3218 = vmatpush.bf16.msra.mxu0 %v2541
        %3219 = vmatpush.bf16.msra.mxu0 %v2538
        %3220 = vmatpush.bf16.msra.mxu0 %v2535
        %3221 = vmatpush.bf16.msra.mxu0 %v2532
        %3222 = vmatpush.bf16.msra.mxu0 %v2529
        %3223 = vmatpush.bf16.msra.mxu0 %v2526
        %3224 = vmatmul.bf16.gmra.mxu0 %v1278
        %v3225 = vpop.f32.mrf.mxu0
        %v3226 = vadd.f32 %v3213, %v3225
        %v3227 = vpop.f32.mrf.mxu0
        %3228 = vdwg.mxu0
        %3229 = vmatpush.bf16.msra.mxu0 %v2571
        %3230 = vmatpush.bf16.msra.mxu0 %v2568
        %3231 = vmatpush.bf16.msra.mxu0 %v2565
        %3232 = vmatpush.bf16.msra.mxu0 %v2562
        %3233 = vmatpush.bf16.msra.mxu0 %v2559
        %3234 = vmatpush.bf16.msra.mxu0 %v2556
        %3235 = vmatpush.bf16.msra.mxu0 %v2553
        %3236 = vmatpush.bf16.msra.mxu0 %v2550
        %3237 = vmatmul.bf16.gmra.mxu0 %v1279
        %v3238 = vpop.f32.mrf.mxu0
        %v3239 = vadd.f32 %v3226, %v3238
        %v3240 = vpop.f32.mrf.mxu0
        %3241 = vdwg.mxu0
        %3242 = vmatpush.bf16.msra.mxu0 %v2595
        %3243 = vmatpush.bf16.msra.mxu0 %v2592
        %3244 = vmatpush.bf16.msra.mxu0 %v2589
        %3245 = vmatpush.bf16.msra.mxu0 %v2586
        %3246 = vmatpush.bf16.msra.mxu0 %v2583
        %3247 = vmatpush.bf16.msra.mxu0 %v2580
        %3248 = vmatpush.bf16.msra.mxu0 %v2577
        %3249 = vmatpush.bf16.msra.mxu0 %v2574
        %3250 = vmatmul.bf16.gmra.mxu0 %v1280
        %v3251 = vpop.f32.mrf.mxu0
        %v3252 = vadd.f32 %v3239, %v3251
        %v3253 = vpop.f32.mrf.mxu0
        %3254 = vdwg.mxu0
        %3255 = vmatpush.bf16.msra.mxu0 %v2619
        %3256 = vmatpush.bf16.msra.mxu0 %v2616
        %3257 = vmatpush.bf16.msra.mxu0 %v2613
        %3258 = vmatpush.bf16.msra.mxu0 %v2610
        %3259 = vmatpush.bf16.msra.mxu0 %v2607
        %3260 = vmatpush.bf16.msra.mxu0 %v2604
        %3261 = vmatpush.bf16.msra.mxu0 %v2601
        %3262 = vmatpush.bf16.msra.mxu0 %v2598
        %3263 = vmatmul.bf16.gmra.mxu0 %v1281
        %v3264 = vpop.f32.mrf.mxu0
        %v3265 = vadd.f32 %v3252, %v3264
        %v3266 = vpop.f32.mrf.mxu0
        %3267 = vdwg.mxu0
        %3268 = vmatpush.bf16.msra.mxu0 %v2643
        %3269 = vmatpush.bf16.msra.mxu0 %v2640
        %3270 = vmatpush.bf16.msra.mxu0 %v2637
        %3271 = vmatpush.bf16.msra.mxu0 %v2634
        %3272 = vmatpush.bf16.msra.mxu0 %v2631
        %3273 = vmatpush.bf16.msra.mxu0 %v2628
        %3274 = vmatpush.bf16.msra.mxu0 %v2625
        %3275 = vmatpush.bf16.msra.mxu0 %v2622
        %3276 = vmatmul.bf16.gmra.mxu0 %v1282
        %v3277 = vpop.f32.mrf.mxu0
        %v3278 = vadd.f32 %v3265, %v3277
        %v3279 = vpop.f32.mrf.mxu0
        %3280 = vdwg.mxu0
        %v3281 = vmax.f32 %v3018, 0.0
        %v3282 = vmax.f32 %v3148, 0.0
        %v3283 = vmax.f32 %v3278, 0.0
        %v3284 = vpack.c.bf16 %v3281, %v3281
        %v3285 = vpack.c.bf16 %v3282, %v3282
        %v3286 = vpack.c.bf16 %v3283, %v3283
        %v3287 = vld [vmem:[%s7] sm:$0xff]
        %v3288 = vld [vmem:[%s7 + $0x8] sm:$0xff]
        %v3289 = vld [vmem:[%s7 + $0x10] sm:$0xff]
        %v3290 = vld [vmem:[%s7 + $0x18] sm:$0xff]
        %v3291 = vld [vmem:[%s7 + $0x20] sm:$0xff]
        %v3292 = vld [vmem:[%s7 + $0x28] sm:$0xff]
        %v3293 = vld [vmem:[%s7 + $0x30] sm:$0xff]
        %v3294 = vld [vmem:[%s7 + $0x38] sm:$0xff]
        %v3295 = vld [vmem:[%s7 + $0x40] sm:$0xff]
        %v3296 = vld [vmem:[%s7 + $0x48] sm:$0xff]
        %v3297 = vld [vmem:[%s7 + $0x50] sm:$0xff]
        %v3298 = vld [vmem:[%s7 + $0x58] sm:$0xff]
        %v3299 = vld [vmem:[%s7 + $0x60] sm:$0xff]
        %v3300 = vld [vmem:[%s7 + $0x68] sm:$0xff]
        %v3301 = vld [vmem:[%s7 + $0x70] sm:$0xff]
        %v3302 = vld [vmem:[%s7 + $0x78] sm:$0xff]
        %v3303 = vld [vmem:[%s7 + $0x80] sm:$0xff]
        %v3304 = vld [vmem:[%s7 + $0x88] sm:$0xff]
        %v3305 = vld [vmem:[%s7 + $0x90] sm:$0xff]
        %v3306 = vld [vmem:[%s7 + $0x98] sm:$0xff]
        %v3307 = vld [vmem:[%s7 + $0xa0] sm:$0xff]
        %v3308 = vld [vmem:[%s7 + $0xa8] sm:$0xff]
        %v3309 = vld [vmem:[%s7 + $0xb0] sm:$0xff]
        %v3310 = vld [vmem:[%s7 + $0xb8] sm:$0xff]
        %v3311 = vld [vmem:[%s7 + $0xc0] sm:$0xff]
        %v3312 = vld [vmem:[%s7 + $0xc8] sm:$0xff]
        %v3313 = vld [vmem:[%s7 + $0xd0] sm:$0xff]
        %v3314 = vld [vmem:[%s7 + $0xd8] sm:$0xff]
        %v3315 = vld [vmem:[%s7 + $0xe0] sm:$0xff]
        %v3316 = vld [vmem:[%s7 + $0xe8] sm:$0xff]
        %v3317 = vld [vmem:[%s7 + $0xf0] sm:$0xff]
        %v3318 = vld [vmem:[%s7 + $0xf8] sm:$0xff]
        %v3319 = vld [vmem:[%s7 + $0x100] sm:$0xff]
        %v3320 = vld [vmem:[%s7 + $0x108] sm:$0xff]
        %v3321 = vld [vmem:[%s7 + $0x110] sm:$0xff]
        %v3322 = vld [vmem:[%s7 + $0x118] sm:$0xff]
        %v3323 = vld [vmem:[%s7 + $0x120] sm:$0xff]
        %v3324 = vld [vmem:[%s7 + $0x128] sm:$0xff]
        %v3325 = vld [vmem:[%s7 + $0x130] sm:$0xff]
        %v3326 = vld [vmem:[%s7 + $0x138] sm:$0xff]
        %v3327 = vld [vmem:[%s7 + $0x140] sm:$0xff]
        %v3328 = vld [vmem:[%s7 + $0x148] sm:$0xff]
        %v3329 = vld [vmem:[%s7 + $0x150] sm:$0xff]
        %v3330 = vld [vmem:[%s7 + $0x158] sm:$0xff]
        %v3331 = vld [vmem:[%s7 + $0x160] sm:$0xff]
        %v3332 = vld [vmem:[%s7 + $0x168] sm:$0xff]
        %v3333 = vld [vmem:[%s7 + $0x170] sm:$0xff]
        %v3334 = vld [vmem:[%s7 + $0x178] sm:$0xff]
        %v3335 = vld [vmem:[%s8] sm:$0x3]
        %v3384 = vunpack.c.l.b16 %v3287
        %v3385 = vunpack.c.h.b16 %v3287
        %v3386 = vunpack.c.l.b16 %v3288
        %v3387 = vunpack.c.h.b16 %v3288
        %v3388 = vunpack.c.l.b16 %v3289
        %v3389 = vunpack.c.h.b16 %v3289
        %v3390 = vunpack.c.l.b16 %v3290
        %v3391 = vunpack.c.h.b16 %v3290
        %v3392 = vunpack.c.l.b16 %v3291
        %v3393 = vunpack.c.h.b16 %v3291
        %v3394 = vunpack.c.l.b16 %v3292
        %v3395 = vunpack.c.h.b16 %v3292
        %v3396 = vunpack.c.l.b16 %v3293
        %v3397 = vunpack.c.h.b16 %v3293
        %v3398 = vunpack.c.l.b16 %v3294
        %v3399 = vunpack.c.h.b16 %v3294
        %v3400 = vunpack.c.l.b16 %v3295
        %v3401 = vunpack.c.h.b16 %v3295
        %v3402 = vunpack.c.l.b16 %v3296
        %v3403 = vunpack.c.h.b16 %v3296
        %v3404 = vunpack.c.l.b16 %v3297
        %v3405 = vunpack.c.h.b16 %v3297
        %v3406 = vunpack.c.l.b16 %v3298
        %v3407 = vunpack.c.h.b16 %v3298
        %v3408 = vunpack.c.l.b16 %v3299
        %v3409 = vunpack.c.h.b16 %v3299
        %v3410 = vunpack.c.l.b16 %v3300
        %v3411 = vunpack.c.h.b16 %v3300
        %v3412 = vunpack.c.l.b16 %v3301
        %v3413 = vunpack.c.h.b16 %v3301
        %v3414 = vunpack.c.l.b16 %v3302
        %v3415 = vunpack.c.h.b16 %v3302
        %v3416 = vunpack.c.l.b16 %v3303
        %v3417 = vunpack.c.h.b16 %v3303
        %v3418 = vunpack.c.l.b16 %v3304
        %v3419 = vunpack.c.h.b16 %v3304
        %v3420 = vunpack.c.l.b16 %v3305
        %v3421 = vunpack.c.h.b16 %v3305
        %v3422 = vunpack.c.l.b16 %v3306
        %v3423 = vunpack.c.h.b16 %v3306
        %v3424 = vunpack.c.l.b16 %v3307
        %v3425 = vunpack.c.h.b16 %v3307
        %v3426 = vunpack.c.l.b16 %v3308
        %v3427 = vunpack.c.h.b16 %v3308
        %v3428 = vunpack.c.l.b16 %v3309
        %v3429 = vunpack.c.h.b16 %v3309
        %v3430 = vunpack.c.l.b16 %v3310
        %v3431 = vunpack.c.h.b16 %v3310
        %v3432 = vunpack.c.l.b16 %v3311
        %v3433 = vunpack.c.h.b16 %v3311
        %v3434 = vunpack.c.l.b16 %v3312
        %v3435 = vunpack.c.h.b16 %v3312
        %v3436 = vunpack.c.l.b16 %v3313
        %v3437 = vunpack.c.h.b16 %v3313
        %v3438 = vunpack.c.l.b16 %v3314
        %v3439 = vunpack.c.h.b16 %v3314
        %v3440 = vunpack.c.l.b16 %v3315
        %v3441 = vunpack.c.h.b16 %v3315
        %v3442 = vunpack.c.l.b16 %v3316
        %v3443 = vunpack.c.h.b16 %v3316
        %v3444 = vunpack.c.l.b16 %v3317
        %v3445 = vunpack.c.h.b16 %v3317
        %v3446 = vunpack.c.l.b16 %v3318
        %v3447 = vunpack.c.h.b16 %v3318
        %v3448 = vunpack.c.l.b16 %v3319
        %v3449 = vunpack.c.h.b16 %v3319
        %v3450 = vunpack.c.l.b16 %v3320
        %v3451 = vunpack.c.h.b16 %v3320
        %v3452 = vunpack.c.l.b16 %v3321
        %v3453 = vunpack.c.h.b16 %v3321
        %v3454 = vunpack.c.l.b16 %v3322
        %v3455 = vunpack.c.h.b16 %v3322
        %v3456 = vunpack.c.l.b16 %v3323
        %v3457 = vunpack.c.h.b16 %v3323
        %v3458 = vunpack.c.l.b16 %v3324
        %v3459 = vunpack.c.h.b16 %v3324
        %v3460 = vunpack.c.l.b16 %v3325
        %v3461 = vunpack.c.h.b16 %v3325
        %v3462 = vunpack.c.l.b16 %v3326
        %v3463 = vunpack.c.h.b16 %v3326
        %v3464 = vunpack.c.l.b16 %v3327
        %v3465 = vunpack.c.h.b16 %v3327
        %v3466 = vunpack.c.l.b16 %v3328
        %v3467 = vunpack.c.h.b16 %v3328
        %v3468 = vunpack.c.l.b16 %v3329
        %v3469 = vunpack.c.h.b16 %v3329
        %v3470 = vunpack.c.l.b16 %v3330
        %v3471 = vunpack.c.h.b16 %v3330
        %v3472 = vunpack.c.l.b16 %v3331
        %v3473 = vunpack.c.h.b16 %v3331
        %v3474 = vunpack.c.l.b16 %v3332
        %v3475 = vunpack.c.h.b16 %v3332
        %v3476 = vunpack.c.l.b16 %v3333
        %v3477 = vunpack.c.h.b16 %v3333
        %v3478 = vunpack.c.l.b16 %v3334
        %v3479 = vunpack.c.h.b16 %v3334
        %v3480 = vpack.c.b16 %v3386, %v3384
        %v3481 = vpack.c.b16 %v3387, %v3385
        %v3482 = vpack.c.b16 %v3390, %v3388
        %v3483 = vpack.c.b16 %v3391, %v3389
        %v3484 = vpack.c.b16 %v3394, %v3392
        %v3485 = vpack.c.b16 %v3395, %v3393
        %v3486 = vpack.c.b16 %v3398, %v3396
        %v3487 = vpack.c.b16 %v3399, %v3397
        %v3488 = vpack.c.b16 %v3402, %v3400
        %v3489 = vpack.c.b16 %v3403, %v3401
        %v3490 = vpack.c.b16 %v3406, %v3404
        %v3491 = vpack.c.b16 %v3407, %v3405
        %v3492 = vpack.c.b16 %v3410, %v3408
        %v3493 = vpack.c.b16 %v3411, %v3409
        %v3494 = vpack.c.b16 %v3414, %v3412
        %v3495 = vpack.c.b16 %v3415, %v3413
        %v3496 = vpack.c.b16 %v3418, %v3416
        %v3497 = vpack.c.b16 %v3419, %v3417
        %v3498 = vpack.c.b16 %v3422, %v3420
        %v3499 = vpack.c.b16 %v3423, %v3421
        %v3500 = vpack.c.b16 %v3426, %v3424
        %v3501 = vpack.c.b16 %v3427, %v3425
        %v3502 = vpack.c.b16 %v3430, %v3428
        %v3503 = vpack.c.b16 %v3431, %v3429
        %v3504 = vpack.c.b16 %v3434, %v3432
        %v3505 = vpack.c.b16 %v3435, %v3433
        %v3506 = vpack.c.b16 %v3438, %v3436
        %v3507 = vpack.c.b16 %v3439, %v3437
        %v3508 = vpack.c.b16 %v3442, %v3440
        %v3509 = vpack.c.b16 %v3443, %v3441
        %v3510 = vpack.c.b16 %v3446, %v3444
        %v3511 = vpack.c.b16 %v3447, %v3445
        %v3512 = vpack.c.b16 %v3450, %v3448
        %v3513 = vpack.c.b16 %v3451, %v3449
        %v3514 = vpack.c.b16 %v3454, %v3452
        %v3515 = vpack.c.b16 %v3455, %v3453
        %v3516 = vpack.c.b16 %v3458, %v3456
        %v3517 = vpack.c.b16 %v3459, %v3457
        %v3518 = vpack.c.b16 %v3462, %v3460
        %v3519 = vpack.c.b16 %v3463, %v3461
        %v3520 = vpack.c.b16 %v3466, %v3464
        %v3521 = vpack.c.b16 %v3467, %v3465
        %v3522 = vpack.c.b16 %v3470, %v3468
        %v3523 = vpack.c.b16 %v3471, %v3469
        %v3524 = vpack.c.b16 %v3474, %v3472
        %v3525 = vpack.c.b16 %v3475, %v3473
        %v3526 = vpack.c.b16 %v3478, %v3476
        %v3527 = vpack.c.b16 %v3479, %v3477
        %v3577 = vperm.slane %v3335, 0
        %v3578 = vperm.slane %v3335, 1
        %3581 = vmatpush.bf16.msra.mxu0 %v3494
        %3582 = vmatpush.bf16.msra.mxu0 %v3492
        %3583 = vmatpush.bf16.msra.mxu0 %v3490
        %3584 = vmatpush.bf16.msra.mxu0 %v3488
        %3585 = vmatpush.bf16.msra.mxu0 %v3486
        %3586 = vmatpush.bf16.msra.mxu0 %v3484
        %3587 = vmatpush.bf16.msra.mxu0 %v3482
        %3588 = vmatpush.bf16.msra.mxu0 %v3480
        %3589 = vmatmul.bf16.gmra.mxu0 %v3284
        %v3590 = vpop.f32.mrf.mxu0
        %v3591 = vadd.f32 %v3577, %v3590
        %v3592 = vpop.f32.mrf.mxu0
        %3593 = vdwg.mxu0
        %3594 = vmatpush.bf16.msra.mxu0 %v3510
        %3595 = vmatpush.bf16.msra.mxu0 %v3508
        %3596 = vmatpush.bf16.msra.mxu0 %v3506
        %3597 = vmatpush.bf16.msra.mxu0 %v3504
        %3598 = vmatpush.bf16.msra.mxu0 %v3502
        %3599 = vmatpush.bf16.msra.mxu0 %v3500
        %3600 = vmatpush.bf16.msra.mxu0 %v3498
        %3601 = vmatpush.bf16.msra.mxu0 %v3496
        %3602 = vmatmul.bf16.gmra.mxu0 %v3285
        %v3603 = vpop.f32.mrf.mxu0
        %v3604 = vadd.f32 %v3591, %v3603
        %v3605 = vpop.f32.mrf.mxu0
        %3606 = vdwg.mxu0
        %3607 = vmatpush.bf16.msra.mxu0 %v3526
        %3608 = vmatpush.bf16.msra.mxu0 %v3524
        %3609 = vmatpush.bf16.msra.mxu0 %v3522
        %3610 = vmatpush.bf16.msra.mxu0 %v3520
        %3611 = vmatpush.bf16.msra.mxu0 %v3518
        %3612 = vmatpush.bf16.msra.mxu0 %v3516
        %3613 = vmatpush.bf16.msra.mxu0 %v3514
        %3614 = vmatpush.bf16.msra.mxu0 %v3512
        %3615 = vmatmul.bf16.gmra.mxu0 %v3286
        %v3616 = vpop.f32.mrf.mxu0
        %v3617 = vadd.f32 %v3604, %v3616
        %v3618 = vpop.f32.mrf.mxu0
        %3619 = vdwg.mxu0
        %3620 = vmatpush.bf16.msra.mxu0 %v3495
        %3621 = vmatpush.bf16.msra.mxu0 %v3493
        %3622 = vmatpush.bf16.msra.mxu0 %v3491
        %3623 = vmatpush.bf16.msra.mxu0 %v3489
        %3624 = vmatpush.bf16.msra.mxu0 %v3487
        %3625 = vmatpush.bf16.msra.mxu0 %v3485
        %3626 = vmatpush.bf16.msra.mxu0 %v3483
        %3627 = vmatpush.bf16.msra.mxu0 %v3481
        %3628 = vmatmul.bf16.gmra.mxu0 %v3284
        %v3629 = vpop.f32.mrf.mxu0
        %v3630 = vadd.f32 %v3578, %v3629
        %v3631 = vpop.f32.mrf.mxu0
        %3632 = vdwg.mxu0
        %3633 = vmatpush.bf16.msra.mxu0 %v3511
        %3634 = vmatpush.bf16.msra.mxu0 %v3509
        %3635 = vmatpush.bf16.msra.mxu0 %v3507
        %3636 = vmatpush.bf16.msra.mxu0 %v3505
        %3637 = vmatpush.bf16.msra.mxu0 %v3503
        %3638 = vmatpush.bf16.msra.mxu0 %v3501
        %3639 = vmatpush.bf16.msra.mxu0 %v3499
        %3640 = vmatpush.bf16.msra.mxu0 %v3497
        %3641 = vmatmul.bf16.gmra.mxu0 %v3285
        %v3642 = vpop.f32.mrf.mxu0
        %v3643 = vadd.f32 %v3630, %v3642
        %v3644 = vpop.f32.mrf.mxu0
        %3645 = vdwg.mxu0
        %3646 = vmatpush.bf16.msra.mxu0 %v3527
        %3647 = vmatpush.bf16.msra.mxu0 %v3525
        %3648 = vmatpush.bf16.msra.mxu0 %v3523
        %3649 = vmatpush.bf16.msra.mxu0 %v3521
        %3650 = vmatpush.bf16.msra.mxu0 %v3519
        %3651 = vmatpush.bf16.msra.mxu0 %v3517
        %3652 = vmatpush.bf16.msra.mxu0 %v3515
        %3653 = vmatpush.bf16.msra.mxu0 %v3513
        %3654 = vmatmul.bf16.gmra.mxu0 %v3286
        %v3655 = vpop.f32.mrf.mxu0
        %v3656 = vadd.f32 %v3643, %v3655
        %v3657 = vpop.f32.mrf.mxu0
        %3658 = vdwg.mxu0
        %v3659 = vxor.u32 %v3617, 2147483648
        %v3660 = vxor.u32 %v3656, 2147483648
        %v3661 = vmul.f32 %v3659, 1.442695
        %v3662 = vpow.pop %v3661
        %v3663 = vmul.f32 %v3660, 1.442695
        %v3664 = vpow.pop %v3663
        %v3665 = vadd.f32 %v3662, 1.0
        %v3666 = vadd.f32 %v3664, 1.0
        %v3667 = vrcp.pop %v3665
        %v3668 = vmul.f32 %v3665, %v3667
        %v3669 = vsub.f32 1.0, %v3668
        %v3670 = vmul.f32 %v3667, %v3669
        %v3671 = vadd.f32 %v3667, %v3670
        %vm3672 = vweird.f32 %v3665
        %vm3673 = vweird.f32 %v3667
        %vm3674 = vmor %vm3672, %vm3673
        %v3675 = vsel %vm3674, %v3667, %v3671
        %v3676 = vand.u32 2147483647, %v3665
        %vm3677 = vcmp.eq.f32.partialorder %v3676, 8.507059e+37
        %v3678 = vand.u32 %v3665, 2147483648
        %v3679 = vor.u32 1.1754944e-38, %v3678
        %v3680 = vsel %vm3677, %v3679, %v3675
        %v3681 = vmul.f32 1.0, %v3680
        %v3682 = vrcp.pop %v3666
        %v3683 = vmul.f32 %v3666, %v3682
        %v3684 = vsub.f32 1.0, %v3683
        %v3685 = vmul.f32 %v3682, %v3684
        %v3686 = vadd.f32 %v3682, %v3685
        %vm3687 = vweird.f32 %v3666
        %vm3688 = vweird.f32 %v3682
        %vm3689 = vmor %vm3687, %vm3688
        %v3690 = vsel %vm3689, %v3682, %v3686
        %v3691 = vand.u32 2147483647, %v3666
        %vm3692 = vcmp.eq.f32.partialorder %v3691, 8.507059e+37
        %v3693 = vand.u32 %v3666, 2147483648
        %v3694 = vor.u32 1.1754944e-38, %v3693
        %v3695 = vsel %vm3692, %v3694, %v3690
        %v3696 = vmul.f32 1.0, %v3695
        %v3699 = vrot.slane %v3696, 7
        %vm3700 = vcmask 1040384
        %v3701 = vsel %vm3700, %v3681, %v3699
        %v3703 = vlaneseq
        %vm3704 = vcmp.ge.s32.totalorder %v3703, 0
        %vm3705 = vcmp.lt.s32.totalorder %v3703, 256
        %vm3706 = vmand %vm3704, %vm3705
        %3707 = vst.msk [vmem:[%s358] sm:$0x3] %vm3706, %v3701
      $region64: #{forward.1} parent=55 // pred_fallthru
        _
      %p3708 = scmp.lt.s32.totalorder %s24, 1
      %s3709 = scalar_select %p3708, %s24, 1
      %s3710 = smul.addr %s3709, 2
      %s3711 = scalar_lea.vmem %s9, %s3710
      // Predicated region
      $region65: #{forward.1} parent=55 // pred_check
        %p3712 = pneg %p246
      $region66: #{forward.1} parent=55 // pred_check_branch
        %3714 = sbr.rel (%p3712) target = $region68
      $region67: #{forward.1} parent=55 // pred_region
        _
      $region68: #{forward.1} parent=55 // pred_fallthru
        _
    $region56: #{forward.1} parent=5 // pred_fallthru
      _
    %p3715 = scmp.le.s32.totalorder 2, %s15
    // Predicated region
    $region69: #{forward.1} parent=5 // pred_check
      %p3716 = pneg %p3715
    $region70: #{forward.1} parent=5 // pred_check_branch
      %3718 = sbr.rel (%p3716) target = $region72
    $region71: #{forward.1} parent=5 // pred_region
      %s3719 = ssub.s32 %s15, 2
      // Predicated region
      $region73: #{forward.1} parent=71 // pred_check
        %p3720 = pneg %p252
      $region74: #{forward.1} parent=71 // pred_check_branch
        %3722 = sbr.rel (%p3720) target = $region76
      $region75: #{forward.1} parent=71 // pred_region
        %p3723 = scmp.lt.s32.totalorder %s26, 1
        %s3724 = scalar_select %p3723, %s26, 1
        %s3725 = smul.addr %s3724, 2
        %s3726 = scalar_lea.vmem %s9, %s3725
      $region76: #{forward.1} parent=71 // pred_fallthru
        _
    $region72: #{forward.1} parent=5 // pred_fallthru
      _
  $region6: #{forward.1} parent=0 // loop_footer
    %s19 = sadd.s32 1, %s15
  $region7: #{forward.1} parent=0 // loop_footer_branch
    %14 = sbr.rel target = $region3
  $region8: #{forward.1} parent=0 // loop_exit
    _

</llo_original>
